<compile_context>
chip_gen: v7x
topology: tpu7x:2x2x1
jax: 0.10.0
libtpu: 0.0.40
codegen_flags: <defaults>
</compile_context>

<pallas_src>
import functools
import math

import jax
import jax.numpy as jnp
from jax.experimental import pallas as pl
from jax.experimental.pallas import tpu as pltpu


def _layernorm_f32(x, gamma, beta, eps=1e-5):
    # x: (S, D) float32, gamma/beta: (1, D) float32
    mu = jnp.mean(x, axis=-1, keepdims=True)
    var = jnp.mean((x - mu) ** 2, axis=-1, keepdims=True)
    return (x - mu) * jax.lax.rsqrt(var + eps) * gamma + beta


def _block_kernel(
    x_ref,                      # (1, S_pad, D)
    ln1_g_ref, ln1_b_ref,       # (1, D)   f32
    in_w_ref, in_b_ref,         # (D, 3D)  (scale folded into Q cols), (1, 3D) f32
    out_w_ref, out_b_ref,       # (D, D),  (1, D) f32
    ln2_g_ref, ln2_b_ref,       # (1, D)   f32
    fc_w_ref, fc_b_ref,         # (D, 4D), (1, 4D) f32
    proj_w_ref, proj_b_ref,     # (4D, D), (1, D) f32
    o_ref,                      # (1, S_pad, D)
    *, n_head: int, s_valid: int, ff_chunk: int,
):
    f32 = jnp.float32
    x = x_ref[0].astype(f32)                       # (S, D)
    S, D = x.shape
    Dh = D // n_head
    wdt = in_w_ref.dtype                           # weight compute dtype (f32 or bf16)

    # ---------------- ln_1 (always f32, like the fp16-safe LayerNorm) --------
    ln1 = _layernorm_f32(x, ln1_g_ref[...], ln1_b_ref[...])
    a1 = ln1.astype(wdt)

    # q/k/v as three separate matmuls against D-aligned weight slabs.
    # (1/sqrt(Dh) is already folded into the Q slab in the wrapper.)
    q = jnp.dot(a1, in_w_ref[:, 0 * D:1 * D], preferred_element_type=f32) + in_b_ref[:, 0 * D:1 * D]
    k = jnp.dot(a1, in_w_ref[:, 1 * D:2 * D], preferred_element_type=f32) + in_b_ref[:, 1 * D:2 * D]
    v = jnp.dot(a1, in_w_ref[:, 2 * D:3 * D], preferred_element_type=f32) + in_b_ref[:, 2 * D:3 * D]

    # Key-padding mask (only materialized if the wrapper padded the sequence).
    if s_valid < S:
        key_idx = jax.lax.broadcasted_iota(jnp.int32, (S, S), 1)
        neg_mask = jnp.where(key_idx < s_valid, 0.0, -1e30).astype(f32)
    else:
        neg_mask = None

    # ---------------- multi-head self-attention -------------------------------
    # Accumulate each head's out_proj contribution directly (no concat, no
    # per-head list kept live).
    attn = jnp.zeros((S, D), f32)
    for h in range(n_head):
        sl = slice(h * Dh, (h + 1) * Dh)
        qh = q[:, sl]
        kh = k[:, sl]
        vh = v[:, sl]
        s = jnp.dot(qh, kh.T, preferred_element_type=f32)          # (S, S)
        if neg_mask is not None:
            s = s + neg_mask
        s = s - jnp.max(s, axis=-1, keepdims=True)
        p = jnp.exp(s)
        p = p * pl.reciprocal(jnp.sum(p, axis=-1, keepdims=True), approx=True)
        oh = jnp.dot(p, vh, preferred_element_type=f32)             # (S, Dh)
        attn = attn + jnp.dot(oh.astype(wdt), out_w_ref[sl, :],
                              preferred_element_type=f32)
    attn = attn + out_b_ref[...]

    x1 = x + attn                                                    # residual 1

    # ---------------- MLP: c_fc -> QuickGELU -> c_proj, tiled over d_ff ------
    ln2 = _layernorm_f32(x1, ln2_g_ref[...], ln2_b_ref[...])
    a2 = ln2.astype(wdt)
    d_ff = fc_w_ref.shape[1]
    mlp = jnp.zeros((S, D), f32)
    for c0 in range(0, d_ff, ff_chunk):
        csl = slice(c0, c0 + ff_chunk)
        h1 = jnp.dot(a2, fc_w_ref[:, csl], preferred_element_type=f32) + fc_b_ref[:, csl]
        h1 = h1 * jax.nn.sigmoid(1.702 * h1)                         # QuickGELU
        mlp = mlp + jnp.dot(h1.astype(wdt), proj_w_ref[csl, :],
                            preferred_element_type=f32)
    mlp = mlp + proj_b_ref[...]

    o_ref[0] = (x1 + mlp).astype(o_ref.dtype)                        # residual 2


def _pick_ff_chunk(d_ff):
    for c in (512, 1024):
        if d_ff > c and d_ff % c == 0:
            return c
    return d_ff


def residual_attention_block(x_lnd, params, n_head, weights_dtype=None):
    """x_lnd: (seq, batch, d_model) like the PyTorch module. Returns same shape.

    weights_dtype: optional (e.g. jnp.bfloat16) compute dtype for the four big
    weight matrices; matmuls still accumulate in f32.
    """
    S, B, D = x_lnd.shape
    assert D % n_head == 0
    Dh = D // n_head
    d_ff = params["c_fc_weight"].shape[0]
    ff_chunk = _pick_ff_chunk(d_ff)

    # Pad sequence to a sublane multiple; padded key columns are masked in-kernel.
    S_pad = ((S + 7) // 8) * 8
    x_bnd = jnp.transpose(x_lnd, (1, 0, 2))                 # (B, S, D)
    if S_pad != S:
        x_bnd = jnp.pad(x_bnd, ((0, 0), (0, S_pad - S), (0, 0)))

    # Fold 1/sqrt(Dh) into the Q rows of in_proj weight+bias (constant transform).
    scale = 1.0 / math.sqrt(Dh)
    qkv_scale = jnp.concatenate(
        [jnp.full((D,), scale, jnp.float32), jnp.ones((2 * D,), jnp.float32)])
    in_w = params["in_proj_weight"] * qkv_scale[:, None]
    in_b = params["in_proj_bias"] * qkv_scale

    wcast = (lambda a: a.astype(weights_dtype)) if weights_dtype is not None else (lambda a: a)
    in_w_t = wcast(in_w.T)                                  # (D, 3D)
    out_w_t = wcast(params["out_proj_weight"].T)            # (D, D)
    fc_w_t = wcast(params["c_fc_weight"].T)                 # (D, 4D)
    proj_w_t = wcast(params["c_proj_weight"].T)             # (4D, D)

    as_row = lambda v: v.reshape(1, -1).astype(jnp.float32)

    # Advisory cost estimate (per call).
    flops = B * (6 * S_pad * D * D + 4 * S_pad * S_pad * D + 2 * S_pad * D * D
                 + 4 * S_pad * D * d_ff)
    trans = B * (n_head * S_pad * S_pad + S_pad * d_ff)
    w_bytes = sum(int(a.size) * a.dtype.itemsize
                  for a in (in_w_t, out_w_t, fc_w_t, proj_w_t))
    act_bytes = 2 * B * S_pad * D * x_lnd.dtype.itemsize
    cost = pl.CostEstimate(flops=int(flops), transcendentals=int(trans),
                           bytes_accessed=int(w_bytes + act_bytes))

    kernel = functools.partial(_block_kernel, n_head=n_head, s_valid=S,
                               ff_chunk=ff_chunk)

    def run(single_buffer_weights):
        # Weights/biases never change across the grid -> single-buffer them to
        # halve their VMEM footprint (matters for real CLIP sizes on v7x).
        if single_buffer_weights:
            wspec = lambda shape: pl.BlockSpec(shape, lambda b: (0, 0),
                                               pipeline_mode=pl.Buffered(1))
        else:
            wspec = lambda shape: pl.BlockSpec(shape, lambda b: (0, 0))

        return pl.pallas_call(
            kernel,
            out_shape=jax.ShapeDtypeStruct((B, S_pad, D), x_lnd.dtype),
            grid=(B,),
            in_specs=[
                pl.BlockSpec((1, S_pad, D), lambda b: (b, 0, 0)),   # x
                wspec((1, D)), wspec((1, D)),                        # ln1 gamma, beta
                wspec((D, 3 * D)), wspec((1, 3 * D)),                # in_proj W^T, b
                wspec((D, D)), wspec((1, D)),                        # out_proj W^T, b
                wspec((1, D)), wspec((1, D)),                        # ln2 gamma, beta
                wspec((D, d_ff)), wspec((1, d_ff)),                  # c_fc W^T, b
                wspec((d_ff, D)), wspec((1, D)),                     # c_proj W^T, b
            ],
            out_specs=pl.BlockSpec((1, S_pad, D), lambda b: (b, 0, 0)),
            compiler_params=pltpu.CompilerParams(
                dimension_semantics=("parallel",),
                vmem_limit_bytes=64 * 1024 * 1024),
            cost_estimate=cost,
        )(
            x_bnd,
            as_row(params["ln1_gamma"]), as_row(params["ln1_beta"]),
            in_w_t, as_row(in_b),
            out_w_t, as_row(params["out_proj_bias"]),
            as_row(params["ln2_gamma"]), as_row(params["ln2_beta"]),
            fc_w_t, as_row(params["c_fc_bias"]),
            proj_w_t, as_row(params["c_proj_bias"]),
        )

    try:
        out = jax.block_until_ready(run(True))
    except Exception:
        # pipeline_mode=pl.Buffered(1) not supported on this jax build ->
        # fall back to default (double-buffered) weight specs.
        out = run(False)

    if S_pad != S:
        out = out[:, :S, :]
    return jnp.transpose(out, (1, 0, 2))                    # back to (S, B, D)


# ---------------- pure-JAX reference (for correctness check) ----------------
def _reference(x_lnd, params, n_head):
    S, B, D = x_lnd.shape
    Dh = D // n_head

    def ln(v, g, b):
        mu = jnp.mean(v, axis=-1, keepdims=True)
        var = jnp.mean((v - mu) ** 2, axis=-1, keepdims=True)
        return (v - mu) / jnp.sqrt(var + 1e-5) * g + b

    x = x_lnd.astype(jnp.float32)
    h = ln(x, params["ln1_gamma"], params["ln1_beta"])
    qkv = jnp.einsum("sbd,ed->sbe", h, params["in_proj_weight"]) + params["in_proj_bias"]
    q, k, v = jnp.split(qkv, 3, axis=-1)
    q = q.reshape(S, B, n_head, Dh) * (Dh ** -0.5)
    k = k.reshape(S, B, n_head, Dh)
    v = v.reshape(S, B, n_head, Dh)
    s = jnp.einsum("qbhd,kbhd->bhqk", q, k)
    p = jax.nn.softmax(s, axis=-1)
    a = jnp.einsum("bhqk,kbhd->qbhd", p, v).reshape(S, B, D)
    a = jnp.einsum("sbd,ed->sbe", a, params["out_proj_weight"]) + params["out_proj_bias"]
    x = x + a
    h = ln(x, params["ln2_gamma"], params["ln2_beta"])
    h = jnp.einsum("sbd,fd->sbf", h, params["c_fc_weight"]) + params["c_fc_bias"]
    h = h * jax.nn.sigmoid(1.702 * h)
    h = jnp.einsum("sbf,df->sbd", h, params["c_proj_weight"]) + params["c_proj_bias"]
    return (x + h).astype(x_lnd.dtype)


if __name__ == "__main__":
    # seq=10 deliberately exercises the pad-to-multiple-of-8 + key-mask path.
    seq, batch, d_model, n_head = 10, 2, 32, 4
    d_ff = 4 * d_model

    key = jax.random.PRNGKey(0)
    keys = jax.random.split(key, 8)
    std = 0.02

    params = {
        "ln1_gamma": jnp.ones((d_model,), jnp.float32),
        "ln1_beta": jnp.zeros((d_model,), jnp.float32),
        "ln2_gamma": jnp.ones((d_model,), jnp.float32),
        "ln2_beta": jnp.zeros((d_model,), jnp.float32),
        "in_proj_weight": std * jax.random.normal(keys[0], (3 * d_model, d_model), jnp.float32),
        "in_proj_bias": std * jax.random.normal(keys[1], (3 * d_model,), jnp.float32),
        "out_proj_weight": std * jax.random.normal(keys[2], (d_model, d_model), jnp.float32),
        "out_proj_bias": std * jax.random.normal(keys[3], (d_model,), jnp.float32),
        "c_fc_weight": std * jax.random.normal(keys[4], (d_ff, d_model), jnp.float32),
        "c_fc_bias": std * jax.random.normal(keys[5], (d_ff,), jnp.float32),
        "c_proj_weight": std * jax.random.normal(keys[6], (d_model, d_ff), jnp.float32),
        "c_proj_bias": std * jax.random.normal(keys[7], (d_model,), jnp.float32),
    }

    x = jax.random.normal(jax.random.PRNGKey(1), (seq, batch, d_model), jnp.float32)

    ref = _reference(x, params, n_head)

    # f32 weights (default path).
    out = residual_attention_block(x, params, n_head)
    out = jax.block_until_ready(out)
    assert out.shape == (seq, batch, d_model)
    err = float(jnp.max(jnp.abs(out - ref)))
    assert jnp.allclose(out, ref, rtol=1e-3, atol=1e-3), err

    # bf16 weights (v7x-friendly); f32 accumulation, looser tolerance.
    out_bf16 = residual_attention_block(x, params, n_head, weights_dtype=jnp.bfloat16)
    out_bf16 = jax.block_until_ready(out_bf16)
    err_bf16 = float(jnp.max(jnp.abs(out_bf16.astype(jnp.float32) - ref)))
    assert jnp.allclose(out_bf16.astype(jnp.float32), ref, rtol=3e-2, atol=3e-2), err_bf16

    print("KERNEL_OK")
</pallas_src>

<mosaic_0001>
module attributes {stable_mosaic.version = 11 : i64} {
  func.func @_block_kernel(%arg0: i32, %arg1: memref<1x16x32xf32, #tpu.memory_space<vmem>>, %arg2: memref<1x32xf32, #tpu.memory_space<vmem>>, %arg3: memref<1x32xf32, #tpu.memory_space<vmem>>, %arg4: memref<32x96xf32, #tpu.memory_space<vmem>>, %arg5: memref<1x96xf32, #tpu.memory_space<vmem>>, %arg6: memref<32x32xf32, #tpu.memory_space<vmem>>, %arg7: memref<1x32xf32, #tpu.memory_space<vmem>>, %arg8: memref<1x32xf32, #tpu.memory_space<vmem>>, %arg9: memref<1x32xf32, #tpu.memory_space<vmem>>, %arg10: memref<32x128xf32, #tpu.memory_space<vmem>>, %arg11: memref<1x128xf32, #tpu.memory_space<vmem>>, %arg12: memref<128x32xf32, #tpu.memory_space<vmem>>, %arg13: memref<1x32xf32, #tpu.memory_space<vmem>>, %arg14: memref<1x16x32xf32, #tpu.memory_space<vmem>>) attributes {dimension_semantics = [#tpu.dimension_semantics<parallel>], iteration_bounds = array<i64: 2>, scalar_prefetch = 0 : i64, scratch_operands = 0 : i64, tpu.core_type = #tpu.core_type<tc>, window_params = [{transform_indices = @transform_0, window_bounds = array<i64: 1, 16, 32>}, {pipeline_mode = #tpu.pipeline_mode<synchronous>, transform_indices = @transform_1, window_bounds = array<i64: 1, 32>}, {pipeline_mode = #tpu.pipeline_mode<synchronous>, transform_indices = @transform_2, window_bounds = array<i64: 1, 32>}, {pipeline_mode = #tpu.pipeline_mode<synchronous>, transform_indices = @transform_3, window_bounds = array<i64: 32, 96>}, {pipeline_mode = #tpu.pipeline_mode<synchronous>, transform_indices = @transform_4, window_bounds = array<i64: 1, 96>}, {pipeline_mode = #tpu.pipeline_mode<synchronous>, transform_indices = @transform_5, window_bounds = array<i64: 32, 32>}, {pipeline_mode = #tpu.pipeline_mode<synchronous>, transform_indices = @transform_6, window_bounds = array<i64: 1, 32>}, {pipeline_mode = #tpu.pipeline_mode<synchronous>, transform_indices = @transform_7, window_bounds = array<i64: 1, 32>}, {pipeline_mode = #tpu.pipeline_mode<synchronous>, transform_indices = @transform_8, window_bounds = array<i64: 1, 32>}, {pipeline_mode = #tpu.pipeline_mode<synchronous>, transform_indices = @transform_9, window_bounds = array<i64: 32, 128>}, {pipeline_mode = #tpu.pipeline_mode<synchronous>, transform_indices = @transform_10, window_bounds = array<i64: 1, 128>}, {pipeline_mode = #tpu.pipeline_mode<synchronous>, transform_indices = @transform_11, window_bounds = array<i64: 128, 32>}, {pipeline_mode = #tpu.pipeline_mode<synchronous>, transform_indices = @transform_12, window_bounds = array<i64: 1, 32>}, {transform_indices = @transform_13, window_bounds = array<i64: 1, 16, 32>}]} {
    %c0 = arith.constant 0 : index
    %c0_0 = arith.constant 0 : index
    %c0_1 = arith.constant 0 : index
    %0 = vector.load %arg1[%c0, %c0_0, %c0_1] : memref<1x16x32xf32, #tpu.memory_space<vmem>>, vector<1x16x32xf32>
    %1 = vector.shape_cast %0 : vector<1x16x32xf32> to vector<16x32xf32>
    %c0_2 = arith.constant 0 : index
    %c0_3 = arith.constant 0 : index
    %2 = vector.load %arg2[%c0_2, %c0_3] : memref<1x32xf32, #tpu.memory_space<vmem>>, vector<1x32xf32>
    %c0_4 = arith.constant 0 : index
    %c0_5 = arith.constant 0 : index
    %3 = vector.load %arg3[%c0_4, %c0_5] : memref<1x32xf32, #tpu.memory_space<vmem>>, vector<1x32xf32>
    %cst = arith.constant dense<0.000000e+00> : vector<16xf32>
    %4 = vector.multi_reduction <add>, %1, %cst [1] : vector<16x32xf32> to vector<16xf32>
    %5 = vector.shape_cast %4 : vector<16xf32> to vector<16x1xf32>
    %cst_6 = arith.constant 3.200000e+01 : f32
    %6 = vector.broadcast %cst_6 : f32 to vector<16x1xf32>
    %7 = arith.divf %5, %6 : vector<16x1xf32>
    %8 = vector.broadcast %7 : vector<16x1xf32> to vector<16x32xf32>
    %9 = arith.subf %1, %8 : vector<16x32xf32>
    %10 = arith.mulf %9, %9 : vector<16x32xf32>
    %cst_7 = arith.constant dense<0.000000e+00> : vector<16xf32>
    %11 = vector.multi_reduction <add>, %10, %cst_7 [1] : vector<16x32xf32> to vector<16xf32>
    %12 = vector.shape_cast %11 : vector<16xf32> to vector<16x1xf32>
    %cst_8 = arith.constant 3.200000e+01 : f32
    %13 = vector.broadcast %cst_8 : f32 to vector<16x1xf32>
    %14 = arith.divf %12, %13 : vector<16x1xf32>
    %15 = vector.broadcast %7 : vector<16x1xf32> to vector<16x32xf32>
    %16 = arith.subf %1, %15 : vector<16x32xf32>
    %cst_9 = arith.constant 9.99999974E-6 : f32
    %17 = vector.broadcast %cst_9 : f32 to vector<16x1xf32>
    %18 = arith.addf %14, %17 : vector<16x1xf32>
    %19 = math.rsqrt %18 : vector<16x1xf32>
    %20 = vector.broadcast %19 : vector<16x1xf32> to vector<16x32xf32>
    %21 = arith.mulf %16, %20 : vector<16x32xf32>
    %22 = vector.broadcast %2 : vector<1x32xf32> to vector<16x32xf32>
    %23 = arith.mulf %21, %22 : vector<16x32xf32>
    %24 = vector.broadcast %3 : vector<1x32xf32> to vector<16x32xf32>
    %25 = arith.addf %23, %24 : vector<16x32xf32>
    %c0_10 = arith.constant 0 : index
    %c0_11 = arith.constant 0 : index
    %26 = vector.load %arg4[%c0_10, %c0_11] : memref<32x96xf32, #tpu.memory_space<vmem>>, vector<32x32xf32>
    %cst_12 = arith.constant dense<0.000000e+00> : vector<16x32xf32>
    %27 = tpu.matmul %25, %26, %cst_12 {dimension_numbers = #tpu.dot_dimension_numbers<[1], [0], [0], [1], [0, 0, 1, 1], [], []>} : vector<16x32xf32>, vector<32x32xf32>, vector<16x32xf32> -> vector<16x32xf32>
    %c0_13 = arith.constant 0 : index
    %c0_14 = arith.constant 0 : index
    %28 = vector.load %arg5[%c0_13, %c0_14] : memref<1x96xf32, #tpu.memory_space<vmem>>, vector<1x32xf32>
    %29 = vector.broadcast %28 : vector<1x32xf32> to vector<16x32xf32>
    %30 = arith.addf %27, %29 : vector<16x32xf32>
    %c0_15 = arith.constant 0 : index
    %c32 = arith.constant 32 : index
    %31 = vector.load %arg4[%c0_15, %c32] : memref<32x96xf32, #tpu.memory_space<vmem>>, vector<32x32xf32>
    %cst_16 = arith.constant dense<0.000000e+00> : vector<16x32xf32>
    %32 = tpu.matmul %25, %31, %cst_16 {dimension_numbers = #tpu.dot_dimension_numbers<[1], [0], [0], [1], [0, 0, 1, 1], [], []>} : vector<16x32xf32>, vector<32x32xf32>, vector<16x32xf32> -> vector<16x32xf32>
    %c0_17 = arith.constant 0 : index
    %c32_18 = arith.constant 32 : index
    %33 = vector.load %arg5[%c0_17, %c32_18] : memref<1x96xf32, #tpu.memory_space<vmem>>, vector<1x32xf32>
    %34 = vector.broadcast %33 : vector<1x32xf32> to vector<16x32xf32>
    %35 = arith.addf %32, %34 : vector<16x32xf32>
    %c0_19 = arith.constant 0 : index
    %c64 = arith.constant 64 : index
    %36 = vector.load %arg4[%c0_19, %c64] : memref<32x96xf32, #tpu.memory_space<vmem>>, vector<32x32xf32>
    %cst_20 = arith.constant dense<0.000000e+00> : vector<16x32xf32>
    %37 = tpu.matmul %25, %36, %cst_20 {dimension_numbers = #tpu.dot_dimension_numbers<[1], [0], [0], [1], [0, 0, 1, 1], [], []>} : vector<16x32xf32>, vector<32x32xf32>, vector<16x32xf32> -> vector<16x32xf32>
    %c0_21 = arith.constant 0 : index
    %c64_22 = arith.constant 64 : index
    %38 = vector.load %arg5[%c0_21, %c64_22] : memref<1x96xf32, #tpu.memory_space<vmem>>, vector<1x32xf32>
    %39 = vector.broadcast %38 : vector<1x32xf32> to vector<16x32xf32>
    %40 = arith.addf %37, %39 : vector<16x32xf32>
    %41 = tpu.iota {dimensions = array<i32: 1>} : vector<16x16xi32>
    %c10_i32 = arith.constant 10 : i32
    %42 = vector.broadcast %c10_i32 : i32 to vector<16x16xi32>
    %43 = arith.cmpi slt, %41, %42 : vector<16x16xi32>
    %cst_23 = arith.constant 0.000000e+00 : f32
    %cst_24 = arith.constant -1.000000e+30 : f32
    %44 = vector.broadcast %cst_23 : f32 to vector<16x16xf32>
    %45 = vector.broadcast %cst_24 : f32 to vector<16x16xf32>
    %46 = arith.select %43, %44, %45 : vector<16x16xi1>, vector<16x16xf32>
    %cst_25 = arith.constant 0.000000e+00 : f32
    %47 = vector.broadcast %cst_25 : f32 to vector<16x32xf32>
    %48 = vector.extract_strided_slice %30 {offsets = [0, 0], sizes = [16, 8], strides = [1, 1]} : vector<16x32xf32> to vector<16x8xf32>
    %49 = vector.extract_strided_slice %35 {offsets = [0, 0], sizes = [16, 8], strides = [1, 1]} : vector<16x32xf32> to vector<16x8xf32>
    %50 = vector.extract_strided_slice %40 {offsets = [0, 0], sizes = [16, 8], strides = [1, 1]} : vector<16x32xf32> to vector<16x8xf32>
    %51 = tpu.transpose %49, [1, 0] : vector<16x8xf32> -> vector<8x16xf32>
    %cst_26 = arith.constant dense<0.000000e+00> : vector<16x16xf32>
    %52 = tpu.matmul %48, %51, %cst_26 {dimension_numbers = #tpu.dot_dimension_numbers<[1], [0], [0], [1], [0, 0, 1, 1], [], []>} : vector<16x8xf32>, vector<8x16xf32>, vector<16x16xf32> -> vector<16x16xf32>
    %53 = arith.addf %52, %46 : vector<16x16xf32>
    %cst_27 = arith.constant dense<0xFF800000> : vector<16xf32>
    %54 = vector.multi_reduction <maximumf>, %53, %cst_27 [1] : vector<16x16xf32> to vector<16xf32>
    %55 = vector.shape_cast %54 : vector<16xf32> to vector<16x1xf32>
    %56 = vector.broadcast %55 : vector<16x1xf32> to vector<16x16xf32>
    %57 = arith.subf %53, %56 : vector<16x16xf32>
    %58 = math.exp %57 : vector<16x16xf32>
    %cst_28 = arith.constant dense<0.000000e+00> : vector<16xf32>
    %59 = vector.multi_reduction <add>, %58, %cst_28 [1] : vector<16x16xf32> to vector<16xf32>
    %60 = vector.shape_cast %59 : vector<16xf32> to vector<16x1xf32>
    %61 = tpu.reciprocal %60 {approx = true} : vector<16x1xf32> -> vector<16x1xf32>
    %62 = vector.broadcast %61 : vector<16x1xf32> to vector<16x16xf32>
    %63 = arith.mulf %58, %62 : vector<16x16xf32>
    %cst_29 = arith.constant dense<0.000000e+00> : vector<16x8xf32>
    %64 = tpu.matmul %63, %50, %cst_29 {dimension_numbers = #tpu.dot_dimension_numbers<[1], [0], [0], [1], [0, 0, 1, 1], [], []>} : vector<16x16xf32>, vector<16x8xf32>, vector<16x8xf32> -> vector<16x8xf32>
    %c0_30 = arith.constant 0 : index
    %c0_31 = arith.constant 0 : index
    %65 = vector.load %arg6[%c0_30, %c0_31] : memref<32x32xf32, #tpu.memory_space<vmem>>, vector<8x32xf32>
    %cst_32 = arith.constant dense<0.000000e+00> : vector<16x32xf32>
    %66 = tpu.matmul %64, %65, %cst_32 {dimension_numbers = #tpu.dot_dimension_numbers<[1], [0], [0], [1], [0, 0, 1, 1], [], []>} : vector<16x8xf32>, vector<8x32xf32>, vector<16x32xf32> -> vector<16x32xf32>
    %67 = arith.addf %47, %66 : vector<16x32xf32>
    %68 = vector.extract_strided_slice %30 {offsets = [0, 8], sizes = [16, 8], strides = [1, 1]} : vector<16x32xf32> to vector<16x8xf32>
    %69 = vector.extract_strided_slice %35 {offsets = [0, 8], sizes = [16, 8], strides = [1, 1]} : vector<16x32xf32> to vector<16x8xf32>
    %70 = vector.extract_strided_slice %40 {offsets = [0, 8], sizes = [16, 8], strides = [1, 1]} : vector<16x32xf32> to vector<16x8xf32>
    %71 = tpu.transpose %69, [1, 0] : vector<16x8xf32> -> vector<8x16xf32>
    %cst_33 = arith.constant dense<0.000000e+00> : vector<16x16xf32>
    %72 = tpu.matmul %68, %71, %cst_33 {dimension_numbers = #tpu.dot_dimension_numbers<[1], [0], [0], [1], [0, 0, 1, 1], [], []>} : vector<16x8xf32>, vector<8x16xf32>, vector<16x16xf32> -> vector<16x16xf32>
    %73 = arith.addf %72, %46 : vector<16x16xf32>
    %cst_34 = arith.constant dense<0xFF800000> : vector<16xf32>
    %74 = vector.multi_reduction <maximumf>, %73, %cst_34 [1] : vector<16x16xf32> to vector<16xf32>
    %75 = vector.shape_cast %74 : vector<16xf32> to vector<16x1xf32>
    %76 = vector.broadcast %75 : vector<16x1xf32> to vector<16x16xf32>
    %77 = arith.subf %73, %76 : vector<16x16xf32>
    %78 = math.exp %77 : vector<16x16xf32>
    %cst_35 = arith.constant dense<0.000000e+00> : vector<16xf32>
    %79 = vector.multi_reduction <add>, %78, %cst_35 [1] : vector<16x16xf32> to vector<16xf32>
    %80 = vector.shape_cast %79 : vector<16xf32> to vector<16x1xf32>
    %81 = tpu.reciprocal %80 {approx = true} : vector<16x1xf32> -> vector<16x1xf32>
    %82 = vector.broadcast %81 : vector<16x1xf32> to vector<16x16xf32>
    %83 = arith.mulf %78, %82 : vector<16x16xf32>
    %cst_36 = arith.constant dense<0.000000e+00> : vector<16x8xf32>
    %84 = tpu.matmul %83, %70, %cst_36 {dimension_numbers = #tpu.dot_dimension_numbers<[1], [0], [0], [1], [0, 0, 1, 1], [], []>} : vector<16x16xf32>, vector<16x8xf32>, vector<16x8xf32> -> vector<16x8xf32>
    %c8 = arith.constant 8 : index
    %c0_37 = arith.constant 0 : index
    %85 = vector.load %arg6[%c8, %c0_37] : memref<32x32xf32, #tpu.memory_space<vmem>>, vector<8x32xf32>
    %cst_38 = arith.constant dense<0.000000e+00> : vector<16x32xf32>
    %86 = tpu.matmul %84, %85, %cst_38 {dimension_numbers = #tpu.dot_dimension_numbers<[1], [0], [0], [1], [0, 0, 1, 1], [], []>} : vector<16x8xf32>, vector<8x32xf32>, vector<16x32xf32> -> vector<16x32xf32>
    %87 = arith.addf %67, %86 : vector<16x32xf32>
    %88 = vector.extract_strided_slice %30 {offsets = [0, 16], sizes = [16, 8], strides = [1, 1]} : vector<16x32xf32> to vector<16x8xf32>
    %89 = vector.extract_strided_slice %35 {offsets = [0, 16], sizes = [16, 8], strides = [1, 1]} : vector<16x32xf32> to vector<16x8xf32>
    %90 = vector.extract_strided_slice %40 {offsets = [0, 16], sizes = [16, 8], strides = [1, 1]} : vector<16x32xf32> to vector<16x8xf32>
    %91 = tpu.transpose %89, [1, 0] : vector<16x8xf32> -> vector<8x16xf32>
    %cst_39 = arith.constant dense<0.000000e+00> : vector<16x16xf32>
    %92 = tpu.matmul %88, %91, %cst_39 {dimension_numbers = #tpu.dot_dimension_numbers<[1], [0], [0], [1], [0, 0, 1, 1], [], []>} : vector<16x8xf32>, vector<8x16xf32>, vector<16x16xf32> -> vector<16x16xf32>
    %93 = arith.addf %92, %46 : vector<16x16xf32>
    %cst_40 = arith.constant dense<0xFF800000> : vector<16xf32>
    %94 = vector.multi_reduction <maximumf>, %93, %cst_40 [1] : vector<16x16xf32> to vector<16xf32>
    %95 = vector.shape_cast %94 : vector<16xf32> to vector<16x1xf32>
    %96 = vector.broadcast %95 : vector<16x1xf32> to vector<16x16xf32>
    %97 = arith.subf %93, %96 : vector<16x16xf32>
    %98 = math.exp %97 : vector<16x16xf32>
    %cst_41 = arith.constant dense<0.000000e+00> : vector<16xf32>
    %99 = vector.multi_reduction <add>, %98, %cst_41 [1] : vector<16x16xf32> to vector<16xf32>
    %100 = vector.shape_cast %99 : vector<16xf32> to vector<16x1xf32>
    %101 = tpu.reciprocal %100 {approx = true} : vector<16x1xf32> -> vector<16x1xf32>
    %102 = vector.broadcast %101 : vector<16x1xf32> to vector<16x16xf32>
    %103 = arith.mulf %98, %102 : vector<16x16xf32>
    %cst_42 = arith.constant dense<0.000000e+00> : vector<16x8xf32>
    %104 = tpu.matmul %103, %90, %cst_42 {dimension_numbers = #tpu.dot_dimension_numbers<[1], [0], [0], [1], [0, 0, 1, 1], [], []>} : vector<16x16xf32>, vector<16x8xf32>, vector<16x8xf32> -> vector<16x8xf32>
    %c16 = arith.constant 16 : index
    %c0_43 = arith.constant 0 : index
    %105 = vector.load %arg6[%c16, %c0_43] : memref<32x32xf32, #tpu.memory_space<vmem>>, vector<8x32xf32>
    %cst_44 = arith.constant dense<0.000000e+00> : vector<16x32xf32>
    %106 = tpu.matmul %104, %105, %cst_44 {dimension_numbers = #tpu.dot_dimension_numbers<[1], [0], [0], [1], [0, 0, 1, 1], [], []>} : vector<16x8xf32>, vector<8x32xf32>, vector<16x32xf32> -> vector<16x32xf32>
    %107 = arith.addf %87, %106 : vector<16x32xf32>
    %108 = vector.extract_strided_slice %30 {offsets = [0, 24], sizes = [16, 8], strides = [1, 1]} : vector<16x32xf32> to vector<16x8xf32>
    %109 = vector.extract_strided_slice %35 {offsets = [0, 24], sizes = [16, 8], strides = [1, 1]} : vector<16x32xf32> to vector<16x8xf32>
    %110 = vector.extract_strided_slice %40 {offsets = [0, 24], sizes = [16, 8], strides = [1, 1]} : vector<16x32xf32> to vector<16x8xf32>
    %111 = tpu.transpose %109, [1, 0] : vector<16x8xf32> -> vector<8x16xf32>
    %cst_45 = arith.constant dense<0.000000e+00> : vector<16x16xf32>
    %112 = tpu.matmul %108, %111, %cst_45 {dimension_numbers = #tpu.dot_dimension_numbers<[1], [0], [0], [1], [0, 0, 1, 1], [], []>} : vector<16x8xf32>, vector<8x16xf32>, vector<16x16xf32> -> vector<16x16xf32>
    %113 = arith.addf %112, %46 : vector<16x16xf32>
    %cst_46 = arith.constant dense<0xFF800000> : vector<16xf32>
    %114 = vector.multi_reduction <maximumf>, %113, %cst_46 [1] : vector<16x16xf32> to vector<16xf32>
    %115 = vector.shape_cast %114 : vector<16xf32> to vector<16x1xf32>
    %116 = vector.broadcast %115 : vector<16x1xf32> to vector<16x16xf32>
    %117 = arith.subf %113, %116 : vector<16x16xf32>
    %118 = math.exp %117 : vector<16x16xf32>
    %cst_47 = arith.constant dense<0.000000e+00> : vector<16xf32>
    %119 = vector.multi_reduction <add>, %118, %cst_47 [1] : vector<16x16xf32> to vector<16xf32>
    %120 = vector.shape_cast %119 : vector<16xf32> to vector<16x1xf32>
    %121 = tpu.reciprocal %120 {approx = true} : vector<16x1xf32> -> vector<16x1xf32>
    %122 = vector.broadcast %121 : vector<16x1xf32> to vector<16x16xf32>
    %123 = arith.mulf %118, %122 : vector<16x16xf32>
    %cst_48 = arith.constant dense<0.000000e+00> : vector<16x8xf32>
    %124 = tpu.matmul %123, %110, %cst_48 {dimension_numbers = #tpu.dot_dimension_numbers<[1], [0], [0], [1], [0, 0, 1, 1], [], []>} : vector<16x16xf32>, vector<16x8xf32>, vector<16x8xf32> -> vector<16x8xf32>
    %c24 = arith.constant 24 : index
    %c0_49 = arith.constant 0 : index
    %125 = vector.load %arg6[%c24, %c0_49] : memref<32x32xf32, #tpu.memory_space<vmem>>, vector<8x32xf32>
    %cst_50 = arith.constant dense<0.000000e+00> : vector<16x32xf32>
    %126 = tpu.matmul %124, %125, %cst_50 {dimension_numbers = #tpu.dot_dimension_numbers<[1], [0], [0], [1], [0, 0, 1, 1], [], []>} : vector<16x8xf32>, vector<8x32xf32>, vector<16x32xf32> -> vector<16x32xf32>
    %127 = arith.addf %107, %126 : vector<16x32xf32>
    %c0_51 = arith.constant 0 : index
    %c0_52 = arith.constant 0 : index
    %128 = vector.load %arg7[%c0_51, %c0_52] : memref<1x32xf32, #tpu.memory_space<vmem>>, vector<1x32xf32>
    %129 = vector.broadcast %128 : vector<1x32xf32> to vector<16x32xf32>
    %130 = arith.addf %127, %129 : vector<16x32xf32>
    %131 = arith.addf %1, %130 : vector<16x32xf32>
    %c0_53 = arith.constant 0 : index
    %c0_54 = arith.constant 0 : index
    %132 = vector.load %arg8[%c0_53, %c0_54] : memref<1x32xf32, #tpu.memory_space<vmem>>, vector<1x32xf32>
    %c0_55 = arith.constant 0 : index
    %c0_56 = arith.constant 0 : index
    %133 = vector.load %arg9[%c0_55, %c0_56] : memref<1x32xf32, #tpu.memory_space<vmem>>, vector<1x32xf32>
    %cst_57 = arith.constant dense<0.000000e+00> : vector<16xf32>
    %134 = vector.multi_reduction <add>, %131, %cst_57 [1] : vector<16x32xf32> to vector<16xf32>
    %135 = vector.shape_cast %134 : vector<16xf32> to vector<16x1xf32>
    %cst_58 = arith.constant 3.200000e+01 : f32
    %136 = vector.broadcast %cst_58 : f32 to vector<16x1xf32>
    %137 = arith.divf %135, %136 : vector<16x1xf32>
    %138 = vector.broadcast %137 : vector<16x1xf32> to vector<16x32xf32>
    %139 = arith.subf %131, %138 : vector<16x32xf32>
    %140 = arith.mulf %139, %139 : vector<16x32xf32>
    %cst_59 = arith.constant dense<0.000000e+00> : vector<16xf32>
    %141 = vector.multi_reduction <add>, %140, %cst_59 [1] : vector<16x32xf32> to vector<16xf32>
    %142 = vector.shape_cast %141 : vector<16xf32> to vector<16x1xf32>
    %cst_60 = arith.constant 3.200000e+01 : f32
    %143 = vector.broadcast %cst_60 : f32 to vector<16x1xf32>
    %144 = arith.divf %142, %143 : vector<16x1xf32>
    %145 = vector.broadcast %137 : vector<16x1xf32> to vector<16x32xf32>
    %146 = arith.subf %131, %145 : vector<16x32xf32>
    %cst_61 = arith.constant 9.99999974E-6 : f32
    %147 = vector.broadcast %cst_61 : f32 to vector<16x1xf32>
    %148 = arith.addf %144, %147 : vector<16x1xf32>
    %149 = math.rsqrt %148 : vector<16x1xf32>
    %150 = vector.broadcast %149 : vector<16x1xf32> to vector<16x32xf32>
    %151 = arith.mulf %146, %150 : vector<16x32xf32>
    %152 = vector.broadcast %132 : vector<1x32xf32> to vector<16x32xf32>
    %153 = arith.mulf %151, %152 : vector<16x32xf32>
    %154 = vector.broadcast %133 : vector<1x32xf32> to vector<16x32xf32>
    %155 = arith.addf %153, %154 : vector<16x32xf32>
    %cst_62 = arith.constant 0.000000e+00 : f32
    %156 = vector.broadcast %cst_62 : f32 to vector<16x32xf32>
    %c0_63 = arith.constant 0 : index
    %c0_64 = arith.constant 0 : index
    %157 = vector.load %arg10[%c0_63, %c0_64] : memref<32x128xf32, #tpu.memory_space<vmem>>, vector<32x128xf32>
    %cst_65 = arith.constant dense<0.000000e+00> : vector<16x128xf32>
    %158 = tpu.matmul %155, %157, %cst_65 {dimension_numbers = #tpu.dot_dimension_numbers<[1], [0], [0], [1], [0, 0, 1, 1], [], []>} : vector<16x32xf32>, vector<32x128xf32>, vector<16x128xf32> -> vector<16x128xf32>
    %c0_66 = arith.constant 0 : index
    %c0_67 = arith.constant 0 : index
    %159 = vector.load %arg11[%c0_66, %c0_67] : memref<1x128xf32, #tpu.memory_space<vmem>>, vector<1x128xf32>
    %160 = vector.broadcast %159 : vector<1x128xf32> to vector<16x128xf32>
    %161 = arith.addf %158, %160 : vector<16x128xf32>
    %cst_68 = arith.constant 1.702000e+00 : f32
    %162 = vector.broadcast %cst_68 : f32 to vector<16x128xf32>
    %163 = arith.mulf %162, %161 : vector<16x128xf32>
    %164 = arith.negf %163 : vector<16x128xf32>
    %165 = math.exp %164 : vector<16x128xf32>
    %cst_69 = arith.constant 1.000000e+00 : f32
    %166 = vector.broadcast %cst_69 : f32 to vector<16x128xf32>
    %167 = arith.addf %166, %165 : vector<16x128xf32>
    %168 = arith.divf %166, %167 : vector<16x128xf32>
    %169 = arith.mulf %161, %168 : vector<16x128xf32>
    %c0_70 = arith.constant 0 : index
    %c0_71 = arith.constant 0 : index
    %170 = vector.load %arg12[%c0_70, %c0_71] : memref<128x32xf32, #tpu.memory_space<vmem>>, vector<128x32xf32>
    %cst_72 = arith.constant dense<0.000000e+00> : vector<16x32xf32>
    %171 = tpu.matmul %169, %170, %cst_72 {dimension_numbers = #tpu.dot_dimension_numbers<[1], [0], [0], [1], [0, 0, 1, 1], [], []>} : vector<16x128xf32>, vector<128x32xf32>, vector<16x32xf32> -> vector<16x32xf32>
    %172 = arith.addf %156, %171 : vector<16x32xf32>
    %c0_73 = arith.constant 0 : index
    %c0_74 = arith.constant 0 : index
    %173 = vector.load %arg13[%c0_73, %c0_74] : memref<1x32xf32, #tpu.memory_space<vmem>>, vector<1x32xf32>
    %174 = vector.broadcast %173 : vector<1x32xf32> to vector<16x32xf32>
    %175 = arith.addf %172, %174 : vector<16x32xf32>
    %176 = arith.addf %131, %175 : vector<16x32xf32>
    %c0_75 = arith.constant 0 : index
    %c0_76 = arith.constant 0 : index
    %c0_77 = arith.constant 0 : index
    %177 = vector.load %arg14[%c0_75, %c0_76, %c0_77] : memref<1x16x32xf32, #tpu.memory_space<vmem>>, vector<1x16x32xf32>
    %178 = vector.shape_cast %177 : vector<1x16x32xf32> to vector<16x32xf32>
    %179 = vector.shape_cast %176 : vector<16x32xf32> to vector<1x16x32xf32>
    tpu.vector_store %arg14[%c0_75, %c0_76, %c0_77], %179 {strides = array<i32>} : memref<1x16x32xf32, #tpu.memory_space<vmem>>, vector<1x16x32xf32>,
    return
  }
  func.func @transform_0(%arg0: i32) -> (i32, i32, i32) {
    %c0_i32 = arith.constant 0 : i32
    %c0_i32_0 = arith.constant 0 : i32
    %c0_i32_1 = arith.constant 0 : i32
    return %arg0, %c0_i32, %c0_i32_0 : i32, i32, i32
  }
  func.func @transform_1(%arg0: i32) -> (i32, i32) {
    %c0_i32 = arith.constant 0 : i32
    %c0_i32_0 = arith.constant 0 : i32
    %c0_i32_1 = arith.constant 0 : i32
    return %c0_i32, %c0_i32_0 : i32, i32
  }
  func.func @transform_2(%arg0: i32) -> (i32, i32) {
    %c0_i32 = arith.constant 0 : i32
    %c0_i32_0 = arith.constant 0 : i32
    %c0_i32_1 = arith.constant 0 : i32
    return %c0_i32, %c0_i32_0 : i32, i32
  }
  func.func @transform_3(%arg0: i32) -> (i32, i32) {
    %c0_i32 = arith.constant 0 : i32
    %c0_i32_0 = arith.constant 0 : i32
    %c0_i32_1 = arith.constant 0 : i32
    return %c0_i32, %c0_i32_0 : i32, i32
  }
  func.func @transform_4(%arg0: i32) -> (i32, i32) {
    %c0_i32 = arith.constant 0 : i32
    %c0_i32_0 = arith.constant 0 : i32
    %c0_i32_1 = arith.constant 0 : i32
    return %c0_i32, %c0_i32_0 : i32, i32
  }
  func.func @transform_5(%arg0: i32) -> (i32, i32) {
    %c0_i32 = arith.constant 0 : i32
    %c0_i32_0 = arith.constant 0 : i32
    %c0_i32_1 = arith.constant 0 : i32
    return %c0_i32, %c0_i32_0 : i32, i32
  }
  func.func @transform_6(%arg0: i32) -> (i32, i32) {
    %c0_i32 = arith.constant 0 : i32
    %c0_i32_0 = arith.constant 0 : i32
    %c0_i32_1 = arith.constant 0 : i32
    return %c0_i32, %c0_i32_0 : i32, i32
  }
  func.func @transform_7(%arg0: i32) -> (i32, i32) {
    %c0_i32 = arith.constant 0 : i32
    %c0_i32_0 = arith.constant 0 : i32
    %c0_i32_1 = arith.constant 0 : i32
    return %c0_i32, %c0_i32_0 : i32, i32
  }
  func.func @transform_8(%arg0: i32) -> (i32, i32) {
    %c0_i32 = arith.constant 0 : i32
    %c0_i32_0 = arith.constant 0 : i32
    %c0_i32_1 = arith.constant 0 : i32
    return %c0_i32, %c0_i32_0 : i32, i32
  }
  func.func @transform_9(%arg0: i32) -> (i32, i32) {
    %c0_i32 = arith.constant 0 : i32
    %c0_i32_0 = arith.constant 0 : i32
    %c0_i32_1 = arith.constant 0 : i32
    return %c0_i32, %c0_i32_0 : i32, i32
  }
  func.func @transform_10(%arg0: i32) -> (i32, i32) {
    %c0_i32 = arith.constant 0 : i32
    %c0_i32_0 = arith.constant 0 : i32
    %c0_i32_1 = arith.constant 0 : i32
    return %c0_i32, %c0_i32_0 : i32, i32
  }
  func.func @transform_11(%arg0: i32) -> (i32, i32) {
    %c0_i32 = arith.constant 0 : i32
    %c0_i32_0 = arith.constant 0 : i32
    %c0_i32_1 = arith.constant 0 : i32
    return %c0_i32, %c0_i32_0 : i32, i32
  }
  func.func @transform_12(%arg0: i32) -> (i32, i32) {
    %c0_i32 = arith.constant 0 : i32
    %c0_i32_0 = arith.constant 0 : i32
    %c0_i32_1 = arith.constant 0 : i32
    return %c0_i32, %c0_i32_0 : i32, i32
  }
  func.func @transform_13(%arg0: i32) -> (i32, i32, i32) {
    %c0_i32 = arith.constant 0 : i32
    %c0_i32_0 = arith.constant 0 : i32
    %c0_i32_1 = arith.constant 0 : i32
    return %arg0, %c0_i32, %c0_i32_0 : i32, i32, i32
  }
}

module attributes {stable_mosaic.version = 11 : i64} {
  func.func @_block_kernel(%arg0: i32, %arg1: memref<1x16x32xf32, #tpu.memory_space<vmem>>, %arg2: memref<1x32xf32, #tpu.memory_space<vmem>>, %arg3: memref<1x32xf32, #tpu.memory_space<vmem>>, %arg4: memref<32x96xf32, #tpu.memory_space<vmem>>, %arg5: memref<1x96xf32, #tpu.memory_space<vmem>>, %arg6: memref<32x32xf32, #tpu.memory_space<vmem>>, %arg7: memref<1x32xf32, #tpu.memory_space<vmem>>, %arg8: memref<1x32xf32, #tpu.memory_space<vmem>>, %arg9: memref<1x32xf32, #tpu.memory_space<vmem>>, %arg10: memref<32x128xf32, #tpu.memory_space<vmem>>, %arg11: memref<1x128xf32, #tpu.memory_space<vmem>>, %arg12: memref<128x32xf32, #tpu.memory_space<vmem>>, %arg13: memref<1x32xf32, #tpu.memory_space<vmem>>, %arg14: memref<1x16x32xf32, #tpu.memory_space<vmem>>) attributes {dimension_semantics = [#tpu.dimension_semantics<parallel>], iteration_bounds = array<i64: 2>, scalar_prefetch = 0 : i64, scratch_operands = 0 : i64, tpu.core_type = #tpu.core_type<tc>, window_params = [{transform_indices = @transform_0, window_bounds = array<i64: 1, 16, 32>}, {pipeline_mode = #tpu.pipeline_mode<synchronous>, transform_indices = @transform_1, window_bounds = array<i64: 1, 32>}, {pipeline_mode = #tpu.pipeline_mode<synchronous>, transform_indices = @transform_2, window_bounds = array<i64: 1, 32>}, {pipeline_mode = #tpu.pipeline_mode<synchronous>, transform_indices = @transform_3, window_bounds = array<i64: 32, 96>}, {pipeline_mode = #tpu.pipeline_mode<synchronous>, transform_indices = @transform_4, window_bounds = array<i64: 1, 96>}, {pipeline_mode = #tpu.pipeline_mode<synchronous>, transform_indices = @transform_5, window_bounds = array<i64: 32, 32>}, {pipeline_mode = #tpu.pipeline_mode<synchronous>, transform_indices = @transform_6, window_bounds = array<i64: 1, 32>}, {pipeline_mode = #tpu.pipeline_mode<synchronous>, transform_indices = @transform_7, window_bounds = array<i64: 1, 32>}, {pipeline_mode = #tpu.pipeline_mode<synchronous>, transform_indices = @transform_8, window_bounds = array<i64: 1, 32>}, {pipeline_mode = #tpu.pipeline_mode<synchronous>, transform_indices = @transform_9, window_bounds = array<i64: 32, 128>}, {pipeline_mode = #tpu.pipeline_mode<synchronous>, transform_indices = @transform_10, window_bounds = array<i64: 1, 128>}, {pipeline_mode = #tpu.pipeline_mode<synchronous>, transform_indices = @transform_11, window_bounds = array<i64: 128, 32>}, {pipeline_mode = #tpu.pipeline_mode<synchronous>, transform_indices = @transform_12, window_bounds = array<i64: 1, 32>}, {transform_indices = @transform_13, window_bounds = array<i64: 1, 16, 32>}]} {
    %c0 = arith.constant 0 : index
    %c0_0 = arith.constant 0 : index
    %c0_1 = arith.constant 0 : index
    %0 = vector.load %arg1[%c0, %c0_0, %c0_1] : memref<1x16x32xf32, #tpu.memory_space<vmem>>, vector<1x16x32xf32>
    %1 = vector.shape_cast %0 : vector<1x16x32xf32> to vector<16x32xf32>
    %c0_2 = arith.constant 0 : index
    %c0_3 = arith.constant 0 : index
    %2 = vector.load %arg2[%c0_2, %c0_3] : memref<1x32xf32, #tpu.memory_space<vmem>>, vector<1x32xf32>
    %c0_4 = arith.constant 0 : index
    %c0_5 = arith.constant 0 : index
    %3 = vector.load %arg3[%c0_4, %c0_5] : memref<1x32xf32, #tpu.memory_space<vmem>>, vector<1x32xf32>
    %cst = arith.constant dense<0.000000e+00> : vector<16xf32>
    %4 = vector.multi_reduction <add>, %1, %cst [1] : vector<16x32xf32> to vector<16xf32>
    %5 = vector.shape_cast %4 : vector<16xf32> to vector<16x1xf32>
    %cst_6 = arith.constant 3.200000e+01 : f32
    %6 = vector.broadcast %cst_6 : f32 to vector<16x1xf32>
    %7 = arith.divf %5, %6 : vector<16x1xf32>
    %8 = vector.broadcast %7 : vector<16x1xf32> to vector<16x32xf32>
    %9 = arith.subf %1, %8 : vector<16x32xf32>
    %10 = arith.mulf %9, %9 : vector<16x32xf32>
    %cst_7 = arith.constant dense<0.000000e+00> : vector<16xf32>
    %11 = vector.multi_reduction <add>, %10, %cst_7 [1] : vector<16x32xf32> to vector<16xf32>
    %12 = vector.shape_cast %11 : vector<16xf32> to vector<16x1xf32>
    %cst_8 = arith.constant 3.200000e+01 : f32
    %13 = vector.broadcast %cst_8 : f32 to vector<16x1xf32>
    %14 = arith.divf %12, %13 : vector<16x1xf32>
    %15 = vector.broadcast %7 : vector<16x1xf32> to vector<16x32xf32>
    %16 = arith.subf %1, %15 : vector<16x32xf32>
    %cst_9 = arith.constant 9.99999974E-6 : f32
    %17 = vector.broadcast %cst_9 : f32 to vector<16x1xf32>
    %18 = arith.addf %14, %17 : vector<16x1xf32>
    %19 = math.rsqrt %18 : vector<16x1xf32>
    %20 = vector.broadcast %19 : vector<16x1xf32> to vector<16x32xf32>
    %21 = arith.mulf %16, %20 : vector<16x32xf32>
    %22 = vector.broadcast %2 : vector<1x32xf32> to vector<16x32xf32>
    %23 = arith.mulf %21, %22 : vector<16x32xf32>
    %24 = vector.broadcast %3 : vector<1x32xf32> to vector<16x32xf32>
    %25 = arith.addf %23, %24 : vector<16x32xf32>
    %c0_10 = arith.constant 0 : index
    %c0_11 = arith.constant 0 : index
    %26 = vector.load %arg4[%c0_10, %c0_11] : memref<32x96xf32, #tpu.memory_space<vmem>>, vector<32x32xf32>
    %cst_12 = arith.constant dense<0.000000e+00> : vector<16x32xf32>
    %27 = tpu.matmul %25, %26, %cst_12 {dimension_numbers = #tpu.dot_dimension_numbers<[1], [0], [0], [1], [0, 0, 1, 1], [], []>} : vector<16x32xf32>, vector<32x32xf32>, vector<16x32xf32> -> vector<16x32xf32>
    %c0_13 = arith.constant 0 : index
    %c0_14 = arith.constant 0 : index
    %28 = vector.load %arg5[%c0_13, %c0_14] : memref<1x96xf32, #tpu.memory_space<vmem>>, vector<1x32xf32>
    %29 = vector.broadcast %28 : vector<1x32xf32> to vector<16x32xf32>
    %30 = arith.addf %27, %29 : vector<16x32xf32>
    %c0_15 = arith.constant 0 : index
    %c32 = arith.constant 32 : index
    %31 = vector.load %arg4[%c0_15, %c32] : memref<32x96xf32, #tpu.memory_space<vmem>>, vector<32x32xf32>
    %cst_16 = arith.constant dense<0.000000e+00> : vector<16x32xf32>
    %32 = tpu.matmul %25, %31, %cst_16 {dimension_numbers = #tpu.dot_dimension_numbers<[1], [0], [0], [1], [0, 0, 1, 1], [], []>} : vector<16x32xf32>, vector<32x32xf32>, vector<16x32xf32> -> vector<16x32xf32>
    %c0_17 = arith.constant 0 : index
    %c32_18 = arith.constant 32 : index
    %33 = vector.load %arg5[%c0_17, %c32_18] : memref<1x96xf32, #tpu.memory_space<vmem>>, vector<1x32xf32>
    %34 = vector.broadcast %33 : vector<1x32xf32> to vector<16x32xf32>
    %35 = arith.addf %32, %34 : vector<16x32xf32>
    %c0_19 = arith.constant 0 : index
    %c64 = arith.constant 64 : index
    %36 = vector.load %arg4[%c0_19, %c64] : memref<32x96xf32, #tpu.memory_space<vmem>>, vector<32x32xf32>
    %cst_20 = arith.constant dense<0.000000e+00> : vector<16x32xf32>
    %37 = tpu.matmul %25, %36, %cst_20 {dimension_numbers = #tpu.dot_dimension_numbers<[1], [0], [0], [1], [0, 0, 1, 1], [], []>} : vector<16x32xf32>, vector<32x32xf32>, vector<16x32xf32> -> vector<16x32xf32>
    %c0_21 = arith.constant 0 : index
    %c64_22 = arith.constant 64 : index
    %38 = vector.load %arg5[%c0_21, %c64_22] : memref<1x96xf32, #tpu.memory_space<vmem>>, vector<1x32xf32>
    %39 = vector.broadcast %38 : vector<1x32xf32> to vector<16x32xf32>
    %40 = arith.addf %37, %39 : vector<16x32xf32>
    %41 = tpu.iota {dimensions = array<i32: 1>} : vector<16x16xi32>
    %c10_i32 = arith.constant 10 : i32
    %42 = vector.broadcast %c10_i32 : i32 to vector<16x16xi32>
    %43 = arith.cmpi slt, %41, %42 : vector<16x16xi32>
    %cst_23 = arith.constant 0.000000e+00 : f32
    %cst_24 = arith.constant -1.000000e+30 : f32
    %44 = vector.broadcast %cst_23 : f32 to vector<16x16xf32>
    %45 = vector.broadcast %cst_24 : f32 to vector<16x16xf32>
    %46 = arith.select %43, %44, %45 : vector<16x16xi1>, vector<16x16xf32>
    %cst_25 = arith.constant 0.000000e+00 : f32
    %47 = vector.broadcast %cst_25 : f32 to vector<16x32xf32>
    %48 = vector.extract_strided_slice %30 {offsets = [0, 0], sizes = [16, 8], strides = [1, 1]} : vector<16x32xf32> to vector<16x8xf32>
    %49 = vector.extract_strided_slice %35 {offsets = [0, 0], sizes = [16, 8], strides = [1, 1]} : vector<16x32xf32> to vector<16x8xf32>
    %50 = vector.extract_strided_slice %40 {offsets = [0, 0], sizes = [16, 8], strides = [1, 1]} : vector<16x32xf32> to vector<16x8xf32>
    %51 = tpu.transpose %49, [1, 0] : vector<16x8xf32> -> vector<8x16xf32>
    %cst_26 = arith.constant dense<0.000000e+00> : vector<16x16xf32>
    %52 = tpu.matmul %48, %51, %cst_26 {dimension_numbers = #tpu.dot_dimension_numbers<[1], [0], [0], [1], [0, 0, 1, 1], [], []>} : vector<16x8xf32>, vector<8x16xf32>, vector<16x16xf32> -> vector<16x16xf32>
    %53 = arith.addf %52, %46 : vector<16x16xf32>
    %cst_27 = arith.constant dense<0xFF800000> : vector<16xf32>
    %54 = vector.multi_reduction <maximumf>, %53, %cst_27 [1] : vector<16x16xf32> to vector<16xf32>
    %55 = vector.shape_cast %54 : vector<16xf32> to vector<16x1xf32>
    %56 = vector.broadcast %55 : vector<16x1xf32> to vector<16x16xf32>
    %57 = arith.subf %53, %56 : vector<16x16xf32>
    %58 = math.exp %57 : vector<16x16xf32>
    %cst_28 = arith.constant dense<0.000000e+00> : vector<16xf32>
    %59 = vector.multi_reduction <add>, %58, %cst_28 [1] : vector<16x16xf32> to vector<16xf32>
    %60 = vector.shape_cast %59 : vector<16xf32> to vector<16x1xf32>
    %61 = tpu.reciprocal %60 {approx = true} : vector<16x1xf32> -> vector<16x1xf32>
    %62 = vector.broadcast %61 : vector<16x1xf32> to vector<16x16xf32>
    %63 = arith.mulf %58, %62 : vector<16x16xf32>
    %cst_29 = arith.constant dense<0.000000e+00> : vector<16x8xf32>
    %64 = tpu.matmul %63, %50, %cst_29 {dimension_numbers = #tpu.dot_dimension_numbers<[1], [0], [0], [1], [0, 0, 1, 1], [], []>} : vector<16x16xf32>, vector<16x8xf32>, vector<16x8xf32> -> vector<16x8xf32>
    %c0_30 = arith.constant 0 : index
    %c0_31 = arith.constant 0 : index
    %65 = vector.load %arg6[%c0_30, %c0_31] : memref<32x32xf32, #tpu.memory_space<vmem>>, vector<8x32xf32>
    %cst_32 = arith.constant dense<0.000000e+00> : vector<16x32xf32>
    %66 = tpu.matmul %64, %65, %cst_32 {dimension_numbers = #tpu.dot_dimension_numbers<[1], [0], [0], [1], [0, 0, 1, 1], [], []>} : vector<16x8xf32>, vector<8x32xf32>, vector<16x32xf32> -> vector<16x32xf32>
    %67 = arith.addf %47, %66 : vector<16x32xf32>
    %68 = vector.extract_strided_slice %30 {offsets = [0, 8], sizes = [16, 8], strides = [1, 1]} : vector<16x32xf32> to vector<16x8xf32>
    %69 = vector.extract_strided_slice %35 {offsets = [0, 8], sizes = [16, 8], strides = [1, 1]} : vector<16x32xf32> to vector<16x8xf32>
    %70 = vector.extract_strided_slice %40 {offsets = [0, 8], sizes = [16, 8], strides = [1, 1]} : vector<16x32xf32> to vector<16x8xf32>
    %71 = tpu.transpose %69, [1, 0] : vector<16x8xf32> -> vector<8x16xf32>
    %cst_33 = arith.constant dense<0.000000e+00> : vector<16x16xf32>
    %72 = tpu.matmul %68, %71, %cst_33 {dimension_numbers = #tpu.dot_dimension_numbers<[1], [0], [0], [1], [0, 0, 1, 1], [], []>} : vector<16x8xf32>, vector<8x16xf32>, vector<16x16xf32> -> vector<16x16xf32>
    %73 = arith.addf %72, %46 : vector<16x16xf32>
    %cst_34 = arith.constant dense<0xFF800000> : vector<16xf32>
    %74 = vector.multi_reduction <maximumf>, %73, %cst_34 [1] : vector<16x16xf32> to vector<16xf32>
    %75 = vector.shape_cast %74 : vector<16xf32> to vector<16x1xf32>
    %76 = vector.broadcast %75 : vector<16x1xf32> to vector<16x16xf32>
    %77 = arith.subf %73, %76 : vector<16x16xf32>
    %78 = math.exp %77 : vector<16x16xf32>
    %cst_35 = arith.constant dense<0.000000e+00> : vector<16xf32>
    %79 = vector.multi_reduction <add>, %78, %cst_35 [1] : vector<16x16xf32> to vector<16xf32>
    %80 = vector.shape_cast %79 : vector<16xf32> to vector<16x1xf32>
    %81 = tpu.reciprocal %80 {approx = true} : vector<16x1xf32> -> vector<16x1xf32>
    %82 = vector.broadcast %81 : vector<16x1xf32> to vector<16x16xf32>
    %83 = arith.mulf %78, %82 : vector<16x16xf32>
    %cst_36 = arith.constant dense<0.000000e+00> : vector<16x8xf32>
    %84 = tpu.matmul %83, %70, %cst_36 {dimension_numbers = #tpu.dot_dimension_numbers<[1], [0], [0], [1], [0, 0, 1, 1], [], []>} : vector<16x16xf32>, vector<16x8xf32>, vector<16x8xf32> -> vector<16x8xf32>
    %c8 = arith.constant 8 : index
    %c0_37 = arith.constant 0 : index
    %85 = vector.load %arg6[%c8, %c0_37] : memref<32x32xf32, #tpu.memory_space<vmem>>, vector<8x32xf32>
    %cst_38 = arith.constant dense<0.000000e+00> : vector<16x32xf32>
    %86 = tpu.matmul %84, %85, %cst_38 {dimension_numbers = #tpu.dot_dimension_numbers<[1], [0], [0], [1], [0, 0, 1, 1], [], []>} : vector<16x8xf32>, vector<8x32xf32>, vector<16x32xf32> -> vector<16x32xf32>
    %87 = arith.addf %67, %86 : vector<16x32xf32>
    %88 = vector.extract_strided_slice %30 {offsets = [0, 16], sizes = [16, 8], strides = [1, 1]} : vector<16x32xf32> to vector<16x8xf32>
    %89 = vector.extract_strided_slice %35 {offsets = [0, 16], sizes = [16, 8], strides = [1, 1]} : vector<16x32xf32> to vector<16x8xf32>
    %90 = vector.extract_strided_slice %40 {offsets = [0, 16], sizes = [16, 8], strides = [1, 1]} : vector<16x32xf32> to vector<16x8xf32>
    %91 = tpu.transpose %89, [1, 0] : vector<16x8xf32> -> vector<8x16xf32>
    %cst_39 = arith.constant dense<0.000000e+00> : vector<16x16xf32>
    %92 = tpu.matmul %88, %91, %cst_39 {dimension_numbers = #tpu.dot_dimension_numbers<[1], [0], [0], [1], [0, 0, 1, 1], [], []>} : vector<16x8xf32>, vector<8x16xf32>, vector<16x16xf32> -> vector<16x16xf32>
    %93 = arith.addf %92, %46 : vector<16x16xf32>
    %cst_40 = arith.constant dense<0xFF800000> : vector<16xf32>
    %94 = vector.multi_reduction <maximumf>, %93, %cst_40 [1] : vector<16x16xf32> to vector<16xf32>
    %95 = vector.shape_cast %94 : vector<16xf32> to vector<16x1xf32>
    %96 = vector.broadcast %95 : vector<16x1xf32> to vector<16x16xf32>
    %97 = arith.subf %93, %96 : vector<16x16xf32>
    %98 = math.exp %97 : vector<16x16xf32>
    %cst_41 = arith.constant dense<0.000000e+00> : vector<16xf32>
    %99 = vector.multi_reduction <add>, %98, %cst_41 [1] : vector<16x16xf32> to vector<16xf32>
    %100 = vector.shape_cast %99 : vector<16xf32> to vector<16x1xf32>
    %101 = tpu.reciprocal %100 {approx = true} : vector<16x1xf32> -> vector<16x1xf32>
    %102 = vector.broadcast %101 : vector<16x1xf32> to vector<16x16xf32>
    %103 = arith.mulf %98, %102 : vector<16x16xf32>
    %cst_42 = arith.constant dense<0.000000e+00> : vector<16x8xf32>
    %104 = tpu.matmul %103, %90, %cst_42 {dimension_numbers = #tpu.dot_dimension_numbers<[1], [0], [0], [1], [0, 0, 1, 1], [], []>} : vector<16x16xf32>, vector<16x8xf32>, vector<16x8xf32> -> vector<16x8xf32>
    %c16 = arith.constant 16 : index
    %c0_43 = arith.constant 0 : index
    %105 = vector.load %arg6[%c16, %c0_43] : memref<32x32xf32, #tpu.memory_space<vmem>>, vector<8x32xf32>
    %cst_44 = arith.constant dense<0.000000e+00> : vector<16x32xf32>
    %106 = tpu.matmul %104, %105, %cst_44 {dimension_numbers = #tpu.dot_dimension_numbers<[1], [0], [0], [1], [0, 0, 1, 1], [], []>} : vector<16x8xf32>, vector<8x32xf32>, vector<16x32xf32> -> vector<16x32xf32>
    %107 = arith.addf %87, %106 : vector<16x32xf32>
    %108 = vector.extract_strided_slice %30 {offsets = [0, 24], sizes = [16, 8], strides = [1, 1]} : vector<16x32xf32> to vector<16x8xf32>
    %109 = vector.extract_strided_slice %35 {offsets = [0, 24], sizes = [16, 8], strides = [1, 1]} : vector<16x32xf32> to vector<16x8xf32>
    %110 = vector.extract_strided_slice %40 {offsets = [0, 24], sizes = [16, 8], strides = [1, 1]} : vector<16x32xf32> to vector<16x8xf32>
    %111 = tpu.transpose %109, [1, 0] : vector<16x8xf32> -> vector<8x16xf32>
    %cst_45 = arith.constant dense<0.000000e+00> : vector<16x16xf32>
    %112 = tpu.matmul %108, %111, %cst_45 {dimension_numbers = #tpu.dot_dimension_numbers<[1], [0], [0], [1], [0, 0, 1, 1], [], []>} : vector<16x8xf32>, vector<8x16xf32>, vector<16x16xf32> -> vector<16x16xf32>
    %113 = arith.addf %112, %46 : vector<16x16xf32>
    %cst_46 = arith.constant dense<0xFF800000> : vector<16xf32>
    %114 = vector.multi_reduction <maximumf>, %113, %cst_46 [1] : vector<16x16xf32> to vector<16xf32>
    %115 = vector.shape_cast %114 : vector<16xf32> to vector<16x1xf32>
    %116 = vector.broadcast %115 : vector<16x1xf32> to vector<16x16xf32>
    %117 = arith.subf %113, %116 : vector<16x16xf32>
    %118 = math.exp %117 : vector<16x16xf32>
    %cst_47 = arith.constant dense<0.000000e+00> : vector<16xf32>
    %119 = vector.multi_reduction <add>, %118, %cst_47 [1] : vector<16x16xf32> to vector<16xf32>
    %120 = vector.shape_cast %119 : vector<16xf32> to vector<16x1xf32>
    %121 = tpu.reciprocal %120 {approx = true} : vector<16x1xf32> -> vector<16x1xf32>
    %122 = vector.broadcast %121 : vector<16x1xf32> to vector<16x16xf32>
    %123 = arith.mulf %118, %122 : vector<16x16xf32>
    %cst_48 = arith.constant dense<0.000000e+00> : vector<16x8xf32>
    %124 = tpu.matmul %123, %110, %cst_48 {dimension_numbers = #tpu.dot_dimension_numbers<[1], [0], [0], [1], [0, 0, 1, 1], [], []>} : vector<16x16xf32>, vector<16x8xf32>, vector<16x8xf32> -> vector<16x8xf32>
    %c24 = arith.constant 24 : index
    %c0_49 = arith.constant 0 : index
    %125 = vector.load %arg6[%c24, %c0_49] : memref<32x32xf32, #tpu.memory_space<vmem>>, vector<8x32xf32>
    %cst_50 = arith.constant dense<0.000000e+00> : vector<16x32xf32>
    %126 = tpu.matmul %124, %125, %cst_50 {dimension_numbers = #tpu.dot_dimension_numbers<[1], [0], [0], [1], [0, 0, 1, 1], [], []>} : vector<16x8xf32>, vector<8x32xf32>, vector<16x32xf32> -> vector<16x32xf32>
    %127 = arith.addf %107, %126 : vector<16x32xf32>
    %c0_51 = arith.constant 0 : index
    %c0_52 = arith.constant 0 : index
    %128 = vector.load %arg7[%c0_51, %c0_52] : memref<1x32xf32, #tpu.memory_space<vmem>>, vector<1x32xf32>
    %129 = vector.broadcast %128 : vector<1x32xf32> to vector<16x32xf32>
    %130 = arith.addf %127, %129 : vector<16x32xf32>
    %131 = arith.addf %1, %130 : vector<16x32xf32>
    %c0_53 = arith.constant 0 : index
    %c0_54 = arith.constant 0 : index
    %132 = vector.load %arg8[%c0_53, %c0_54] : memref<1x32xf32, #tpu.memory_space<vmem>>, vector<1x32xf32>
    %c0_55 = arith.constant 0 : index
    %c0_56 = arith.constant 0 : index
    %133 = vector.load %arg9[%c0_55, %c0_56] : memref<1x32xf32, #tpu.memory_space<vmem>>, vector<1x32xf32>
    %cst_57 = arith.constant dense<0.000000e+00> : vector<16xf32>
    %134 = vector.multi_reduction <add>, %131, %cst_57 [1] : vector<16x32xf32> to vector<16xf32>
    %135 = vector.shape_cast %134 : vector<16xf32> to vector<16x1xf32>
    %cst_58 = arith.constant 3.200000e+01 : f32
    %136 = vector.broadcast %cst_58 : f32 to vector<16x1xf32>
    %137 = arith.divf %135, %136 : vector<16x1xf32>
    %138 = vector.broadcast %137 : vector<16x1xf32> to vector<16x32xf32>
    %139 = arith.subf %131, %138 : vector<16x32xf32>
    %140 = arith.mulf %139, %139 : vector<16x32xf32>
    %cst_59 = arith.constant dense<0.000000e+00> : vector<16xf32>
    %141 = vector.multi_reduction <add>, %140, %cst_59 [1] : vector<16x32xf32> to vector<16xf32>
    %142 = vector.shape_cast %141 : vector<16xf32> to vector<16x1xf32>
    %cst_60 = arith.constant 3.200000e+01 : f32
    %143 = vector.broadcast %cst_60 : f32 to vector<16x1xf32>
    %144 = arith.divf %142, %143 : vector<16x1xf32>
    %145 = vector.broadcast %137 : vector<16x1xf32> to vector<16x32xf32>
    %146 = arith.subf %131, %145 : vector<16x32xf32>
    %cst_61 = arith.constant 9.99999974E-6 : f32
    %147 = vector.broadcast %cst_61 : f32 to vector<16x1xf32>
    %148 = arith.addf %144, %147 : vector<16x1xf32>
    %149 = math.rsqrt %148 : vector<16x1xf32>
    %150 = vector.broadcast %149 : vector<16x1xf32> to vector<16x32xf32>
    %151 = arith.mulf %146, %150 : vector<16x32xf32>
    %152 = vector.broadcast %132 : vector<1x32xf32> to vector<16x32xf32>
    %153 = arith.mulf %151, %152 : vector<16x32xf32>
    %154 = vector.broadcast %133 : vector<1x32xf32> to vector<16x32xf32>
    %155 = arith.addf %153, %154 : vector<16x32xf32>
    %cst_62 = arith.constant 0.000000e+00 : f32
    %156 = vector.broadcast %cst_62 : f32 to vector<16x32xf32>
    %c0_63 = arith.constant 0 : index
    %c0_64 = arith.constant 0 : index
    %157 = vector.load %arg10[%c0_63, %c0_64] : memref<32x128xf32, #tpu.memory_space<vmem>>, vector<32x128xf32>
    %cst_65 = arith.constant dense<0.000000e+00> : vector<16x128xf32>
    %158 = tpu.matmul %155, %157, %cst_65 {dimension_numbers = #tpu.dot_dimension_numbers<[1], [0], [0], [1], [0, 0, 1, 1], [], []>} : vector<16x32xf32>, vector<32x128xf32>, vector<16x128xf32> -> vector<16x128xf32>
    %c0_66 = arith.constant 0 : index
    %c0_67 = arith.constant 0 : index
    %159 = vector.load %arg11[%c0_66, %c0_67] : memref<1x128xf32, #tpu.memory_space<vmem>>, vector<1x128xf32>
    %160 = vector.broadcast %159 : vector<1x128xf32> to vector<16x128xf32>
    %161 = arith.addf %158, %160 : vector<16x128xf32>
    %cst_68 = arith.constant 1.702000e+00 : f32
    %162 = vector.broadcast %cst_68 : f32 to vector<16x128xf32>
    %163 = arith.mulf %162, %161 : vector<16x128xf32>
    %164 = arith.negf %163 : vector<16x128xf32>
    %165 = math.exp %164 : vector<16x128xf32>
    %cst_69 = arith.constant 1.000000e+00 : f32
    %166 = vector.broadcast %cst_69 : f32 to vector<16x128xf32>
    %167 = arith.addf %166, %165 : vector<16x128xf32>
    %168 = arith.divf %166, %167 : vector<16x128xf32>
    %169 = arith.mulf %161, %168 : vector<16x128xf32>
    %c0_70 = arith.constant 0 : index
    %c0_71 = arith.constant 0 : index
    %170 = vector.load %arg12[%c0_70, %c0_71] : memref<128x32xf32, #tpu.memory_space<vmem>>, vector<128x32xf32>
    %cst_72 = arith.constant dense<0.000000e+00> : vector<16x32xf32>
    %171 = tpu.matmul %169, %170, %cst_72 {dimension_numbers = #tpu.dot_dimension_numbers<[1], [0], [0], [1], [0, 0, 1, 1], [], []>} : vector<16x128xf32>, vector<128x32xf32>, vector<16x32xf32> -> vector<16x32xf32>
    %172 = arith.addf %156, %171 : vector<16x32xf32>
    %c0_73 = arith.constant 0 : index
    %c0_74 = arith.constant 0 : index
    %173 = vector.load %arg13[%c0_73, %c0_74] : memref<1x32xf32, #tpu.memory_space<vmem>>, vector<1x32xf32>
    %174 = vector.broadcast %173 : vector<1x32xf32> to vector<16x32xf32>
    %175 = arith.addf %172, %174 : vector<16x32xf32>
    %176 = arith.addf %131, %175 : vector<16x32xf32>
    %c0_75 = arith.constant 0 : index
    %c0_76 = arith.constant 0 : index
    %c0_77 = arith.constant 0 : index
    %177 = vector.load %arg14[%c0_75, %c0_76, %c0_77] : memref<1x16x32xf32, #tpu.memory_space<vmem>>, vector<1x16x32xf32>
    %178 = vector.shape_cast %177 : vector<1x16x32xf32> to vector<16x32xf32>
    %179 = vector.shape_cast %176 : vector<16x32xf32> to vector<1x16x32xf32>
    tpu.vector_store %arg14[%c0_75, %c0_76, %c0_77], %179 {strides = array<i32>} : memref<1x16x32xf32, #tpu.memory_space<vmem>>, vector<1x16x32xf32>,
    return
  }
  func.func @transform_0(%arg0: i32) -> (i32, i32, i32) {
    %c0_i32 = arith.constant 0 : i32
    %c0_i32_0 = arith.constant 0 : i32
    %c0_i32_1 = arith.constant 0 : i32
    return %arg0, %c0_i32, %c0_i32_0 : i32, i32, i32
  }
  func.func @transform_1(%arg0: i32) -> (i32, i32) {
    %c0_i32 = arith.constant 0 : i32
    %c0_i32_0 = arith.constant 0 : i32
    %c0_i32_1 = arith.constant 0 : i32
    return %c0_i32, %c0_i32_0 : i32, i32
  }
  func.func @transform_2(%arg0: i32) -> (i32, i32) {
    %c0_i32 = arith.constant 0 : i32
    %c0_i32_0 = arith.constant 0 : i32
    %c0_i32_1 = arith.constant 0 : i32
    return %c0_i32, %c0_i32_0 : i32, i32
  }
  func.func @transform_3(%arg0: i32) -> (i32, i32) {
    %c0_i32 = arith.constant 0 : i32
    %c0_i32_0 = arith.constant 0 : i32
    %c0_i32_1 = arith.constant 0 : i32
    return %c0_i32, %c0_i32_0 : i32, i32
  }
  func.func @transform_4(%arg0: i32) -> (i32, i32) {
    %c0_i32 = arith.constant 0 : i32
    %c0_i32_0 = arith.constant 0 : i32
    %c0_i32_1 = arith.constant 0 : i32
    return %c0_i32, %c0_i32_0 : i32, i32
  }
  func.func @transform_5(%arg0: i32) -> (i32, i32) {
    %c0_i32 = arith.constant 0 : i32
    %c0_i32_0 = arith.constant 0 : i32
    %c0_i32_1 = arith.constant 0 : i32
    return %c0_i32, %c0_i32_0 : i32, i32
  }
  func.func @transform_6(%arg0: i32) -> (i32, i32) {
    %c0_i32 = arith.constant 0 : i32
    %c0_i32_0 = arith.constant 0 : i32
    %c0_i32_1 = arith.constant 0 : i32
    return %c0_i32, %c0_i32_0 : i32, i32
  }
  func.func @transform_7(%arg0: i32) -> (i32, i32) {
    %c0_i32 = arith.constant 0 : i32
    %c0_i32_0 = arith.constant 0 : i32
    %c0_i32_1 = arith.constant 0 : i32
    return %c0_i32, %c0_i32_0 : i32, i32
  }
  func.func @transform_8(%arg0: i32) -> (i32, i32) {
    %c0_i32 = arith.constant 0 : i32
    %c0_i32_0 = arith.constant 0 : i32
    %c0_i32_1 = arith.constant 0 : i32
    return %c0_i32, %c0_i32_0 : i32, i32
  }
  func.func @transform_9(%arg0: i32) -> (i32, i32) {
    %c0_i32 = arith.constant 0 : i32
    %c0_i32_0 = arith.constant 0 : i32
    %c0_i32_1 = arith.constant 0 : i32
    return %c0_i32, %c0_i32_0 : i32, i32
  }
  func.func @transform_10(%arg0: i32) -> (i32, i32) {
    %c0_i32 = arith.constant 0 : i32
    %c0_i32_0 = arith.constant 0 : i32
    %c0_i32_1 = arith.constant 0 : i32
    return %c0_i32, %c0_i32_0 : i32, i32
  }
  func.func @transform_11(%arg0: i32) -> (i32, i32) {
    %c0_i32 = arith.constant 0 : i32
    %c0_i32_0 = arith.constant 0 : i32
    %c0_i32_1 = arith.constant 0 : i32
    return %c0_i32, %c0_i32_0 : i32, i32
  }
  func.func @transform_12(%arg0: i32) -> (i32, i32) {
    %c0_i32 = arith.constant 0 : i32
    %c0_i32_0 = arith.constant 0 : i32
    %c0_i32_1 = arith.constant 0 : i32
    return %c0_i32, %c0_i32_0 : i32, i32
  }
  func.func @transform_13(%arg0: i32) -> (i32, i32, i32) {
    %c0_i32 = arith.constant 0 : i32
    %c0_i32_0 = arith.constant 0 : i32
    %c0_i32_1 = arith.constant 0 : i32
    return %arg0, %c0_i32, %c0_i32_0 : i32, i32, i32
  }
}

</mosaic_0001>

<llo_original>
// kernel: tpu_custom_call.1
$region0: #{tpu_custom_call.1}
  #allocation0 [shape = 'u32[]', space=smem, size = 0x4, offset = 0x4, fixed_abs, tag = 'smem constant byte address 0x4 - core index']
  #allocation1 [shape = 'u32[144,128]{1,0:T(1,128)}', space=vmem, size = 0x12000, scoped, tag = 'internal scratch']
  %s0 = inlined_call_operand.hbm [shape: f32[2,16,32], index: 0, kind: input, shape index: {}]
  %s1 = inlined_call_operand.hbm [shape: f32[1,32], index: 1, kind: input, shape index: {}]
  %s2 = inlined_call_operand.hbm [shape: f32[1,32], index: 2, kind: input, shape index: {}]
  %s3 = inlined_call_operand.hbm [shape: f32[32,96], index: 3, kind: input, shape index: {}]
  %s4 = inlined_call_operand.hbm [shape: f32[1,96], index: 4, kind: input, shape index: {}]
  %s5 = inlined_call_operand.hbm [shape: f32[32,32], index: 5, kind: input, shape index: {}]
  %s6 = inlined_call_operand.hbm [shape: f32[1,32], index: 6, kind: input, shape index: {}]
  %s7 = inlined_call_operand.hbm [shape: f32[1,32], index: 7, kind: input, shape index: {}]
  %s8 = inlined_call_operand.hbm [shape: f32[1,32], index: 8, kind: input, shape index: {}]
  %s9 = inlined_call_operand.hbm [shape: f32[32,128], index: 9, kind: input, shape index: {}]
  %s10 = inlined_call_operand.hbm [shape: f32[1,128], index: 10, kind: input, shape index: {}]
  %s11 = inlined_call_operand.hbm [shape: f32[128,32], index: 11, kind: input, shape index: {}]
  %s12 = inlined_call_operand.hbm [shape: f32[1,32], index: 12, kind: input, shape index: {}]
  %s13 = inlined_call_operand.hbm [shape: f32[2,16,32], index: 13, kind: output, shape index: {}]
  %s14 = sld [smem:[#allocation0]]
  $region137: #{tpu_custom_call.1} parent=0
    _
  %s16 = ssub.s32 1, %s14
  %s17 = scalar_select 0, %s16, %s14
  $region1: #{tpu_custom_call.1} parent=0
    #allocation2 [shape = 'u8[16384]{0}', space=vmem, size = 0x4000, scoped, tag = 'input window, operand 0']
    #allocation3 [shape = 's32[2]{0}', space=sflag, size = 0x8, scoped, tag = 'scoped memory for tpu_custom_call.1']
    #allocation4 [shape = 's32[2]{0}', space=sflag, size = 0x8, scoped, tag = 'scoped memory for tpu_custom_call.1']
    #allocation5 [shape = 'u8[512]{0}', space=vmem, size = 0x400, scoped, tag = 'input window, operand 1, single buffered']
    #allocation6 [shape = 's32[1]{0}', space=sflag, size = 0x4, scoped, tag = 'scoped memory for tpu_custom_call.1']
    #allocation7 [shape = 'u8[512]{0}', space=vmem, size = 0x400, scoped, tag = 'input window, operand 2, single buffered']
    #allocation8 [shape = 'u8[16384]{0}', space=vmem, size = 0x4000, scoped, tag = 'input window, operand 3, single buffered']
    #allocation9 [shape = 's32[1]{0}', space=sflag, size = 0x4, scoped, tag = 'scoped memory for tpu_custom_call.1']
    #allocation10 [shape = 'u8[512]{0}', space=vmem, size = 0x400, scoped, tag = 'input window, operand 4, single buffered']
    #allocation11 [shape = 'u8[16384]{0}', space=vmem, size = 0x4000, scoped, tag = 'input window, operand 5, single buffered']
    #allocation12 [shape = 's32[1]{0}', space=sflag, size = 0x4, scoped, tag = 'scoped memory for tpu_custom_call.1']
    #allocation13 [shape = 'u8[512]{0}', space=vmem, size = 0x400, scoped, tag = 'input window, operand 6, single buffered']
    #allocation14 [shape = 'u8[512]{0}', space=vmem, size = 0x400, scoped, tag = 'input window, operand 7, single buffered']
    #allocation15 [shape = 's32[1]{0}', space=sflag, size = 0x4, scoped, tag = 'scoped memory for tpu_custom_call.1']
    #allocation16 [shape = 'u8[512]{0}', space=vmem, size = 0x400, scoped, tag = 'input window, operand 8, single buffered']
    #allocation17 [shape = 'u8[16384]{0}', space=vmem, size = 0x4000, scoped, tag = 'input window, operand 9, single buffered']
    #allocation18 [shape = 's32[1]{0}', space=sflag, size = 0x4, scoped, tag = 'scoped memory for tpu_custom_call.1']
    #allocation19 [shape = 'u8[512]{0}', space=vmem, size = 0x400, scoped, tag = 'input window, operand 10, single buffered']
    #allocation20 [shape = 'u8[65536]{0}', space=vmem, size = 0x10000, scoped, tag = 'input window, operand 11, single buffered']
    #allocation21 [shape = 's32[1]{0}', space=sflag, size = 0x4, scoped, tag = 'scoped memory for tpu_custom_call.1']
    #allocation22 [shape = 'u8[512]{0}', space=vmem, size = 0x400, scoped, tag = 'input window, operand 12, single buffered']
    #allocation23 [shape = 'u8[16384]{0}', space=vmem, size = 0x4000, scoped, tag = 'output window, operand 0']
    %18 = vsyncpa [#allocation3], 0
    %s19 = scalar_lea.sflag [#allocation3], 1
    %20 = vsyncpa %s19, 0
    %21 = vsyncpa [#allocation6], 0
    %22 = vsyncpa [#allocation9], 0
    %23 = vsyncpa [#allocation12], 0
    %24 = vsyncpa [#allocation15], 0
    %25 = vsyncpa [#allocation18], 0
    %26 = vsyncpa [#allocation21], 0
    %27 = vsyncpa [#allocation4], 0
    %s28 = scalar_lea.sflag [#allocation4], 1
    %29 = vsyncpa %s28, 0
    loop: start=0, step=1, limit=4
    $region2: #{tpu_custom_call.1} parent=1 // loop_pre_header
      _
    $region3: #{tpu_custom_call.1} parent=1 // loop_header
      %s31 = sphi 0, %s35
      %p32 = scmp.ge.s32.totalorder %s31, 4
      %s41 = sphi 0, %s43
      %s44 = sphi 0, %s41
      %s45 = sphi 0, %s44
      %s61 = sphi 0, %s45
      %s65 = sphi 0, %s65
      %s67 = sphi 0, %s65
      %s68 = sphi 0, %s67
      %s82 = sphi 0, %s68
      %s86 = sphi 0, %s86
      %s88 = sphi 0, %s86
      %s89 = sphi 0, %s88
      %s103 = sphi 0, %s89
      %s107 = sphi 0, %s107
      %s109 = sphi 0, %s107
      %s110 = sphi 0, %s109
      %s124 = sphi 0, %s110
      %s128 = sphi 0, %s128
      %s130 = sphi 0, %s128
      %s131 = sphi 0, %s130
      %s145 = sphi 0, %s131
      %s149 = sphi 0, %s149
      %s151 = sphi 0, %s149
      %s152 = sphi 0, %s151
      %s166 = sphi 0, %s152
      %s170 = sphi 0, %s170
      %s172 = sphi 0, %s170
      %s173 = sphi 0, %s172
      %s187 = sphi 0, %s173
      %s191 = sphi 0, %s191
      %s193 = sphi 0, %s191
      %s194 = sphi 0, %s193
      %s208 = sphi 0, %s194
      %s212 = sphi 0, %s212
      %s214 = sphi 0, %s212
      %s215 = sphi 0, %s214
      %s229 = sphi 0, %s215
      %s233 = sphi 0, %s233
      %s235 = sphi 0, %s233
      %s236 = sphi 0, %s235
      %s250 = sphi 0, %s236
      %s254 = sphi 0, %s254
      %s256 = sphi 0, %s254
      %s257 = sphi 0, %s256
      %s271 = sphi 0, %s257
      %s275 = sphi 0, %s275
      %s277 = sphi 0, %s275
      %s278 = sphi 0, %s277
      %s292 = sphi 0, %s278
      %s296 = sphi 0, %s296
      %s298 = sphi 0, %s296
      %s299 = sphi 0, %s298
      %s313 = sphi 0, %s299
      %s319 = sphi 0, %s321
      %s322 = sphi 0, %s319
      %s323 = sphi 0, %s322
      %s339 = sphi 0, %s323
    $region4: #{tpu_custom_call.1} parent=1 // loop_header_branch
      %34 = sbr.rel (%p32) target = $region8
    $region5: #{tpu_custom_call.1} parent=1 // loop_body
      %s36 = ssub.s32 %s31, 1
      %s37 = ssub.s32 %s31, 2
      %s38 = sadd.s32 %s31, 1
      %s39 = ssub.s32 %s31, %s38
      %p40 = scmp.eq.s32.totalorder %s39, 0
      %s42 = sadd.s32 %s41, 1
      %s43 = scalar_select %p40, %s41, %s42
      %p46 = pneg %p40
      %p47 = scmp.eq.s32.totalorder %s31, 1
      %p48 = por %p46, %p47
      %p49 = scmp.ne.s32.totalorder %s41, %s44
      %p50 = scmp.eq.s32.totalorder %s31, 0
      %p51 = por %p49, %p50
      %p52 = scmp.ne.s32.totalorder %s41, %s44
      %p53 = scmp.eq.s32.totalorder %s36, 1
      %p54 = por %p52, %p53
      %p55 = scmp.ne.s32.totalorder %s44, %s45
      %p56 = scmp.eq.s32.totalorder %s36, 0
      %p57 = por %p55, %p56
      %p58 = scmp.ne.s32.totalorder %s44, %s45
      %p59 = scmp.eq.s32.totalorder %s37, 1
      %p60 = por %p58, %p59
      %p62 = scmp.ne.s32.totalorder %s45, %s61
      %p63 = scmp.eq.s32.totalorder %s37, 0
      %p64 = por %p62, %p63
      %s66 = sadd.s32 %s65, 1
      %p69 = scmp.eq.s32.totalorder %s31, 1
      %p70 = scmp.ne.s32.totalorder %s65, %s67
      %p71 = scmp.eq.s32.totalorder %s31, 0
      %p72 = por %p70, %p71
      %p73 = scmp.ne.s32.totalorder %s65, %s67
      %p74 = scmp.eq.s32.totalorder %s36, 1
      %p75 = por %p73, %p74
      %p76 = scmp.ne.s32.totalorder %s67, %s68
      %p77 = scmp.eq.s32.totalorder %s36, 0
      %p78 = por %p76, %p77
      %p79 = scmp.ne.s32.totalorder %s67, %s68
      %p80 = scmp.eq.s32.totalorder %s37, 1
      %p81 = por %p79, %p80
      %p83 = scmp.ne.s32.totalorder %s68, %s82
      %p84 = scmp.eq.s32.totalorder %s37, 0
      %p85 = por %p83, %p84
      %s87 = sadd.s32 %s86, 1
      %p90 = scmp.eq.s32.totalorder %s31, 1
      %p91 = scmp.ne.s32.totalorder %s86, %s88
      %p92 = scmp.eq.s32.totalorder %s31, 0
      %p93 = por %p91, %p92
      %p94 = scmp.ne.s32.totalorder %s86, %s88
      %p95 = scmp.eq.s32.totalorder %s36, 1
      %p96 = por %p94, %p95
      %p97 = scmp.ne.s32.totalorder %s88, %s89
      %p98 = scmp.eq.s32.totalorder %s36, 0
      %p99 = por %p97, %p98
      %p100 = scmp.ne.s32.totalorder %s88, %s89
      %p101 = scmp.eq.s32.totalorder %s37, 1
      %p102 = por %p100, %p101
      %p104 = scmp.ne.s32.totalorder %s89, %s103
      %p105 = scmp.eq.s32.totalorder %s37, 0
      %p106 = por %p104, %p105
      %s108 = sadd.s32 %s107, 1
      %p111 = scmp.eq.s32.totalorder %s31, 1
      %p112 = scmp.ne.s32.totalorder %s107, %s109
      %p113 = scmp.eq.s32.totalorder %s31, 0
      %p114 = por %p112, %p113
      %p115 = scmp.ne.s32.totalorder %s107, %s109
      %p116 = scmp.eq.s32.totalorder %s36, 1
      %p117 = por %p115, %p116
      %p118 = scmp.ne.s32.totalorder %s109, %s110
      %p119 = scmp.eq.s32.totalorder %s36, 0
      %p120 = por %p118, %p119
      %p121 = scmp.ne.s32.totalorder %s109, %s110
      %p122 = scmp.eq.s32.totalorder %s37, 1
      %p123 = por %p121, %p122
      %p125 = scmp.ne.s32.totalorder %s110, %s124
      %p126 = scmp.eq.s32.totalorder %s37, 0
      %p127 = por %p125, %p126
      %s129 = sadd.s32 %s128, 1
      %p132 = scmp.eq.s32.totalorder %s31, 1
      %p133 = scmp.ne.s32.totalorder %s128, %s130
      %p134 = scmp.eq.s32.totalorder %s31, 0
      %p135 = por %p133, %p134
      %p136 = scmp.ne.s32.totalorder %s128, %s130
      %p137 = scmp.eq.s32.totalorder %s36, 1
      %p138 = por %p136, %p137
      %p139 = scmp.ne.s32.totalorder %s130, %s131
      %p140 = scmp.eq.s32.totalorder %s36, 0
      %p141 = por %p139, %p140
      %p142 = scmp.ne.s32.totalorder %s130, %s131
      %p143 = scmp.eq.s32.totalorder %s37, 1
      %p144 = por %p142, %p143
      %p146 = scmp.ne.s32.totalorder %s131, %s145
      %p147 = scmp.eq.s32.totalorder %s37, 0
      %p148 = por %p146, %p147
      %s150 = sadd.s32 %s149, 1
      %p153 = scmp.eq.s32.totalorder %s31, 1
      %p154 = scmp.ne.s32.totalorder %s149, %s151
      %p155 = scmp.eq.s32.totalorder %s31, 0
      %p156 = por %p154, %p155
      %p157 = scmp.ne.s32.totalorder %s149, %s151
      %p158 = scmp.eq.s32.totalorder %s36, 1
      %p159 = por %p157, %p158
      %p160 = scmp.ne.s32.totalorder %s151, %s152
      %p161 = scmp.eq.s32.totalorder %s36, 0
      %p162 = por %p160, %p161
      %p163 = scmp.ne.s32.totalorder %s151, %s152
      %p164 = scmp.eq.s32.totalorder %s37, 1
      %p165 = por %p163, %p164
      %p167 = scmp.ne.s32.totalorder %s152, %s166
      %p168 = scmp.eq.s32.totalorder %s37, 0
      %p169 = por %p167, %p168
      %s171 = sadd.s32 %s170, 1
      %p174 = scmp.eq.s32.totalorder %s31, 1
      %p175 = scmp.ne.s32.totalorder %s170, %s172
      %p176 = scmp.eq.s32.totalorder %s31, 0
      %p177 = por %p175, %p176
      %p178 = scmp.ne.s32.totalorder %s170, %s172
      %p179 = scmp.eq.s32.totalorder %s36, 1
      %p180 = por %p178, %p179
      %p181 = scmp.ne.s32.totalorder %s172, %s173
      %p182 = scmp.eq.s32.totalorder %s36, 0
      %p183 = por %p181, %p182
      %p184 = scmp.ne.s32.totalorder %s172, %s173
      %p185 = scmp.eq.s32.totalorder %s37, 1
      %p186 = por %p184, %p185
      %p188 = scmp.ne.s32.totalorder %s173, %s187
      %p189 = scmp.eq.s32.totalorder %s37, 0
      %p190 = por %p188, %p189
      %s192 = sadd.s32 %s191, 1
      %p195 = scmp.eq.s32.totalorder %s31, 1
      %p196 = scmp.ne.s32.totalorder %s191, %s193
      %p197 = scmp.eq.s32.totalorder %s31, 0
      %p198 = por %p196, %p197
      %p199 = scmp.ne.s32.totalorder %s191, %s193
      %p200 = scmp.eq.s32.totalorder %s36, 1
      %p201 = por %p199, %p200
      %p202 = scmp.ne.s32.totalorder %s193, %s194
      %p203 = scmp.eq.s32.totalorder %s36, 0
      %p204 = por %p202, %p203
      %p205 = scmp.ne.s32.totalorder %s193, %s194
      %p206 = scmp.eq.s32.totalorder %s37, 1
      %p207 = por %p205, %p206
      %p209 = scmp.ne.s32.totalorder %s194, %s208
      %p210 = scmp.eq.s32.totalorder %s37, 0
      %p211 = por %p209, %p210
      %s213 = sadd.s32 %s212, 1
      %p216 = scmp.eq.s32.totalorder %s31, 1
      %p217 = scmp.ne.s32.totalorder %s212, %s214
      %p218 = scmp.eq.s32.totalorder %s31, 0
      %p219 = por %p217, %p218
      %p220 = scmp.ne.s32.totalorder %s212, %s214
      %p221 = scmp.eq.s32.totalorder %s36, 1
      %p222 = por %p220, %p221
      %p223 = scmp.ne.s32.totalorder %s214, %s215
      %p224 = scmp.eq.s32.totalorder %s36, 0
      %p225 = por %p223, %p224
      %p226 = scmp.ne.s32.totalorder %s214, %s215
      %p227 = scmp.eq.s32.totalorder %s37, 1
      %p228 = por %p226, %p227
      %p230 = scmp.ne.s32.totalorder %s215, %s229
      %p231 = scmp.eq.s32.totalorder %s37, 0
      %p232 = por %p230, %p231
      %s234 = sadd.s32 %s233, 1
      %p237 = scmp.eq.s32.totalorder %s31, 1
      %p238 = scmp.ne.s32.totalorder %s233, %s235
      %p239 = scmp.eq.s32.totalorder %s31, 0
      %p240 = por %p238, %p239
      %p241 = scmp.ne.s32.totalorder %s233, %s235
      %p242 = scmp.eq.s32.totalorder %s36, 1
      %p243 = por %p241, %p242
      %p244 = scmp.ne.s32.totalorder %s235, %s236
      %p245 = scmp.eq.s32.totalorder %s36, 0
      %p246 = por %p244, %p245
      %p247 = scmp.ne.s32.totalorder %s235, %s236
      %p248 = scmp.eq.s32.totalorder %s37, 1
      %p249 = por %p247, %p248
      %p251 = scmp.ne.s32.totalorder %s236, %s250
      %p252 = scmp.eq.s32.totalorder %s37, 0
      %p253 = por %p251, %p252
      %s255 = sadd.s32 %s254, 1
      %p258 = scmp.eq.s32.totalorder %s31, 1
      %p259 = scmp.ne.s32.totalorder %s254, %s256
      %p260 = scmp.eq.s32.totalorder %s31, 0
      %p261 = por %p259, %p260
      %p262 = scmp.ne.s32.totalorder %s254, %s256
      %p263 = scmp.eq.s32.totalorder %s36, 1
      %p264 = por %p262, %p263
      %p265 = scmp.ne.s32.totalorder %s256, %s257
      %p266 = scmp.eq.s32.totalorder %s36, 0
      %p267 = por %p265, %p266
      %p268 = scmp.ne.s32.totalorder %s256, %s257
      %p269 = scmp.eq.s32.totalorder %s37, 1
      %p270 = por %p268, %p269
      %p272 = scmp.ne.s32.totalorder %s257, %s271
      %p273 = scmp.eq.s32.totalorder %s37, 0
      %p274 = por %p272, %p273
      %s276 = sadd.s32 %s275, 1
      %p279 = scmp.eq.s32.totalorder %s31, 1
      %p280 = scmp.ne.s32.totalorder %s275, %s277
      %p281 = scmp.eq.s32.totalorder %s31, 0
      %p282 = por %p280, %p281
      %p283 = scmp.ne.s32.totalorder %s275, %s277
      %p284 = scmp.eq.s32.totalorder %s36, 1
      %p285 = por %p283, %p284
      %p286 = scmp.ne.s32.totalorder %s277, %s278
      %p287 = scmp.eq.s32.totalorder %s36, 0
      %p288 = por %p286, %p287
      %p289 = scmp.ne.s32.totalorder %s277, %s278
      %p290 = scmp.eq.s32.totalorder %s37, 1
      %p291 = por %p289, %p290
      %p293 = scmp.ne.s32.totalorder %s278, %s292
      %p294 = scmp.eq.s32.totalorder %s37, 0
      %p295 = por %p293, %p294
      %s297 = sadd.s32 %s296, 1
      %p300 = scmp.eq.s32.totalorder %s31, 1
      %p301 = scmp.ne.s32.totalorder %s296, %s298
      %p302 = scmp.eq.s32.totalorder %s31, 0
      %p303 = por %p301, %p302
      %p304 = scmp.ne.s32.totalorder %s296, %s298
      %p305 = scmp.eq.s32.totalorder %s36, 1
      %p306 = por %p304, %p305
      %p307 = scmp.ne.s32.totalorder %s298, %s299
      %p308 = scmp.eq.s32.totalorder %s36, 0
      %p309 = por %p307, %p308
      %p310 = scmp.ne.s32.totalorder %s298, %s299
      %p311 = scmp.eq.s32.totalorder %s37, 1
      %p312 = por %p310, %p311
      %p314 = scmp.ne.s32.totalorder %s299, %s313
      %p315 = scmp.eq.s32.totalorder %s37, 0
      %p316 = por %p314, %p315
      %s317 = ssub.s32 %s31, %s38
      %p318 = scmp.eq.s32.totalorder %s317, 0
      %s320 = sadd.s32 %s319, 1
      %s321 = scalar_select %p318, %s319, %s320
      %p324 = pneg %p318
      %p325 = scmp.eq.s32.totalorder %s31, 1
      %p326 = por %p324, %p325
      %p327 = scmp.ne.s32.totalorder %s319, %s322
      %p328 = scmp.eq.s32.totalorder %s31, 0
      %p329 = por %p327, %p328
      %p330 = scmp.ne.s32.totalorder %s319, %s322
      %p331 = scmp.eq.s32.totalorder %s36, 1
      %p332 = por %p330, %p331
      %p333 = scmp.ne.s32.totalorder %s322, %s323
      %p334 = scmp.eq.s32.totalorder %s36, 0
      %p335 = por %p333, %p334
      %p336 = scmp.ne.s32.totalorder %s322, %s323
      %p337 = scmp.eq.s32.totalorder %s37, 1
      %p338 = por %p336, %p337
      %p340 = scmp.ne.s32.totalorder %s323, %s339
      %p341 = scmp.eq.s32.totalorder %s37, 0
      %p342 = por %p340, %p341
      %p343 = scmp.le.s32.totalorder 1, %s31
      %p344 = scmp.lt.s32.totalorder %s31, 3
      %p345 = pnand %p343, %p344
      %p346 = pneg %p345
      // Predicated region
      $region9: #{tpu_custom_call.1} parent=5 // pred_check
        _
      $region10: #{tpu_custom_call.1} parent=5 // pred_check_branch
        %348 = sbr.rel (%p345) target = $region12
      $region11: #{tpu_custom_call.1} parent=5 // pred_region
        %s349 = ssub.s32 %s31, 1
        // Predicated region
        $region13: #{tpu_custom_call.1} parent=11 // pred_check
          %p350 = pneg %p78
        $region14: #{tpu_custom_call.1} parent=11 // pred_check_branch
          %352 = sbr.rel (%p350) target = $region16
        $region15: #{tpu_custom_call.1} parent=11 // pred_region
          %s354 = ssub.s32 16, 16
          %355 = vsyncadd [#allocation6], %s354
          %s357 = sshll.u32 [#allocation5], 4
          %s358 = int_to_ptr.vmem [resolvable:$true] %s357
          %360 = dma.hbm_to_vmem [thread:$0]  %s1, 16, %s358, [#allocation6]
        $region16: #{tpu_custom_call.1} parent=11 // pred_fallthru
          _
        // Predicated region
        $region17: #{tpu_custom_call.1} parent=11 // pred_check
          %p361 = pneg %p99
        $region18: #{tpu_custom_call.1} parent=11 // pred_check_branch
          %363 = sbr.rel (%p361) target = $region20
        $region19: #{tpu_custom_call.1} parent=11 // pred_region
          %s365 = ssub.s32 16, 16
          %366 = vsyncadd [#allocation6], %s365
          %s368 = sshll.u32 [#allocation7], 4
          %s369 = int_to_ptr.vmem [resolvable:$true] %s368
          %371 = dma.hbm_to_vmem [thread:$0]  %s2, 16, %s369, [#allocation6]
        $region20: #{tpu_custom_call.1} parent=11 // pred_fallthru
          _
        // Predicated region
        $region21: #{tpu_custom_call.1} parent=11 // pred_check
          %p372 = pneg %p120
        $region22: #{tpu_custom_call.1} parent=11 // pred_check_branch
          %374 = sbr.rel (%p372) target = $region24
        $region23: #{tpu_custom_call.1} parent=11 // pred_region
          %s376 = ssub.s32 512, 512
          %377 = vsyncadd [#allocation9], %s376
          %s378 = sshll.u32 [#allocation8], 4
          %s379 = int_to_ptr.vmem [resolvable:$true] %s378
          %384 = dma.hbm_to_vmem [thread:$0]  %s3, 512, %s379, [#allocation9], 128, 128, 8
        $region24: #{tpu_custom_call.1} parent=11 // pred_fallthru
          _
        // Predicated region
        $region25: #{tpu_custom_call.1} parent=11 // pred_check
          %p385 = pneg %p141
        $region26: #{tpu_custom_call.1} parent=11 // pred_check_branch
          %387 = sbr.rel (%p385) target = $region28
        $region27: #{tpu_custom_call.1} parent=11 // pred_region
          %s389 = ssub.s32 16, 16
          %390 = vsyncadd [#allocation9], %s389
          %s392 = sshll.u32 [#allocation10], 4
          %s393 = int_to_ptr.vmem [resolvable:$true] %s392
          %395 = dma.hbm_to_vmem [thread:$0]  %s4, 16, %s393, [#allocation9]
        $region28: #{tpu_custom_call.1} parent=11 // pred_fallthru
          _
        // Predicated region
        $region29: #{tpu_custom_call.1} parent=11 // pred_check
          %p396 = pneg %p162
        $region30: #{tpu_custom_call.1} parent=11 // pred_check_branch
          %398 = sbr.rel (%p396) target = $region32
        $region31: #{tpu_custom_call.1} parent=11 // pred_region
          %s400 = ssub.s32 512, 512
          %401 = vsyncadd [#allocation12], %s400
          %s402 = sshll.u32 [#allocation11], 4
          %s403 = int_to_ptr.vmem [resolvable:$true] %s402
          %408 = dma.hbm_to_vmem [thread:$0]  %s5, 512, %s403, [#allocation12], 128, 128, 8
        $region32: #{tpu_custom_call.1} parent=11 // pred_fallthru
          _
        // Predicated region
        $region33: #{tpu_custom_call.1} parent=11 // pred_check
          %p409 = pneg %p183
        $region34: #{tpu_custom_call.1} parent=11 // pred_check_branch
          %411 = sbr.rel (%p409) target = $region36
        $region35: #{tpu_custom_call.1} parent=11 // pred_region
          %s413 = ssub.s32 16, 16
          %414 = vsyncadd [#allocation12], %s413
          %s416 = sshll.u32 [#allocation13], 4
          %s417 = int_to_ptr.vmem [resolvable:$true] %s416
          %419 = dma.hbm_to_vmem [thread:$0]  %s6, 16, %s417, [#allocation12]
        $region36: #{tpu_custom_call.1} parent=11 // pred_fallthru
          _
        // Predicated region
        $region37: #{tpu_custom_call.1} parent=11 // pred_check
          %p420 = pneg %p204
        $region38: #{tpu_custom_call.1} parent=11 // pred_check_branch
          %422 = sbr.rel (%p420) target = $region40
        $region39: #{tpu_custom_call.1} parent=11 // pred_region
          %s424 = ssub.s32 16, 16
          %425 = vsyncadd [#allocation15], %s424
          %s427 = sshll.u32 [#allocation14], 4
          %s428 = int_to_ptr.vmem [resolvable:$true] %s427
          %430 = dma.hbm_to_vmem [thread:$0]  %s7, 16, %s428, [#allocation15]
        $region40: #{tpu_custom_call.1} parent=11 // pred_fallthru
          _
        // Predicated region
        $region41: #{tpu_custom_call.1} parent=11 // pred_check
          %p431 = pneg %p225
        $region42: #{tpu_custom_call.1} parent=11 // pred_check_branch
          %433 = sbr.rel (%p431) target = $region44
        $region43: #{tpu_custom_call.1} parent=11 // pred_region
          %s435 = ssub.s32 16, 16
          %436 = vsyncadd [#allocation15], %s435
          %s438 = sshll.u32 [#allocation16], 4
          %s439 = int_to_ptr.vmem [resolvable:$true] %s438
          %441 = dma.hbm_to_vmem [thread:$0]  %s8, 16, %s439, [#allocation15]
        $region44: #{tpu_custom_call.1} parent=11 // pred_fallthru
          _
        // Predicated region
        $region45: #{tpu_custom_call.1} parent=11 // pred_check
          %p442 = pneg %p246
        $region46: #{tpu_custom_call.1} parent=11 // pred_check_branch
          %444 = sbr.rel (%p442) target = $region48
        $region47: #{tpu_custom_call.1} parent=11 // pred_region
          %s446 = ssub.s32 512, 512
          %447 = vsyncadd [#allocation18], %s446
          %s448 = sshll.u32 [#allocation17], 4
          %s449 = int_to_ptr.vmem [resolvable:$true] %s448
          %454 = dma.hbm_to_vmem [thread:$0]  %s9, 512, %s449, [#allocation18], 128, 128, 8
        $region48: #{tpu_custom_call.1} parent=11 // pred_fallthru
          _
        // Predicated region
        $region49: #{tpu_custom_call.1} parent=11 // pred_check
          %p455 = pneg %p267
        $region50: #{tpu_custom_call.1} parent=11 // pred_check_branch
          %457 = sbr.rel (%p455) target = $region52
        $region51: #{tpu_custom_call.1} parent=11 // pred_region
          %s459 = ssub.s32 16, 16
          %460 = vsyncadd [#allocation18], %s459
          %s462 = sshll.u32 [#allocation19], 4
          %s463 = int_to_ptr.vmem [resolvable:$true] %s462
          %465 = dma.hbm_to_vmem [thread:$0]  %s10, 16, %s463, [#allocation18]
        $region52: #{tpu_custom_call.1} parent=11 // pred_fallthru
          _
        // Predicated region
        $region53: #{tpu_custom_call.1} parent=11 // pred_check
          %p466 = pneg %p288
        $region54: #{tpu_custom_call.1} parent=11 // pred_check_branch
          %468 = sbr.rel (%p466) target = $region56
        $region55: #{tpu_custom_call.1} parent=11 // pred_region
          %s470 = ssub.s32 2048, 2048
          %471 = vsyncadd [#allocation21], %s470
          %s472 = sshll.u32 [#allocation20], 4
          %s473 = int_to_ptr.vmem [resolvable:$true] %s472
          %478 = dma.hbm_to_vmem [thread:$0]  %s11, 2048, %s473, [#allocation21], 128, 128, 8
        $region56: #{tpu_custom_call.1} parent=11 // pred_fallthru
          _
        // Predicated region
        $region57: #{tpu_custom_call.1} parent=11 // pred_check
          %p479 = pneg %p309
        $region58: #{tpu_custom_call.1} parent=11 // pred_check_branch
          %481 = sbr.rel (%p479) target = $region60
        $region59: #{tpu_custom_call.1} parent=11 // pred_region
          %s483 = ssub.s32 16, 16
          %484 = vsyncadd [#allocation21], %s483
          %s486 = sshll.u32 [#allocation22], 4
          %s487 = int_to_ptr.vmem [resolvable:$true] %s486
          %489 = dma.hbm_to_vmem [thread:$0]  %s12, 16, %s487, [#allocation21]
        $region60: #{tpu_custom_call.1} parent=11 // pred_fallthru
          _
      $region12: #{tpu_custom_call.1} parent=5 // pred_fallthru
        _
      %p490 = scmp.lt.s32.totalorder %s31, 2
      // Predicated region
      $region61: #{tpu_custom_call.1} parent=5 // pred_check
        %p491 = pneg %p490
      $region62: #{tpu_custom_call.1} parent=5 // pred_check_branch
        %493 = sbr.rel (%p491) target = $region64
      $region63: #{tpu_custom_call.1} parent=5 // pred_region
        // Predicated region
        $region65: #{tpu_custom_call.1} parent=63 // pred_check
          %p494 = pneg %p51
        $region66: #{tpu_custom_call.1} parent=63 // pred_check_branch
          %496 = sbr.rel (%p494) target = $region68
        $region67: #{tpu_custom_call.1} parent=63 // pred_region
          %s497 = sand.u32 %s41, 1
          %s498 = scalar_lea.sflag [#allocation3], %s497
          %s499 = sand.u32 %s41, 1
          %s500 = smul.addr %s499, 16
          %s501 = scalar_lea.vmem [#allocation2], %s500
          %s503 = ssub.s32 256, 256
          %504 = vsyncadd %s498, %s503
          %s505 = smul.addr %s31, 2
          %s506 = smul.addr %s505, 128
          %s507 = scalar_lea.hbm %s0, %s506
          %s508 = sshll.u32 %s501, 4
          %s509 = int_to_ptr.vmem [resolvable:$true] %s508
          %514 = dma.hbm_to_vmem [thread:$0]  %s507, 256, %s509, %s498, 128, 128, 8
        $region68: #{tpu_custom_call.1} parent=63 // pred_fallthru
          _
      $region64: #{tpu_custom_call.1} parent=5 // pred_fallthru
        _
      %p515 = scmp.le.s32.totalorder 1, %s31
      %p516 = scmp.lt.s32.totalorder %s31, 3
      %p517 = pnand %p515, %p516
      %p518 = pneg %p517
      // Predicated region
      $region69: #{tpu_custom_call.1} parent=5 // pred_check
        _
      $region70: #{tpu_custom_call.1} parent=5 // pred_check_branch
        %520 = sbr.rel (%p517) target = $region72
      $region71: #{tpu_custom_call.1} parent=5 // pred_region
        %s521 = ssub.s32 %s31, 1
        %s522 = sand.u32 %s44, 1
        %s523 = scalar_lea.sflag [#allocation3], %s522
        %s524 = sand.u32 %s44, 1
        %s525 = smul.addr %s524, 16
        %s526 = scalar_lea.vmem [#allocation2], %s525
        // Predicated region
        $region73: #{tpu_custom_call.1} parent=71 // pred_check
          %p527 = pneg %p57
        $region74: #{tpu_custom_call.1} parent=71 // pred_check_branch
          %529 = sbr.rel (%p527) target = $region76
        $region75: #{tpu_custom_call.1} parent=71 // pred_region
          %530 = dma.done %s523, 256
        $region76: #{tpu_custom_call.1} parent=71 // pred_fallthru
          _
        // Predicated region
        $region77: #{tpu_custom_call.1} parent=71 // pred_check
          %p531 = pneg %p78
        $region78: #{tpu_custom_call.1} parent=71 // pred_check_branch
          %533 = sbr.rel (%p531) target = $region80
        $region79: #{tpu_custom_call.1} parent=71 // pred_region
          %534 = dma.done [#allocation6], 16
        $region80: #{tpu_custom_call.1} parent=71 // pred_fallthru
          _
        // Predicated region
        $region81: #{tpu_custom_call.1} parent=71 // pred_check
          %p535 = pneg %p99
        $region82: #{tpu_custom_call.1} parent=71 // pred_check_branch
          %537 = sbr.rel (%p535) target = $region84
        $region83: #{tpu_custom_call.1} parent=71 // pred_region
          %538 = dma.done [#allocation6], 16
        $region84: #{tpu_custom_call.1} parent=71 // pred_fallthru
          _
        // Predicated region
        $region85: #{tpu_custom_call.1} parent=71 // pred_check
          %p539 = pneg %p120
        $region86: #{tpu_custom_call.1} parent=71 // pred_check_branch
          %541 = sbr.rel (%p539) target = $region88
        $region87: #{tpu_custom_call.1} parent=71 // pred_region
          %542 = dma.done [#allocation9], 512
        $region88: #{tpu_custom_call.1} parent=71 // pred_fallthru
          _
        // Predicated region
        $region89: #{tpu_custom_call.1} parent=71 // pred_check
          %p543 = pneg %p141
        $region90: #{tpu_custom_call.1} parent=71 // pred_check_branch
          %545 = sbr.rel (%p543) target = $region92
        $region91: #{tpu_custom_call.1} parent=71 // pred_region
          %546 = dma.done [#allocation9], 16
        $region92: #{tpu_custom_call.1} parent=71 // pred_fallthru
          _
        // Predicated region
        $region93: #{tpu_custom_call.1} parent=71 // pred_check
          %p547 = pneg %p162
        $region94: #{tpu_custom_call.1} parent=71 // pred_check_branch
          %549 = sbr.rel (%p547) target = $region96
        $region95: #{tpu_custom_call.1} parent=71 // pred_region
          %550 = dma.done [#allocation12], 512
        $region96: #{tpu_custom_call.1} parent=71 // pred_fallthru
          _
        // Predicated region
        $region97: #{tpu_custom_call.1} parent=71 // pred_check
          %p551 = pneg %p183
        $region98: #{tpu_custom_call.1} parent=71 // pred_check_branch
          %553 = sbr.rel (%p551) target = $region100
        $region99: #{tpu_custom_call.1} parent=71 // pred_region
          %554 = dma.done [#allocation12], 16
        $region100: #{tpu_custom_call.1} parent=71 // pred_fallthru
          _
        // Predicated region
        $region101: #{tpu_custom_call.1} parent=71 // pred_check
          %p555 = pneg %p204
        $region102: #{tpu_custom_call.1} parent=71 // pred_check_branch
          %557 = sbr.rel (%p555) target = $region104
        $region103: #{tpu_custom_call.1} parent=71 // pred_region
          %558 = dma.done [#allocation15], 16
        $region104: #{tpu_custom_call.1} parent=71 // pred_fallthru
          _
        // Predicated region
        $region105: #{tpu_custom_call.1} parent=71 // pred_check
          %p559 = pneg %p225
        $region106: #{tpu_custom_call.1} parent=71 // pred_check_branch
          %561 = sbr.rel (%p559) target = $region108
        $region107: #{tpu_custom_call.1} parent=71 // pred_region
          %562 = dma.done [#allocation15], 16
        $region108: #{tpu_custom_call.1} parent=71 // pred_fallthru
          _
        // Predicated region
        $region109: #{tpu_custom_call.1} parent=71 // pred_check
          %p563 = pneg %p246
        $region110: #{tpu_custom_call.1} parent=71 // pred_check_branch
          %565 = sbr.rel (%p563) target = $region112
        $region111: #{tpu_custom_call.1} parent=71 // pred_region
          %566 = dma.done [#allocation18], 512
        $region112: #{tpu_custom_call.1} parent=71 // pred_fallthru
          _
        // Predicated region
        $region113: #{tpu_custom_call.1} parent=71 // pred_check
          %p567 = pneg %p267
        $region114: #{tpu_custom_call.1} parent=71 // pred_check_branch
          %569 = sbr.rel (%p567) target = $region116
        $region115: #{tpu_custom_call.1} parent=71 // pred_region
          %570 = dma.done [#allocation18], 16
        $region116: #{tpu_custom_call.1} parent=71 // pred_fallthru
          _
        // Predicated region
        $region117: #{tpu_custom_call.1} parent=71 // pred_check
          %p571 = pneg %p288
        $region118: #{tpu_custom_call.1} parent=71 // pred_check_branch
          %573 = sbr.rel (%p571) target = $region120
        $region119: #{tpu_custom_call.1} parent=71 // pred_region
          %574 = dma.done [#allocation21], 2048
        $region120: #{tpu_custom_call.1} parent=71 // pred_fallthru
          _
        // Predicated region
        $region121: #{tpu_custom_call.1} parent=71 // pred_check
          %p575 = pneg %p309
        $region122: #{tpu_custom_call.1} parent=71 // pred_check_branch
          %577 = sbr.rel (%p575) target = $region124
        $region123: #{tpu_custom_call.1} parent=71 // pred_region
          %578 = dma.done [#allocation21], 16
        $region124: #{tpu_custom_call.1} parent=71 // pred_fallthru
          _
        %s579 = sand.u32 %s44, 1
        %s580 = scalar_lea.sflag [#allocation3], %s579
        %s581 = sand.u32 %s44, 1
        %s582 = smul.addr %s581, 16
        %s583 = scalar_lea.vmem [#allocation2], %s582
        %p584 = pneg %p57
        %p585 = pneg %p54
        %p586 = pneg %p78
        %p587 = pneg %p75
        %p588 = pneg %p99
        %p589 = pneg %p96
        %p590 = pneg %p120
        %p591 = pneg %p117
        %p592 = pneg %p141
        %p593 = pneg %p138
        %p594 = pneg %p162
        %p595 = pneg %p159
        %p596 = pneg %p183
        %p597 = pneg %p180
        %p598 = pneg %p204
        %p599 = pneg %p201
        %p600 = pneg %p225
        %p601 = pneg %p222
        %p602 = pneg %p246
        %p603 = pneg %p243
        %p604 = pneg %p267
        %p605 = pneg %p264
        %p606 = pneg %p288
        %p607 = pneg %p285
        %p608 = pneg %p309
        %p609 = pneg %p306
        %p610 = pneg %p335
        %p611 = pneg %p332
        %s612 = sand.u32 %s322, 1
        %s613 = scalar_lea.sflag [#allocation4], %s612
        %s614 = sand.u32 %s322, 1
        %s615 = smul.addr %s614, 16
        %s616 = scalar_lea.vmem [#allocation23], %s615
        %v617 = vld [vmem:[%s526] sm:$0xff]
        %v618 = vld [vmem:[%s526 + $0x8] sm:$0xff]
        %v619 = vld [vmem:[#allocation5] sm:$0x1]
        %v620 = vld [vmem:[#allocation7] sm:$0x1]
        %vm621 = vcmask 261120
        %v622 = vsel %vm621, %v617, 0.0
        %623 = vadd.xlane.f32.xlu0 %v622
        %v624 = vpop.xlane.xlu0 %623
        %v625 = vsel %vm621, %v618, 0.0
        %626 = vadd.xlane.f32.xlu0 %v625
        %v627 = vpop.xlane.xlu0 %626
        %v628 = vrcp.pop 32.0
        %v629 = vmul.f32 %v624, %v628
        %v630 = vmul.f32 %v627, %v628
        %v631 = vsub.f32 %v617, %v629
        %v632 = vsub.f32 %v618, %v630
        %v633 = vmul.f32 %v631, %v631
        %v634 = vmul.f32 %v632, %v632
        %v635 = vsel %vm621, %v633, 0.0
        %636 = vadd.xlane.f32.xlu0 %v635
        %v637 = vpop.xlane.xlu0 %636
        %v638 = vsel %vm621, %v634, 0.0
        %639 = vadd.xlane.f32.xlu0 %v638
        %v640 = vpop.xlane.xlu0 %639
        %v641 = vmul.f32 %v637, %v628
        %v642 = vmul.f32 %v640, %v628
        %v643 = vadd.f32 %v641, 1e-05
        %v644 = vadd.f32 %v642, 1e-05
        %v645 = vrsqrt.pop %v643
        %v646 = vrsqrt.pop %v644
        %v647 = vmul.f32 %v631, %v645
        %v648 = vmul.f32 %v632, %v646
        %v650 = vlaneseq
        %v651 = vshrl.u32 %v650, 7
        %v652 = vsub.s32 0, %v651
        %v653 = vrot.slane %v619, %v652
        %v655 = vmul.f32 %v647, %v653
        %v656 = vmul.f32 %v648, %v653
        %v658 = vlaneseq
        %v659 = vshrl.u32 %v658, 7
        %v660 = vsub.s32 0, %v659
        %v661 = vrot.slane %v620, %v660
        %v663 = vadd.f32 %v655, %v661
        %v664 = vadd.f32 %v656, %v661
        %v665 = vld [vmem:[#allocation8] sm:$0xff]
        %v666 = vld [vmem:[#allocation8 + $0x8] sm:$0xff]
        %v667 = vld [vmem:[#allocation8 + $0x10] sm:$0xff]
        %v668 = vld [vmem:[#allocation8 + $0x18] sm:$0xff]
        %v669 = vld [vmem:[#allocation10] sm:$0x1]
        %v671 = vlaneseq
        %v672 = vshrl.u32 %v671, 7
        %v673 = vsub.s32 0, %v672
        %v674 = vrot.slane %v669, %v673
        %v677 = vsel %vm621, %v663, 0
        %v680 = vsel %vm621, %v664, 0
        %682 = vmatprep.subr.mxu0 0.0
        %683 = vmatpush1.msra.mxu0 %v665
        %684 = vmatprep.subr.mxu0 0.0
        %685 = vmatpush1.msra.mxu0 %v666
        %686 = vmatprep.subr.mxu0 0.0
        %687 = vmatpush1.msra.mxu0 %v667
        %688 = vmatprep.subr.mxu0 0.0
        %689 = vmatpush1.msra.mxu0 %v668
        %690 = vmatprep.subr.mxu0 0.0
        %691 = vmatpush1.msra.mxu0 0.0
        %692 = vmatprep.subr.mxu0 0.0
        %693 = vmatpush1.msra.mxu0 0.0
        %694 = vmatprep.subr.mxu0 0.0
        %695 = vmatpush1.msra.mxu0 0.0
        %696 = vmatprep.subr.mxu0 0.0
        %697 = vmatpush1.msra.mxu0 0.0
        %698 = vmatprep.subr.mxu0 0.0
        %699 = vmatpush1.msra.mxu0 0.0
        %700 = vmatprep.subr.mxu0 0.0
        %701 = vmatpush1.msra.mxu0 0.0
        %702 = vmatprep.subr.mxu0 0.0
        %703 = vmatpush1.msra.mxu0 0.0
        %704 = vmatprep.subr.mxu0 0.0
        %705 = vmatpush1.msra.mxu0 0.0
        %706 = vmatprep.subr.mxu0 0.0
        %707 = vmatpush1.msra.mxu0 0.0
        %708 = vmatprep.subr.mxu0 0.0
        %709 = vmatpush1.msra.mxu0 0.0
        %710 = vmatprep.subr.mxu0 0.0
        %711 = vmatpush1.msra.mxu0 0.0
        %712 = vmatprep.subr.mxu0 0.0
        %713 = vmatpush1.msra.mxu0 0.0
        %714 = vmatprep.subr.mxu0 0.0
        %715 = vmatpush1.msra.mxu0 0.0
        %716 = vmatprep.subr.mxu0 0.0
        %717 = vmatpush1.msra.mxu0 0.0
        %718 = vmatprep.subr.mxu0 0.0
        %719 = vmatpush1.msra.mxu0 0.0
        %720 = vmatprep.subr.mxu0 0.0
        %721 = vmatpush1.msra.mxu0 0.0
        %722 = vmatprep.subr.mxu0 0.0
        %723 = vmatpush1.msra.mxu0 0.0
        %724 = vmatprep.subr.mxu0 0.0
        %725 = vmatpush1.msra.mxu0 0.0
        %726 = vmatprep.subr.mxu0 0.0
        %727 = vmatpush1.msra.mxu0 0.0
        %728 = vmatprep.subr.mxu0 0.0
        %729 = vmatpush1.msra.mxu0 0.0
        %730 = vmatprep.subr.mxu0 0.0
        %731 = vmatpush1.msra.mxu0 0.0
        %732 = vmatprep.subr.mxu0 0.0
        %733 = vmatpush1.msra.mxu0 0.0
        %734 = vmatprep.subr.mxu0 0.0
        %735 = vmatpush1.msra.mxu0 0.0
        %736 = vmatprep.subr.mxu0 0.0
        %737 = vmatpush1.msra.mxu0 0.0
        %738 = vmatprep.subr.mxu0 0.0
        %739 = vmatpush1.msra.mxu0 0.0
        %740 = vmatprep.subr.mxu0 0.0
        %741 = vmatpush1.msra.mxu0 0.0
        %742 = vmatprep.subr.mxu0 0.0
        %743 = vmatpush1.msra.mxu0 0.0
        %744 = vmatprep.subr.mxu0 0.0
        %745 = vmatpush1.msra.mxu0 0.0
        %746 = vmatprep.mubr.f32.mxu0 0.0
        %747 = vmatmul.mubr.f32.gmra.mrb[0].mxu0 %v677
        %v748 = vpop.f32.mrb[0].mxu0
        %v749 = vadd.f32 %v674, %v748
        %v750 = vpop.f32.mrb[0].mxu0
        %751 = vmatprep.mubr.f32.mxu0 0.0
        %752 = vmatmul.mubr.f32.gmra.mrb[0].mxu0 %v680
        %v753 = vpop.f32.mrb[0].mxu0
        %v754 = vadd.f32 %v674, %v753
        %v755 = vpop.f32.mrb[0].mxu0
        %756 = vdwg.mxu0
        %761 = vrot.lane.b32.xlu0 %v665, 96
        %v762 = vpop.permute.xlu0 %761
        %763 = vrot.lane.b32.xlu0 %v666, 96
        %v764 = vpop.permute.xlu0 %763
        %765 = vrot.lane.b32.xlu0 %v667, 96
        %v766 = vpop.permute.xlu0 %765
        %767 = vrot.lane.b32.xlu0 %v668, 96
        %v768 = vpop.permute.xlu0 %767
        %773 = vrot.lane.b32.xlu0 %v674, 96
        %v774 = vpop.permute.xlu0 %773
        %776 = vmatprep.subr.mxu0 0.0
        %777 = vmatpush1.msra.mxu0 %v762
        %778 = vmatprep.subr.mxu0 0.0
        %779 = vmatpush1.msra.mxu0 %v764
        %780 = vmatprep.subr.mxu0 0.0
        %781 = vmatpush1.msra.mxu0 %v766
        %782 = vmatprep.subr.mxu0 0.0
        %783 = vmatpush1.msra.mxu0 %v768
        %784 = vmatprep.subr.mxu0 0.0
        %785 = vmatpush1.msra.mxu0 0.0
        %786 = vmatprep.subr.mxu0 0.0
        %787 = vmatpush1.msra.mxu0 0.0
        %788 = vmatprep.subr.mxu0 0.0
        %789 = vmatpush1.msra.mxu0 0.0
        %790 = vmatprep.subr.mxu0 0.0
        %791 = vmatpush1.msra.mxu0 0.0
        %792 = vmatprep.subr.mxu0 0.0
        %793 = vmatpush1.msra.mxu0 0.0
        %794 = vmatprep.subr.mxu0 0.0
        %795 = vmatpush1.msra.mxu0 0.0
        %796 = vmatprep.subr.mxu0 0.0
        %797 = vmatpush1.msra.mxu0 0.0
        %798 = vmatprep.subr.mxu0 0.0
        %799 = vmatpush1.msra.mxu0 0.0
        %800 = vmatprep.subr.mxu0 0.0
        %801 = vmatpush1.msra.mxu0 0.0
        %802 = vmatprep.subr.mxu0 0.0
        %803 = vmatpush1.msra.mxu0 0.0
        %804 = vmatprep.subr.mxu0 0.0
        %805 = vmatpush1.msra.mxu0 0.0
        %806 = vmatprep.subr.mxu0 0.0
        %807 = vmatpush1.msra.mxu0 0.0
        %808 = vmatprep.subr.mxu0 0.0
        %809 = vmatpush1.msra.mxu0 0.0
        %810 = vmatprep.subr.mxu0 0.0
        %811 = vmatpush1.msra.mxu0 0.0
        %812 = vmatprep.subr.mxu0 0.0
        %813 = vmatpush1.msra.mxu0 0.0
        %814 = vmatprep.subr.mxu0 0.0
        %815 = vmatpush1.msra.mxu0 0.0
        %816 = vmatprep.subr.mxu0 0.0
        %817 = vmatpush1.msra.mxu0 0.0
        %818 = vmatprep.subr.mxu0 0.0
        %819 = vmatpush1.msra.mxu0 0.0
        %820 = vmatprep.subr.mxu0 0.0
        %821 = vmatpush1.msra.mxu0 0.0
        %822 = vmatprep.subr.mxu0 0.0
        %823 = vmatpush1.msra.mxu0 0.0
        %824 = vmatprep.subr.mxu0 0.0
        %825 = vmatpush1.msra.mxu0 0.0
        %826 = vmatprep.subr.mxu0 0.0
        %827 = vmatpush1.msra.mxu0 0.0
        %828 = vmatprep.subr.mxu0 0.0
        %829 = vmatpush1.msra.mxu0 0.0
        %830 = vmatprep.subr.mxu0 0.0
        %831 = vmatpush1.msra.mxu0 0.0
        %832 = vmatprep.subr.mxu0 0.0
        %833 = vmatpush1.msra.mxu0 0.0
        %834 = vmatprep.subr.mxu0 0.0
        %835 = vmatpush1.msra.mxu0 0.0
        %836 = vmatprep.subr.mxu0 0.0
        %837 = vmatpush1.msra.mxu0 0.0
        %838 = vmatprep.subr.mxu0 0.0
        %839 = vmatpush1.msra.mxu0 0.0
        %840 = vmatprep.mubr.f32.mxu0 0.0
        %841 = vmatmul.mubr.f32.gmra.mrb[0].mxu0 %v677
        %v842 = vpop.f32.mrb[0].mxu0
        %v843 = vadd.f32 %v774, %v842
        %v844 = vpop.f32.mrb[0].mxu0
        %845 = vmatprep.mubr.f32.mxu0 0.0
        %846 = vmatmul.mubr.f32.gmra.mrb[0].mxu0 %v680
        %v847 = vpop.f32.mrb[0].mxu0
        %v848 = vadd.f32 %v774, %v847
        %v849 = vpop.f32.mrb[0].mxu0
        %850 = vdwg.mxu0
        %851 = vrot.lane.b32.xlu0 %v665, 64
        %v852 = vpop.permute.xlu0 %851
        %853 = vrot.lane.b32.xlu0 %v666, 64
        %v854 = vpop.permute.xlu0 %853
        %855 = vrot.lane.b32.xlu0 %v667, 64
        %v856 = vpop.permute.xlu0 %855
        %857 = vrot.lane.b32.xlu0 %v668, 64
        %v858 = vpop.permute.xlu0 %857
        %863 = vrot.lane.b32.xlu0 %v674, 64
        %v864 = vpop.permute.xlu0 %863
        %866 = vmatprep.subr.mxu0 0.0
        %867 = vmatpush1.msra.mxu0 %v852
        %868 = vmatprep.subr.mxu0 0.0
        %869 = vmatpush1.msra.mxu0 %v854
        %870 = vmatprep.subr.mxu0 0.0
        %871 = vmatpush1.msra.mxu0 %v856
        %872 = vmatprep.subr.mxu0 0.0
        %873 = vmatpush1.msra.mxu0 %v858
        %874 = vmatprep.subr.mxu0 0.0
        %875 = vmatpush1.msra.mxu0 0.0
        %876 = vmatprep.subr.mxu0 0.0
        %877 = vmatpush1.msra.mxu0 0.0
        %878 = vmatprep.subr.mxu0 0.0
        %879 = vmatpush1.msra.mxu0 0.0
        %880 = vmatprep.subr.mxu0 0.0
        %881 = vmatpush1.msra.mxu0 0.0
        %882 = vmatprep.subr.mxu0 0.0
        %883 = vmatpush1.msra.mxu0 0.0
        %884 = vmatprep.subr.mxu0 0.0
        %885 = vmatpush1.msra.mxu0 0.0
        %886 = vmatprep.subr.mxu0 0.0
        %887 = vmatpush1.msra.mxu0 0.0
        %888 = vmatprep.subr.mxu0 0.0
        %889 = vmatpush1.msra.mxu0 0.0
        %890 = vmatprep.subr.mxu0 0.0
        %891 = vmatpush1.msra.mxu0 0.0
        %892 = vmatprep.subr.mxu0 0.0
        %893 = vmatpush1.msra.mxu0 0.0
        %894 = vmatprep.subr.mxu0 0.0
        %895 = vmatpush1.msra.mxu0 0.0
        %896 = vmatprep.subr.mxu0 0.0
        %897 = vmatpush1.msra.mxu0 0.0
        %898 = vmatprep.subr.mxu0 0.0
        %899 = vmatpush1.msra.mxu0 0.0
        %900 = vmatprep.subr.mxu0 0.0
        %901 = vmatpush1.msra.mxu0 0.0
        %902 = vmatprep.subr.mxu0 0.0
        %903 = vmatpush1.msra.mxu0 0.0
        %904 = vmatprep.subr.mxu0 0.0
        %905 = vmatpush1.msra.mxu0 0.0
        %906 = vmatprep.subr.mxu0 0.0
        %907 = vmatpush1.msra.mxu0 0.0
        %908 = vmatprep.subr.mxu0 0.0
        %909 = vmatpush1.msra.mxu0 0.0
        %910 = vmatprep.subr.mxu0 0.0
        %911 = vmatpush1.msra.mxu0 0.0
        %912 = vmatprep.subr.mxu0 0.0
        %913 = vmatpush1.msra.mxu0 0.0
        %914 = vmatprep.subr.mxu0 0.0
        %915 = vmatpush1.msra.mxu0 0.0
        %916 = vmatprep.subr.mxu0 0.0
        %917 = vmatpush1.msra.mxu0 0.0
        %918 = vmatprep.subr.mxu0 0.0
        %919 = vmatpush1.msra.mxu0 0.0
        %920 = vmatprep.subr.mxu0 0.0
        %921 = vmatpush1.msra.mxu0 0.0
        %922 = vmatprep.subr.mxu0 0.0
        %923 = vmatpush1.msra.mxu0 0.0
        %924 = vmatprep.subr.mxu0 0.0
        %925 = vmatpush1.msra.mxu0 0.0
        %926 = vmatprep.subr.mxu0 0.0
        %927 = vmatpush1.msra.mxu0 0.0
        %928 = vmatprep.subr.mxu0 0.0
        %929 = vmatpush1.msra.mxu0 0.0
        %930 = vmatprep.mubr.f32.mxu0 0.0
        %931 = vmatmul.mubr.f32.gmra.mrb[0].mxu0 %v677
        %v932 = vpop.f32.mrb[0].mxu0
        %v933 = vadd.f32 %v864, %v932
        %v934 = vpop.f32.mrb[0].mxu0
        %935 = vmatprep.mubr.f32.mxu0 0.0
        %936 = vmatmul.mubr.f32.gmra.mrb[0].mxu0 %v680
        %v937 = vpop.f32.mrb[0].mxu0
        %v938 = vadd.f32 %v864, %v937
        %v939 = vpop.f32.mrb[0].mxu0
        %940 = vdwg.mxu0
        %v941 = vlaneseq
        %v942 = vand.u32 %v941, 127
        %vm943 = vcmp.lt.s32.totalorder %v942, 10
        %v944 = vsel %vm943, 0.0, -1e+30
        %vm945 = vcmask 64512
        %v947 = vsel %vm945, %v749, 0
        %v950 = vsel %vm945, %v754, 0
        %v953 = vsel %vm945, %v843, 0
        %v956 = vsel %vm945, %v848, 0
        %958 = vmatprep.subr.mxu0 0.0
        %959 = vmatpush1.xpose.msra.mxu0 %v953
        %960 = vmatprep.subr.mxu0 0.0
        %961 = vmatpush1.xpose.msra.mxu0 %v956
        %962 = vmatprep.subr.mxu0 0.0
        %963 = vmatpush1.xpose.msra.mxu0 0.0
        %964 = vmatprep.subr.mxu0 0.0
        %965 = vmatpush1.xpose.msra.mxu0 0.0
        %966 = vmatprep.subr.mxu0 0.0
        %967 = vmatpush1.xpose.msra.mxu0 0.0
        %968 = vmatprep.subr.mxu0 0.0
        %969 = vmatpush1.xpose.msra.mxu0 0.0
        %970 = vmatprep.subr.mxu0 0.0
        %971 = vmatpush1.xpose.msra.mxu0 0.0
        %972 = vmatprep.subr.mxu0 0.0
        %973 = vmatpush1.xpose.msra.mxu0 0.0
        %974 = vmatprep.subr.mxu0 0.0
        %975 = vmatpush1.xpose.msra.mxu0 0.0
        %976 = vmatprep.subr.mxu0 0.0
        %977 = vmatpush1.xpose.msra.mxu0 0.0
        %978 = vmatprep.subr.mxu0 0.0
        %979 = vmatpush1.xpose.msra.mxu0 0.0
        %980 = vmatprep.subr.mxu0 0.0
        %981 = vmatpush1.xpose.msra.mxu0 0.0
        %982 = vmatprep.subr.mxu0 0.0
        %983 = vmatpush1.xpose.msra.mxu0 0.0
        %984 = vmatprep.subr.mxu0 0.0
        %985 = vmatpush1.xpose.msra.mxu0 0.0
        %986 = vmatprep.subr.mxu0 0.0
        %987 = vmatpush1.xpose.msra.mxu0 0.0
        %988 = vmatprep.subr.mxu0 0.0
        %989 = vmatpush1.xpose.msra.mxu0 0.0
        %990 = vmatprep.subr.mxu0 0.0
        %991 = vmatpush1.xpose.msra.mxu0 0.0
        %992 = vmatprep.subr.mxu0 0.0
        %993 = vmatpush1.xpose.msra.mxu0 0.0
        %994 = vmatprep.subr.mxu0 0.0
        %995 = vmatpush1.xpose.msra.mxu0 0.0
        %996 = vmatprep.subr.mxu0 0.0
        %997 = vmatpush1.xpose.msra.mxu0 0.0
        %998 = vmatprep.subr.mxu0 0.0
        %999 = vmatpush1.xpose.msra.mxu0 0.0
        %1000 = vmatprep.subr.mxu0 0.0
        %1001 = vmatpush1.xpose.msra.mxu0 0.0
        %1002 = vmatprep.subr.mxu0 0.0
        %1003 = vmatpush1.xpose.msra.mxu0 0.0
        %1004 = vmatprep.subr.mxu0 0.0
        %1005 = vmatpush1.xpose.msra.mxu0 0.0
        %1006 = vmatprep.subr.mxu0 0.0
        %1007 = vmatpush1.xpose.msra.mxu0 0.0
        %1008 = vmatprep.subr.mxu0 0.0
        %1009 = vmatpush1.xpose.msra.mxu0 0.0
        %1010 = vmatprep.subr.mxu0 0.0
        %1011 = vmatpush1.xpose.msra.mxu0 0.0
        %1012 = vmatprep.subr.mxu0 0.0
        %1013 = vmatpush1.xpose.msra.mxu0 0.0
        %1014 = vmatprep.subr.mxu0 0.0
        %1015 = vmatpush1.xpose.msra.mxu0 0.0
        %1016 = vmatprep.subr.mxu0 0.0
        %1017 = vmatpush1.xpose.msra.mxu0 0.0
        %1018 = vmatprep.subr.mxu0 0.0
        %1019 = vmatpush1.xpose.msra.mxu0 0.0
        %1020 = vmatprep.subr.mxu0 0.0
        %1021 = vmatpush1.xpose.msra.mxu0 0.0
        %1022 = vmatprep.mubr.f32.mxu0 0.0
        %1023 = vmatmul.mubr.f32.gmra.mrb[0].mxu0 %v947
        %v1024 = vpop.f32.mrb[0].mxu0
        %v1025 = vadd.f32 %v944, %v1024
        %v1026 = vpop.f32.mrb[0].mxu0
        %1027 = vmatprep.mubr.f32.mxu0 0.0
        %1028 = vmatmul.mubr.f32.gmra.mrb[0].mxu0 %v950
        %v1029 = vpop.f32.mrb[0].mxu0
        %v1030 = vadd.f32 %v944, %v1029
        %v1031 = vpop.f32.mrb[0].mxu0
        %1032 = vdwg.mxu0
        %vm1033 = vcmask 130048
        %v1034 = vsel %vm1033, %v1025, -inf
        %1035 = vmax.xlane.f32.xlu0 %v1034
        %v1036 = vpop.xlane.xlu0 %1035
        %v1037 = vsel %vm1033, %v1030, -inf
        %1038 = vmax.xlane.f32.xlu0 %v1037
        %v1039 = vpop.xlane.xlu0 %1038
        %v1040 = vsub.f32 %v1025, %v1036
        %v1041 = vsub.f32 %v1030, %v1039
        %v1042 = vmul.f32 %v1040, 1.442695
        %v1043 = vpow.pop %v1042
        %v1044 = vmul.f32 %v1041, 1.442695
        %v1045 = vpow.pop %v1044
        %v1046 = vsel %vm1033, %v1043, 0.0
        %1047 = vadd.xlane.f32.xlu0 %v1046
        %v1048 = vpop.xlane.xlu0 %1047
        %v1049 = vsel %vm1033, %v1045, 0.0
        %1050 = vadd.xlane.f32.xlu0 %v1049
        %v1051 = vpop.xlane.xlu0 %1050
        %v1052 = vrcp.pop %v1048
        %v1053 = vrcp.pop %v1051
        %v1054 = vmul.f32 %v1043, %v1052
        %v1055 = vmul.f32 %v1045, %v1053
        %v1057 = vsel %vm1033, %v1054, 0
        %v1060 = vsel %vm1033, %v1055, 0
        %1062 = vmatprep.subr.mxu0 0.0
        %1063 = vmatpush1.msra.mxu0 %v933
        %1064 = vmatprep.subr.mxu0 0.0
        %1065 = vmatpush1.msra.mxu0 %v938
        %1066 = vmatprep.subr.mxu0 0.0
        %1067 = vmatpush1.msra.mxu0 0.0
        %1068 = vmatprep.subr.mxu0 0.0
        %1069 = vmatpush1.msra.mxu0 0.0
        %1070 = vmatprep.subr.mxu0 0.0
        %1071 = vmatpush1.msra.mxu0 0.0
        %1072 = vmatprep.subr.mxu0 0.0
        %1073 = vmatpush1.msra.mxu0 0.0
        %1074 = vmatprep.subr.mxu0 0.0
        %1075 = vmatpush1.msra.mxu0 0.0
        %1076 = vmatprep.subr.mxu0 0.0
        %1077 = vmatpush1.msra.mxu0 0.0
        %1078 = vmatprep.subr.mxu0 0.0
        %1079 = vmatpush1.msra.mxu0 0.0
        %1080 = vmatprep.subr.mxu0 0.0
        %1081 = vmatpush1.msra.mxu0 0.0
        %1082 = vmatprep.subr.mxu0 0.0
        %1083 = vmatpush1.msra.mxu0 0.0
        %1084 = vmatprep.subr.mxu0 0.0
        %1085 = vmatpush1.msra.mxu0 0.0
        %1086 = vmatprep.subr.mxu0 0.0
        %1087 = vmatpush1.msra.mxu0 0.0
        %1088 = vmatprep.subr.mxu0 0.0
        %1089 = vmatpush1.msra.mxu0 0.0
        %1090 = vmatprep.subr.mxu0 0.0
        %1091 = vmatpush1.msra.mxu0 0.0
        %1092 = vmatprep.subr.mxu0 0.0
        %1093 = vmatpush1.msra.mxu0 0.0
        %1094 = vmatprep.subr.mxu0 0.0
        %1095 = vmatpush1.msra.mxu0 0.0
        %1096 = vmatprep.subr.mxu0 0.0
        %1097 = vmatpush1.msra.mxu0 0.0
        %1098 = vmatprep.subr.mxu0 0.0
        %1099 = vmatpush1.msra.mxu0 0.0
        %1100 = vmatprep.subr.mxu0 0.0
        %1101 = vmatpush1.msra.mxu0 0.0
        %1102 = vmatprep.subr.mxu0 0.0
        %1103 = vmatpush1.msra.mxu0 0.0
        %1104 = vmatprep.subr.mxu0 0.0
        %1105 = vmatpush1.msra.mxu0 0.0
        %1106 = vmatprep.subr.mxu0 0.0
        %1107 = vmatpush1.msra.mxu0 0.0
        %1108 = vmatprep.subr.mxu0 0.0
        %1109 = vmatpush1.msra.mxu0 0.0
        %1110 = vmatprep.subr.mxu0 0.0
        %1111 = vmatpush1.msra.mxu0 0.0
        %1112 = vmatprep.subr.mxu0 0.0
        %1113 = vmatpush1.msra.mxu0 0.0
        %1114 = vmatprep.subr.mxu0 0.0
        %1115 = vmatpush1.msra.mxu0 0.0
        %1116 = vmatprep.subr.mxu0 0.0
        %1117 = vmatpush1.msra.mxu0 0.0
        %1118 = vmatprep.subr.mxu0 0.0
        %1119 = vmatpush1.msra.mxu0 0.0
        %1120 = vmatprep.subr.mxu0 0.0
        %1121 = vmatpush1.msra.mxu0 0.0
        %1122 = vmatprep.subr.mxu0 0.0
        %1123 = vmatpush1.msra.mxu0 0.0
        %1124 = vmatprep.subr.mxu0 0.0
        %1125 = vmatpush1.msra.mxu0 0.0
        %1126 = vmatprep.mubr.f32.mxu0 0.0
        %1127 = vmatmul.mubr.f32.gmra.mrb[0].mxu0 %v1057
        %v1128 = vpop.f32.mrb[0].mxu0
        %v1129 = vadd.f32 0.0, %v1128
        %v1130 = vpop.f32.mrb[0].mxu0
        %1131 = vmatprep.mubr.f32.mxu0 0.0
        %1132 = vmatmul.mubr.f32.gmra.mrb[0].mxu0 %v1060
        %v1133 = vpop.f32.mrb[0].mxu0
        %v1134 = vadd.f32 0.0, %v1133
        %v1135 = vpop.f32.mrb[0].mxu0
        %1136 = vdwg.mxu0
        %v1137 = vld [vmem:[#allocation11] sm:$0xff]
        %1138 = vrot.lane.b32.xlu0 %v749, 120
        %v1139 = vpop.permute.xlu0 %1138
        %1140 = vrot.lane.b32.xlu0 %v754, 120
        %v1141 = vpop.permute.xlu0 %1140
        %1142 = vrot.lane.b32.xlu0 %v843, 120
        %v1143 = vpop.permute.xlu0 %1142
        %1144 = vrot.lane.b32.xlu0 %v848, 120
        %v1145 = vpop.permute.xlu0 %1144
        %v1146 = vsel %vm945, %v1139, 0
        %v1148 = vsel %vm945, %v1141, 0
        %v1150 = vsel %vm945, %v1143, 0
        %v1152 = vsel %vm945, %v1145, 0
        %1154 = vmatprep.subr.mxu0 0.0
        %1155 = vmatpush1.xpose.msra.mxu0 %v1150
        %1156 = vmatprep.subr.mxu0 0.0
        %1157 = vmatpush1.xpose.msra.mxu0 %v1152
        %1158 = vmatprep.subr.mxu0 0.0
        %1159 = vmatpush1.xpose.msra.mxu0 0.0
        %1160 = vmatprep.subr.mxu0 0.0
        %1161 = vmatpush1.xpose.msra.mxu0 0.0
        %1162 = vmatprep.subr.mxu0 0.0
        %1163 = vmatpush1.xpose.msra.mxu0 0.0
        %1164 = vmatprep.subr.mxu0 0.0
        %1165 = vmatpush1.xpose.msra.mxu0 0.0
        %1166 = vmatprep.subr.mxu0 0.0
        %1167 = vmatpush1.xpose.msra.mxu0 0.0
        %1168 = vmatprep.subr.mxu0 0.0
        %1169 = vmatpush1.xpose.msra.mxu0 0.0
        %1170 = vmatprep.subr.mxu0 0.0
        %1171 = vmatpush1.xpose.msra.mxu0 0.0
        %1172 = vmatprep.subr.mxu0 0.0
        %1173 = vmatpush1.xpose.msra.mxu0 0.0
        %1174 = vmatprep.subr.mxu0 0.0
        %1175 = vmatpush1.xpose.msra.mxu0 0.0
        %1176 = vmatprep.subr.mxu0 0.0
        %1177 = vmatpush1.xpose.msra.mxu0 0.0
        %1178 = vmatprep.subr.mxu0 0.0
        %1179 = vmatpush1.xpose.msra.mxu0 0.0
        %1180 = vmatprep.subr.mxu0 0.0
        %1181 = vmatpush1.xpose.msra.mxu0 0.0
        %1182 = vmatprep.subr.mxu0 0.0
        %1183 = vmatpush1.xpose.msra.mxu0 0.0
        %1184 = vmatprep.subr.mxu0 0.0
        %1185 = vmatpush1.xpose.msra.mxu0 0.0
        %1186 = vmatprep.subr.mxu0 0.0
        %1187 = vmatpush1.xpose.msra.mxu0 0.0
        %1188 = vmatprep.subr.mxu0 0.0
        %1189 = vmatpush1.xpose.msra.mxu0 0.0
        %1190 = vmatprep.subr.mxu0 0.0
        %1191 = vmatpush1.xpose.msra.mxu0 0.0
        %1192 = vmatprep.subr.mxu0 0.0
        %1193 = vmatpush1.xpose.msra.mxu0 0.0
        %1194 = vmatprep.subr.mxu0 0.0
        %1195 = vmatpush1.xpose.msra.mxu0 0.0
        %1196 = vmatprep.subr.mxu0 0.0
        %1197 = vmatpush1.xpose.msra.mxu0 0.0
        %1198 = vmatprep.subr.mxu0 0.0
        %1199 = vmatpush1.xpose.msra.mxu0 0.0
        %1200 = vmatprep.subr.mxu0 0.0
        %1201 = vmatpush1.xpose.msra.mxu0 0.0
        %1202 = vmatprep.subr.mxu0 0.0
        %1203 = vmatpush1.xpose.msra.mxu0 0.0
        %1204 = vmatprep.subr.mxu0 0.0
        %1205 = vmatpush1.xpose.msra.mxu0 0.0
        %1206 = vmatprep.subr.mxu0 0.0
        %1207 = vmatpush1.xpose.msra.mxu0 0.0
        %1208 = vmatprep.subr.mxu0 0.0
        %1209 = vmatpush1.xpose.msra.mxu0 0.0
        %1210 = vmatprep.subr.mxu0 0.0
        %1211 = vmatpush1.xpose.msra.mxu0 0.0
        %1212 = vmatprep.subr.mxu0 0.0
        %1213 = vmatpush1.xpose.msra.mxu0 0.0
        %1214 = vmatprep.subr.mxu0 0.0
        %1215 = vmatpush1.xpose.msra.mxu0 0.0
        %1216 = vmatprep.subr.mxu0 0.0
        %1217 = vmatpush1.xpose.msra.mxu0 0.0
        %1218 = vmatprep.mubr.f32.mxu0 0.0
        %1219 = vmatmul.mubr.f32.gmra.mrb[0].mxu0 %v1146
        %v1220 = vpop.f32.mrb[0].mxu0
        %v1221 = vadd.f32 %v944, %v1220
        %v1222 = vpop.f32.mrb[0].mxu0
        %1223 = vmatprep.mubr.f32.mxu0 0.0
        %1224 = vmatmul.mubr.f32.gmra.mrb[0].mxu0 %v1148
        %v1225 = vpop.f32.mrb[0].mxu0
        %v1226 = vadd.f32 %v944, %v1225
        %v1227 = vpop.f32.mrb[0].mxu0
        %1228 = vdwg.mxu0
        %v1229 = vsel %vm1033, %v1221, -inf
        %1230 = vmax.xlane.f32.xlu0 %v1229
        %v1231 = vpop.xlane.xlu0 %1230
        %v1232 = vsel %vm1033, %v1226, -inf
        %1233 = vmax.xlane.f32.xlu0 %v1232
        %v1234 = vpop.xlane.xlu0 %1233
        %v1235 = vsub.f32 %v1221, %v1231
        %v1236 = vsub.f32 %v1226, %v1234
        %v1237 = vmul.f32 %v1235, 1.442695
        %v1238 = vpow.pop %v1237
        %v1239 = vmul.f32 %v1236, 1.442695
        %v1240 = vpow.pop %v1239
        %v1241 = vsel %vm1033, %v1238, 0.0
        %1242 = vadd.xlane.f32.xlu0 %v1241
        %v1243 = vpop.xlane.xlu0 %1242
        %v1244 = vsel %vm1033, %v1240, 0.0
        %1245 = vadd.xlane.f32.xlu0 %v1244
        %v1246 = vpop.xlane.xlu0 %1245
        %v1247 = vrcp.pop %v1243
        %v1248 = vrcp.pop %v1246
        %v1249 = vmul.f32 %v1238, %v1247
        %v1250 = vmul.f32 %v1240, %v1248
        %1253 = vrot.lane.b32.xlu0 %v933, 120
        %v1254 = vpop.permute.xlu0 %1253
        %1255 = vrot.lane.b32.xlu0 %v938, 120
        %v1256 = vpop.permute.xlu0 %1255
        %v1260 = vsel %vm1033, %v1249, 0
        %v1263 = vsel %vm1033, %v1250, 0
        %1265 = vmatprep.subr.mxu0 0.0
        %1266 = vmatpush1.msra.mxu0 %v1254
        %1267 = vmatprep.subr.mxu0 0.0
        %1268 = vmatpush1.msra.mxu0 %v1256
        %1269 = vmatprep.subr.mxu0 0.0
        %1270 = vmatpush1.msra.mxu0 0.0
        %1271 = vmatprep.subr.mxu0 0.0
        %1272 = vmatpush1.msra.mxu0 0.0
        %1273 = vmatprep.subr.mxu0 0.0
        %1274 = vmatpush1.msra.mxu0 0.0
        %1275 = vmatprep.subr.mxu0 0.0
        %1276 = vmatpush1.msra.mxu0 0.0
        %1277 = vmatprep.subr.mxu0 0.0
        %1278 = vmatpush1.msra.mxu0 0.0
        %1279 = vmatprep.subr.mxu0 0.0
        %1280 = vmatpush1.msra.mxu0 0.0
        %1281 = vmatprep.subr.mxu0 0.0
        %1282 = vmatpush1.msra.mxu0 0.0
        %1283 = vmatprep.subr.mxu0 0.0
        %1284 = vmatpush1.msra.mxu0 0.0
        %1285 = vmatprep.subr.mxu0 0.0
        %1286 = vmatpush1.msra.mxu0 0.0
        %1287 = vmatprep.subr.mxu0 0.0
        %1288 = vmatpush1.msra.mxu0 0.0
        %1289 = vmatprep.subr.mxu0 0.0
        %1290 = vmatpush1.msra.mxu0 0.0
        %1291 = vmatprep.subr.mxu0 0.0
        %1292 = vmatpush1.msra.mxu0 0.0
        %1293 = vmatprep.subr.mxu0 0.0
        %1294 = vmatpush1.msra.mxu0 0.0
        %1295 = vmatprep.subr.mxu0 0.0
        %1296 = vmatpush1.msra.mxu0 0.0
        %1297 = vmatprep.subr.mxu0 0.0
        %1298 = vmatpush1.msra.mxu0 0.0
        %1299 = vmatprep.subr.mxu0 0.0
        %1300 = vmatpush1.msra.mxu0 0.0
        %1301 = vmatprep.subr.mxu0 0.0
        %1302 = vmatpush1.msra.mxu0 0.0
        %1303 = vmatprep.subr.mxu0 0.0
        %1304 = vmatpush1.msra.mxu0 0.0
        %1305 = vmatprep.subr.mxu0 0.0
        %1306 = vmatpush1.msra.mxu0 0.0
        %1307 = vmatprep.subr.mxu0 0.0
        %1308 = vmatpush1.msra.mxu0 0.0
        %1309 = vmatprep.subr.mxu0 0.0
        %1310 = vmatpush1.msra.mxu0 0.0
        %1311 = vmatprep.subr.mxu0 0.0
        %1312 = vmatpush1.msra.mxu0 0.0
        %1313 = vmatprep.subr.mxu0 0.0
        %1314 = vmatpush1.msra.mxu0 0.0
        %1315 = vmatprep.subr.mxu0 0.0
        %1316 = vmatpush1.msra.mxu0 0.0
        %1317 = vmatprep.subr.mxu0 0.0
        %1318 = vmatpush1.msra.mxu0 0.0
        %1319 = vmatprep.subr.mxu0 0.0
        %1320 = vmatpush1.msra.mxu0 0.0
        %1321 = vmatprep.subr.mxu0 0.0
        %1322 = vmatpush1.msra.mxu0 0.0
        %1323 = vmatprep.subr.mxu0 0.0
        %1324 = vmatpush1.msra.mxu0 0.0
        %1325 = vmatprep.subr.mxu0 0.0
        %1326 = vmatpush1.msra.mxu0 0.0
        %1327 = vmatprep.subr.mxu0 0.0
        %1328 = vmatpush1.msra.mxu0 0.0
        %1329 = vmatprep.mubr.f32.mxu0 0.0
        %1330 = vmatmul.mubr.f32.gmra.mrb[0].mxu0 %v1260
        %v1331 = vpop.f32.mrb[0].mxu0
        %v1332 = vadd.f32 0.0, %v1331
        %v1333 = vpop.f32.mrb[0].mxu0
        %1334 = vmatprep.mubr.f32.mxu0 0.0
        %1335 = vmatmul.mubr.f32.gmra.mrb[0].mxu0 %v1263
        %v1336 = vpop.f32.mrb[0].mxu0
        %v1337 = vadd.f32 0.0, %v1336
        %v1338 = vpop.f32.mrb[0].mxu0
        %1339 = vdwg.mxu0
        %v1340 = vld [vmem:[#allocation11 + $0x8] sm:$0xff]
        %v1342 = vsel %vm945, %v1332, 0
        %v1345 = vsel %vm945, %v1337, 0
        %1347 = vmatprep.subr.mxu0 0.0
        %1348 = vmatpush1.msra.mxu0 %v1340
        %1349 = vmatprep.subr.mxu0 0.0
        %1350 = vmatpush1.msra.mxu0 0.0
        %1351 = vmatprep.subr.mxu0 0.0
        %1352 = vmatpush1.msra.mxu0 0.0
        %1353 = vmatprep.subr.mxu0 0.0
        %1354 = vmatpush1.msra.mxu0 0.0
        %1355 = vmatprep.subr.mxu0 0.0
        %1356 = vmatpush1.msra.mxu0 0.0
        %1357 = vmatprep.subr.mxu0 0.0
        %1358 = vmatpush1.msra.mxu0 0.0
        %1359 = vmatprep.subr.mxu0 0.0
        %1360 = vmatpush1.msra.mxu0 0.0
        %1361 = vmatprep.subr.mxu0 0.0
        %1362 = vmatpush1.msra.mxu0 0.0
        %1363 = vmatprep.subr.mxu0 0.0
        %1364 = vmatpush1.msra.mxu0 0.0
        %1365 = vmatprep.subr.mxu0 0.0
        %1366 = vmatpush1.msra.mxu0 0.0
        %1367 = vmatprep.subr.mxu0 0.0
        %1368 = vmatpush1.msra.mxu0 0.0
        %1369 = vmatprep.subr.mxu0 0.0
        %1370 = vmatpush1.msra.mxu0 0.0
        %1371 = vmatprep.subr.mxu0 0.0
        %1372 = vmatpush1.msra.mxu0 0.0
        %1373 = vmatprep.subr.mxu0 0.0
        %1374 = vmatpush1.msra.mxu0 0.0
        %1375 = vmatprep.subr.mxu0 0.0
        %1376 = vmatpush1.msra.mxu0 0.0
        %1377 = vmatprep.subr.mxu0 0.0
        %1378 = vmatpush1.msra.mxu0 0.0
        %1379 = vmatprep.subr.mxu0 0.0
        %1380 = vmatpush1.msra.mxu0 0.0
        %1381 = vmatprep.subr.mxu0 0.0
        %1382 = vmatpush1.msra.mxu0 0.0
        %1383 = vmatprep.subr.mxu0 0.0
        %1384 = vmatpush1.msra.mxu0 0.0
        %1385 = vmatprep.subr.mxu0 0.0
        %1386 = vmatpush1.msra.mxu0 0.0
        %1387 = vmatprep.subr.mxu0 0.0
        %1388 = vmatpush1.msra.mxu0 0.0
        %1389 = vmatprep.subr.mxu0 0.0
        %1390 = vmatpush1.msra.mxu0 0.0
        %1391 = vmatprep.subr.mxu0 0.0
        %1392 = vmatpush1.msra.mxu0 0.0
        %1393 = vmatprep.subr.mxu0 0.0
        %1394 = vmatpush1.msra.mxu0 0.0
        %1395 = vmatprep.subr.mxu0 0.0
        %1396 = vmatpush1.msra.mxu0 0.0
        %1397 = vmatprep.subr.mxu0 0.0
        %1398 = vmatpush1.msra.mxu0 0.0
        %1399 = vmatprep.subr.mxu0 0.0
        %1400 = vmatpush1.msra.mxu0 0.0
        %1401 = vmatprep.subr.mxu0 0.0
        %1402 = vmatpush1.msra.mxu0 0.0
        %1403 = vmatprep.subr.mxu0 0.0
        %1404 = vmatpush1.msra.mxu0 0.0
        %1405 = vmatprep.subr.mxu0 0.0
        %1406 = vmatpush1.msra.mxu0 0.0
        %1407 = vmatprep.subr.mxu0 0.0
        %1408 = vmatpush1.msra.mxu0 0.0
        %1409 = vmatprep.subr.mxu0 0.0
        %1410 = vmatpush1.msra.mxu0 0.0
        %1411 = vmatprep.mubr.f32.mxu0 0.0
        %1412 = vmatmul.mubr.f32.gmra.mrb[0].mxu0 %v1342
        %v1413 = vpop.f32.mrb[0].mxu0
        %v1414 = vadd.f32 0.0, %v1413
        %v1415 = vpop.f32.mrb[0].mxu0
        %1416 = vmatprep.mubr.f32.mxu0 0.0
        %1417 = vmatmul.mubr.f32.gmra.mrb[0].mxu0 %v1345
        %v1418 = vpop.f32.mrb[0].mxu0
        %v1419 = vadd.f32 0.0, %v1418
        %v1420 = vpop.f32.mrb[0].mxu0
        %1421 = vdwg.mxu0
        %v1423 = vsel %vm945, %v1129, 0
        %v1426 = vsel %vm945, %v1134, 0
        %1428 = vmatprep.subr.mxu0 0.0
        %1429 = vmatpush1.msra.mxu0 %v1137
        %1430 = vmatprep.subr.mxu0 0.0
        %1431 = vmatpush1.msra.mxu0 0.0
        %1432 = vmatprep.subr.mxu0 0.0
        %1433 = vmatpush1.msra.mxu0 0.0
        %1434 = vmatprep.subr.mxu0 0.0
        %1435 = vmatpush1.msra.mxu0 0.0
        %1436 = vmatprep.subr.mxu0 0.0
        %1437 = vmatpush1.msra.mxu0 0.0
        %1438 = vmatprep.subr.mxu0 0.0
        %1439 = vmatpush1.msra.mxu0 0.0
        %1440 = vmatprep.subr.mxu0 0.0
        %1441 = vmatpush1.msra.mxu0 0.0
        %1442 = vmatprep.subr.mxu0 0.0
        %1443 = vmatpush1.msra.mxu0 0.0
        %1444 = vmatprep.subr.mxu0 0.0
        %1445 = vmatpush1.msra.mxu0 0.0
        %1446 = vmatprep.subr.mxu0 0.0
        %1447 = vmatpush1.msra.mxu0 0.0
        %1448 = vmatprep.subr.mxu0 0.0
        %1449 = vmatpush1.msra.mxu0 0.0
        %1450 = vmatprep.subr.mxu0 0.0
        %1451 = vmatpush1.msra.mxu0 0.0
        %1452 = vmatprep.subr.mxu0 0.0
        %1453 = vmatpush1.msra.mxu0 0.0
        %1454 = vmatprep.subr.mxu0 0.0
        %1455 = vmatpush1.msra.mxu0 0.0
        %1456 = vmatprep.subr.mxu0 0.0
        %1457 = vmatpush1.msra.mxu0 0.0
        %1458 = vmatprep.subr.mxu0 0.0
        %1459 = vmatpush1.msra.mxu0 0.0
        %1460 = vmatprep.subr.mxu0 0.0
        %1461 = vmatpush1.msra.mxu0 0.0
        %1462 = vmatprep.subr.mxu0 0.0
        %1463 = vmatpush1.msra.mxu0 0.0
        %1464 = vmatprep.subr.mxu0 0.0
        %1465 = vmatpush1.msra.mxu0 0.0
        %1466 = vmatprep.subr.mxu0 0.0
        %1467 = vmatpush1.msra.mxu0 0.0
        %1468 = vmatprep.subr.mxu0 0.0
        %1469 = vmatpush1.msra.mxu0 0.0
        %1470 = vmatprep.subr.mxu0 0.0
        %1471 = vmatpush1.msra.mxu0 0.0
        %1472 = vmatprep.subr.mxu0 0.0
        %1473 = vmatpush1.msra.mxu0 0.0
        %1474 = vmatprep.subr.mxu0 0.0
        %1475 = vmatpush1.msra.mxu0 0.0
        %1476 = vmatprep.subr.mxu0 0.0
        %1477 = vmatpush1.msra.mxu0 0.0
        %1478 = vmatprep.subr.mxu0 0.0
        %1479 = vmatpush1.msra.mxu0 0.0
        %1480 = vmatprep.subr.mxu0 0.0
        %1481 = vmatpush1.msra.mxu0 0.0
        %1482 = vmatprep.subr.mxu0 0.0
        %1483 = vmatpush1.msra.mxu0 0.0
        %1484 = vmatprep.subr.mxu0 0.0
        %1485 = vmatpush1.msra.mxu0 0.0
        %1486 = vmatprep.subr.mxu0 0.0
        %1487 = vmatpush1.msra.mxu0 0.0
        %1488 = vmatprep.subr.mxu0 0.0
        %1489 = vmatpush1.msra.mxu0 0.0
        %1490 = vmatprep.subr.mxu0 0.0
        %1491 = vmatpush1.msra.mxu0 0.0
        %1492 = vmatprep.mubr.f32.mxu0 0.0
        %1493 = vmatmul.mubr.f32.gmra.mrb[0].mxu0 %v1423
        %v1494 = vpop.f32.mrb[0].mxu0
        %v1495 = vadd.f32 %v1414, %v1494
        %v1496 = vpop.f32.mrb[0].mxu0
        %1497 = vmatprep.mubr.f32.mxu0 0.0
        %1498 = vmatmul.mubr.f32.gmra.mrb[0].mxu0 %v1426
        %v1499 = vpop.f32.mrb[0].mxu0
        %v1500 = vadd.f32 %v1419, %v1499
        %v1501 = vpop.f32.mrb[0].mxu0
        %1502 = vdwg.mxu0
        %1503 = vrot.lane.b32.xlu0 %v749, 112
        %v1504 = vpop.permute.xlu0 %1503
        %1505 = vrot.lane.b32.xlu0 %v754, 112
        %v1506 = vpop.permute.xlu0 %1505
        %1507 = vrot.lane.b32.xlu0 %v843, 112
        %v1508 = vpop.permute.xlu0 %1507
        %1509 = vrot.lane.b32.xlu0 %v848, 112
        %v1510 = vpop.permute.xlu0 %1509
        %v1511 = vsel %vm945, %v1504, 0
        %v1513 = vsel %vm945, %v1506, 0
        %v1515 = vsel %vm945, %v1508, 0
        %v1517 = vsel %vm945, %v1510, 0
        %1519 = vmatprep.subr.mxu0 0.0
        %1520 = vmatpush1.xpose.msra.mxu0 %v1515
        %1521 = vmatprep.subr.mxu0 0.0
        %1522 = vmatpush1.xpose.msra.mxu0 %v1517
        %1523 = vmatprep.subr.mxu0 0.0
        %1524 = vmatpush1.xpose.msra.mxu0 0.0
        %1525 = vmatprep.subr.mxu0 0.0
        %1526 = vmatpush1.xpose.msra.mxu0 0.0
        %1527 = vmatprep.subr.mxu0 0.0
        %1528 = vmatpush1.xpose.msra.mxu0 0.0
        %1529 = vmatprep.subr.mxu0 0.0
        %1530 = vmatpush1.xpose.msra.mxu0 0.0
        %1531 = vmatprep.subr.mxu0 0.0
        %1532 = vmatpush1.xpose.msra.mxu0 0.0
        %1533 = vmatprep.subr.mxu0 0.0
        %1534 = vmatpush1.xpose.msra.mxu0 0.0
        %1535 = vmatprep.subr.mxu0 0.0
        %1536 = vmatpush1.xpose.msra.mxu0 0.0
        %1537 = vmatprep.subr.mxu0 0.0
        %1538 = vmatpush1.xpose.msra.mxu0 0.0
        %1539 = vmatprep.subr.mxu0 0.0
        %1540 = vmatpush1.xpose.msra.mxu0 0.0
        %1541 = vmatprep.subr.mxu0 0.0
        %1542 = vmatpush1.xpose.msra.mxu0 0.0
        %1543 = vmatprep.subr.mxu0 0.0
        %1544 = vmatpush1.xpose.msra.mxu0 0.0
        %1545 = vmatprep.subr.mxu0 0.0
        %1546 = vmatpush1.xpose.msra.mxu0 0.0
        %1547 = vmatprep.subr.mxu0 0.0
        %1548 = vmatpush1.xpose.msra.mxu0 0.0
        %1549 = vmatprep.subr.mxu0 0.0
        %1550 = vmatpush1.xpose.msra.mxu0 0.0
        %1551 = vmatprep.subr.mxu0 0.0
        %1552 = vmatpush1.xpose.msra.mxu0 0.0
        %1553 = vmatprep.subr.mxu0 0.0
        %1554 = vmatpush1.xpose.msra.mxu0 0.0
        %1555 = vmatprep.subr.mxu0 0.0
        %1556 = vmatpush1.xpose.msra.mxu0 0.0
        %1557 = vmatprep.subr.mxu0 0.0
        %1558 = vmatpush1.xpose.msra.mxu0 0.0
        %1559 = vmatprep.subr.mxu0 0.0
        %1560 = vmatpush1.xpose.msra.mxu0 0.0
        %1561 = vmatprep.subr.mxu0 0.0
        %1562 = vmatpush1.xpose.msra.mxu0 0.0
        %1563 = vmatprep.subr.mxu0 0.0
        %1564 = vmatpush1.xpose.msra.mxu0 0.0
        %1565 = vmatprep.subr.mxu0 0.0
        %1566 = vmatpush1.xpose.msra.mxu0 0.0
        %1567 = vmatprep.subr.mxu0 0.0
        %1568 = vmatpush1.xpose.msra.mxu0 0.0
        %1569 = vmatprep.subr.mxu0 0.0
        %1570 = vmatpush1.xpose.msra.mxu0 0.0
        %1571 = vmatprep.subr.mxu0 0.0
        %1572 = vmatpush1.xpose.msra.mxu0 0.0
        %1573 = vmatprep.subr.mxu0 0.0
        %1574 = vmatpush1.xpose.msra.mxu0 0.0
        %1575 = vmatprep.subr.mxu0 0.0
        %1576 = vmatpush1.xpose.msra.mxu0 0.0
        %1577 = vmatprep.subr.mxu0 0.0
        %1578 = vmatpush1.xpose.msra.mxu0 0.0
        %1579 = vmatprep.subr.mxu0 0.0
        %1580 = vmatpush1.xpose.msra.mxu0 0.0
        %1581 = vmatprep.subr.mxu0 0.0
        %1582 = vmatpush1.xpose.msra.mxu0 0.0
        %1583 = vmatprep.mubr.f32.mxu0 0.0
        %1584 = vmatmul.mubr.f32.gmra.mrb[0].mxu0 %v1511
        %v1585 = vpop.f32.mrb[0].mxu0
        %v1586 = vadd.f32 %v944, %v1585
        %v1587 = vpop.f32.mrb[0].mxu0
        %1588 = vmatprep.mubr.f32.mxu0 0.0
        %1589 = vmatmul.mubr.f32.gmra.mrb[0].mxu0 %v1513
        %v1590 = vpop.f32.mrb[0].mxu0
        %v1591 = vadd.f32 %v944, %v1590
        %v1592 = vpop.f32.mrb[0].mxu0
        %1593 = vdwg.mxu0
        %v1594 = vsel %vm1033, %v1586, -inf
        %1595 = vmax.xlane.f32.xlu0 %v1594
        %v1596 = vpop.xlane.xlu0 %1595
        %v1597 = vsel %vm1033, %v1591, -inf
        %1598 = vmax.xlane.f32.xlu0 %v1597
        %v1599 = vpop.xlane.xlu0 %1598
        %v1600 = vsub.f32 %v1586, %v1596
        %v1601 = vsub.f32 %v1591, %v1599
        %v1602 = vmul.f32 %v1600, 1.442695
        %v1603 = vpow.pop %v1602
        %v1604 = vmul.f32 %v1601, 1.442695
        %v1605 = vpow.pop %v1604
        %v1606 = vsel %vm1033, %v1603, 0.0
        %1607 = vadd.xlane.f32.xlu0 %v1606
        %v1608 = vpop.xlane.xlu0 %1607
        %v1609 = vsel %vm1033, %v1605, 0.0
        %1610 = vadd.xlane.f32.xlu0 %v1609
        %v1611 = vpop.xlane.xlu0 %1610
        %v1612 = vrcp.pop %v1608
        %v1613 = vrcp.pop %v1611
        %v1614 = vmul.f32 %v1603, %v1612
        %v1615 = vmul.f32 %v1605, %v1613
        %1616 = vrot.lane.b32.xlu0 %v933, 112
        %v1617 = vpop.permute.xlu0 %1616
        %1618 = vrot.lane.b32.xlu0 %v938, 112
        %v1619 = vpop.permute.xlu0 %1618
        %v1623 = vsel %vm1033, %v1614, 0
        %v1626 = vsel %vm1033, %v1615, 0
        %1628 = vmatprep.subr.mxu0 0.0
        %1629 = vmatpush1.msra.mxu0 %v1617
        %1630 = vmatprep.subr.mxu0 0.0
        %1631 = vmatpush1.msra.mxu0 %v1619
        %1632 = vmatprep.subr.mxu0 0.0
        %1633 = vmatpush1.msra.mxu0 0.0
        %1634 = vmatprep.subr.mxu0 0.0
        %1635 = vmatpush1.msra.mxu0 0.0
        %1636 = vmatprep.subr.mxu0 0.0
        %1637 = vmatpush1.msra.mxu0 0.0
        %1638 = vmatprep.subr.mxu0 0.0
        %1639 = vmatpush1.msra.mxu0 0.0
        %1640 = vmatprep.subr.mxu0 0.0
        %1641 = vmatpush1.msra.mxu0 0.0
        %1642 = vmatprep.subr.mxu0 0.0
        %1643 = vmatpush1.msra.mxu0 0.0
        %1644 = vmatprep.subr.mxu0 0.0
        %1645 = vmatpush1.msra.mxu0 0.0
        %1646 = vmatprep.subr.mxu0 0.0
        %1647 = vmatpush1.msra.mxu0 0.0
        %1648 = vmatprep.subr.mxu0 0.0
        %1649 = vmatpush1.msra.mxu0 0.0
        %1650 = vmatprep.subr.mxu0 0.0
        %1651 = vmatpush1.msra.mxu0 0.0
        %1652 = vmatprep.subr.mxu0 0.0
        %1653 = vmatpush1.msra.mxu0 0.0
        %1654 = vmatprep.subr.mxu0 0.0
        %1655 = vmatpush1.msra.mxu0 0.0
        %1656 = vmatprep.subr.mxu0 0.0
        %1657 = vmatpush1.msra.mxu0 0.0
        %1658 = vmatprep.subr.mxu0 0.0
        %1659 = vmatpush1.msra.mxu0 0.0
        %1660 = vmatprep.subr.mxu0 0.0
        %1661 = vmatpush1.msra.mxu0 0.0
        %1662 = vmatprep.subr.mxu0 0.0
        %1663 = vmatpush1.msra.mxu0 0.0
        %1664 = vmatprep.subr.mxu0 0.0
        %1665 = vmatpush1.msra.mxu0 0.0
        %1666 = vmatprep.subr.mxu0 0.0
        %1667 = vmatpush1.msra.mxu0 0.0
        %1668 = vmatprep.subr.mxu0 0.0
        %1669 = vmatpush1.msra.mxu0 0.0
        %1670 = vmatprep.subr.mxu0 0.0
        %1671 = vmatpush1.msra.mxu0 0.0
        %1672 = vmatprep.subr.mxu0 0.0
        %1673 = vmatpush1.msra.mxu0 0.0
        %1674 = vmatprep.subr.mxu0 0.0
        %1675 = vmatpush1.msra.mxu0 0.0
        %1676 = vmatprep.subr.mxu0 0.0
        %1677 = vmatpush1.msra.mxu0 0.0
        %1678 = vmatprep.subr.mxu0 0.0
        %1679 = vmatpush1.msra.mxu0 0.0
        %1680 = vmatprep.subr.mxu0 0.0
        %1681 = vmatpush1.msra.mxu0 0.0
        %1682 = vmatprep.subr.mxu0 0.0
        %1683 = vmatpush1.msra.mxu0 0.0
        %1684 = vmatprep.subr.mxu0 0.0
        %1685 = vmatpush1.msra.mxu0 0.0
        %1686 = vmatprep.subr.mxu0 0.0
        %1687 = vmatpush1.msra.mxu0 0.0
        %1688 = vmatprep.subr.mxu0 0.0
        %1689 = vmatpush1.msra.mxu0 0.0
        %1690 = vmatprep.subr.mxu0 0.0
        %1691 = vmatpush1.msra.mxu0 0.0
        %1692 = vmatprep.mubr.f32.mxu0 0.0
        %1693 = vmatmul.mubr.f32.gmra.mrb[0].mxu0 %v1623
        %v1694 = vpop.f32.mrb[0].mxu0
        %v1695 = vadd.f32 0.0, %v1694
        %v1696 = vpop.f32.mrb[0].mxu0
        %1697 = vmatprep.mubr.f32.mxu0 0.0
        %1698 = vmatmul.mubr.f32.gmra.mrb[0].mxu0 %v1626
        %v1699 = vpop.f32.mrb[0].mxu0
        %v1700 = vadd.f32 0.0, %v1699
        %v1701 = vpop.f32.mrb[0].mxu0
        %1702 = vdwg.mxu0
        %v1703 = vld [vmem:[#allocation11 + $0x10] sm:$0xff]
        %v1705 = vsel %vm945, %v1695, 0
        %v1708 = vsel %vm945, %v1700, 0
        %1710 = vmatprep.subr.mxu0 0.0
        %1711 = vmatpush1.msra.mxu0 %v1703
        %1712 = vmatprep.subr.mxu0 0.0
        %1713 = vmatpush1.msra.mxu0 0.0
        %1714 = vmatprep.subr.mxu0 0.0
        %1715 = vmatpush1.msra.mxu0 0.0
        %1716 = vmatprep.subr.mxu0 0.0
        %1717 = vmatpush1.msra.mxu0 0.0
        %1718 = vmatprep.subr.mxu0 0.0
        %1719 = vmatpush1.msra.mxu0 0.0
        %1720 = vmatprep.subr.mxu0 0.0
        %1721 = vmatpush1.msra.mxu0 0.0
        %1722 = vmatprep.subr.mxu0 0.0
        %1723 = vmatpush1.msra.mxu0 0.0
        %1724 = vmatprep.subr.mxu0 0.0
        %1725 = vmatpush1.msra.mxu0 0.0
        %1726 = vmatprep.subr.mxu0 0.0
        %1727 = vmatpush1.msra.mxu0 0.0
        %1728 = vmatprep.subr.mxu0 0.0
        %1729 = vmatpush1.msra.mxu0 0.0
        %1730 = vmatprep.subr.mxu0 0.0
        %1731 = vmatpush1.msra.mxu0 0.0
        %1732 = vmatprep.subr.mxu0 0.0
        %1733 = vmatpush1.msra.mxu0 0.0
        %1734 = vmatprep.subr.mxu0 0.0
        %1735 = vmatpush1.msra.mxu0 0.0
        %1736 = vmatprep.subr.mxu0 0.0
        %1737 = vmatpush1.msra.mxu0 0.0
        %1738 = vmatprep.subr.mxu0 0.0
        %1739 = vmatpush1.msra.mxu0 0.0
        %1740 = vmatprep.subr.mxu0 0.0
        %1741 = vmatpush1.msra.mxu0 0.0
        %1742 = vmatprep.subr.mxu0 0.0
        %1743 = vmatpush1.msra.mxu0 0.0
        %1744 = vmatprep.subr.mxu0 0.0
        %1745 = vmatpush1.msra.mxu0 0.0
        %1746 = vmatprep.subr.mxu0 0.0
        %1747 = vmatpush1.msra.mxu0 0.0
        %1748 = vmatprep.subr.mxu0 0.0
        %1749 = vmatpush1.msra.mxu0 0.0
        %1750 = vmatprep.subr.mxu0 0.0
        %1751 = vmatpush1.msra.mxu0 0.0
        %1752 = vmatprep.subr.mxu0 0.0
        %1753 = vmatpush1.msra.mxu0 0.0
        %1754 = vmatprep.subr.mxu0 0.0
        %1755 = vmatpush1.msra.mxu0 0.0
        %1756 = vmatprep.subr.mxu0 0.0
        %1757 = vmatpush1.msra.mxu0 0.0
        %1758 = vmatprep.subr.mxu0 0.0
        %1759 = vmatpush1.msra.mxu0 0.0
        %1760 = vmatprep.subr.mxu0 0.0
        %1761 = vmatpush1.msra.mxu0 0.0
        %1762 = vmatprep.subr.mxu0 0.0
        %1763 = vmatpush1.msra.mxu0 0.0
        %1764 = vmatprep.subr.mxu0 0.0
        %1765 = vmatpush1.msra.mxu0 0.0
        %1766 = vmatprep.subr.mxu0 0.0
        %1767 = vmatpush1.msra.mxu0 0.0
        %1768 = vmatprep.subr.mxu0 0.0
        %1769 = vmatpush1.msra.mxu0 0.0
        %1770 = vmatprep.subr.mxu0 0.0
        %1771 = vmatpush1.msra.mxu0 0.0
        %1772 = vmatprep.subr.mxu0 0.0
        %1773 = vmatpush1.msra.mxu0 0.0
        %1774 = vmatprep.mubr.f32.mxu0 0.0
        %1775 = vmatmul.mubr.f32.gmra.mrb[0].mxu0 %v1705
        %v1776 = vpop.f32.mrb[0].mxu0
        %v1777 = vadd.f32 0.0, %v1776
        %v1778 = vpop.f32.mrb[0].mxu0
        %1779 = vmatprep.mubr.f32.mxu0 0.0
        %1780 = vmatmul.mubr.f32.gmra.mrb[0].mxu0 %v1708
        %v1781 = vpop.f32.mrb[0].mxu0
        %v1782 = vadd.f32 0.0, %v1781
        %v1783 = vpop.f32.mrb[0].mxu0
        %1784 = vdwg.mxu0
        %v1785 = vadd.f32 %v1495, %v1777
        %v1786 = vadd.f32 %v1500, %v1782
        %1787 = vrot.lane.b32.xlu0 %v749, 104
        %v1788 = vpop.permute.xlu0 %1787
        %1789 = vrot.lane.b32.xlu0 %v754, 104
        %v1790 = vpop.permute.xlu0 %1789
        %1791 = vrot.lane.b32.xlu0 %v843, 104
        %v1792 = vpop.permute.xlu0 %1791
        %1793 = vrot.lane.b32.xlu0 %v848, 104
        %v1794 = vpop.permute.xlu0 %1793
        %v1795 = vsel %vm945, %v1788, 0
        %v1797 = vsel %vm945, %v1790, 0
        %v1799 = vsel %vm945, %v1792, 0
        %v1801 = vsel %vm945, %v1794, 0
        %1803 = vmatprep.subr.mxu0 0.0
        %1804 = vmatpush1.xpose.msra.mxu0 %v1799
        %1805 = vmatprep.subr.mxu0 0.0
        %1806 = vmatpush1.xpose.msra.mxu0 %v1801
        %1807 = vmatprep.subr.mxu0 0.0
        %1808 = vmatpush1.xpose.msra.mxu0 0.0
        %1809 = vmatprep.subr.mxu0 0.0
        %1810 = vmatpush1.xpose.msra.mxu0 0.0
        %1811 = vmatprep.subr.mxu0 0.0
        %1812 = vmatpush1.xpose.msra.mxu0 0.0
        %1813 = vmatprep.subr.mxu0 0.0
        %1814 = vmatpush1.xpose.msra.mxu0 0.0
        %1815 = vmatprep.subr.mxu0 0.0
        %1816 = vmatpush1.xpose.msra.mxu0 0.0
        %1817 = vmatprep.subr.mxu0 0.0
        %1818 = vmatpush1.xpose.msra.mxu0 0.0
        %1819 = vmatprep.subr.mxu0 0.0
        %1820 = vmatpush1.xpose.msra.mxu0 0.0
        %1821 = vmatprep.subr.mxu0 0.0
        %1822 = vmatpush1.xpose.msra.mxu0 0.0
        %1823 = vmatprep.subr.mxu0 0.0
        %1824 = vmatpush1.xpose.msra.mxu0 0.0
        %1825 = vmatprep.subr.mxu0 0.0
        %1826 = vmatpush1.xpose.msra.mxu0 0.0
        %1827 = vmatprep.subr.mxu0 0.0
        %1828 = vmatpush1.xpose.msra.mxu0 0.0
        %1829 = vmatprep.subr.mxu0 0.0
        %1830 = vmatpush1.xpose.msra.mxu0 0.0
        %1831 = vmatprep.subr.mxu0 0.0
        %1832 = vmatpush1.xpose.msra.mxu0 0.0
        %1833 = vmatprep.subr.mxu0 0.0
        %1834 = vmatpush1.xpose.msra.mxu0 0.0
        %1835 = vmatprep.subr.mxu0 0.0
        %1836 = vmatpush1.xpose.msra.mxu0 0.0
        %1837 = vmatprep.subr.mxu0 0.0
        %1838 = vmatpush1.xpose.msra.mxu0 0.0
        %1839 = vmatprep.subr.mxu0 0.0
        %1840 = vmatpush1.xpose.msra.mxu0 0.0
        %1841 = vmatprep.subr.mxu0 0.0
        %1842 = vmatpush1.xpose.msra.mxu0 0.0
        %1843 = vmatprep.subr.mxu0 0.0
        %1844 = vmatpush1.xpose.msra.mxu0 0.0
        %1845 = vmatprep.subr.mxu0 0.0
        %1846 = vmatpush1.xpose.msra.mxu0 0.0
        %1847 = vmatprep.subr.mxu0 0.0
        %1848 = vmatpush1.xpose.msra.mxu0 0.0
        %1849 = vmatprep.subr.mxu0 0.0
        %1850 = vmatpush1.xpose.msra.mxu0 0.0
        %1851 = vmatprep.subr.mxu0 0.0
        %1852 = vmatpush1.xpose.msra.mxu0 0.0
        %1853 = vmatprep.subr.mxu0 0.0
        %1854 = vmatpush1.xpose.msra.mxu0 0.0
        %1855 = vmatprep.subr.mxu0 0.0
        %1856 = vmatpush1.xpose.msra.mxu0 0.0
        %1857 = vmatprep.subr.mxu0 0.0
        %1858 = vmatpush1.xpose.msra.mxu0 0.0
        %1859 = vmatprep.subr.mxu0 0.0
        %1860 = vmatpush1.xpose.msra.mxu0 0.0
        %1861 = vmatprep.subr.mxu0 0.0
        %1862 = vmatpush1.xpose.msra.mxu0 0.0
        %1863 = vmatprep.subr.mxu0 0.0
        %1864 = vmatpush1.xpose.msra.mxu0 0.0
        %1865 = vmatprep.subr.mxu0 0.0
        %1866 = vmatpush1.xpose.msra.mxu0 0.0
        %1867 = vmatprep.mubr.f32.mxu0 0.0
        %1868 = vmatmul.mubr.f32.gmra.mrb[0].mxu0 %v1795
        %v1869 = vpop.f32.mrb[0].mxu0
        %v1870 = vadd.f32 %v944, %v1869
        %v1871 = vpop.f32.mrb[0].mxu0
        %1872 = vmatprep.mubr.f32.mxu0 0.0
        %1873 = vmatmul.mubr.f32.gmra.mrb[0].mxu0 %v1797
        %v1874 = vpop.f32.mrb[0].mxu0
        %v1875 = vadd.f32 %v944, %v1874
        %v1876 = vpop.f32.mrb[0].mxu0
        %1877 = vdwg.mxu0
        %v1878 = vsel %vm1033, %v1870, -inf
        %1879 = vmax.xlane.f32.xlu0 %v1878
        %v1880 = vpop.xlane.xlu0 %1879
        %v1881 = vsel %vm1033, %v1875, -inf
        %1882 = vmax.xlane.f32.xlu0 %v1881
        %v1883 = vpop.xlane.xlu0 %1882
        %v1884 = vsub.f32 %v1870, %v1880
        %v1885 = vsub.f32 %v1875, %v1883
        %v1886 = vmul.f32 %v1884, 1.442695
        %v1887 = vpow.pop %v1886
        %v1888 = vmul.f32 %v1885, 1.442695
        %v1889 = vpow.pop %v1888
        %v1890 = vsel %vm1033, %v1887, 0.0
        %1891 = vadd.xlane.f32.xlu0 %v1890
        %v1892 = vpop.xlane.xlu0 %1891
        %v1893 = vsel %vm1033, %v1889, 0.0
        %1894 = vadd.xlane.f32.xlu0 %v1893
        %v1895 = vpop.xlane.xlu0 %1894
        %v1896 = vrcp.pop %v1892
        %v1897 = vrcp.pop %v1895
        %v1898 = vmul.f32 %v1887, %v1896
        %v1899 = vmul.f32 %v1889, %v1897
        %1900 = vrot.lane.b32.xlu0 %v933, 104
        %v1901 = vpop.permute.xlu0 %1900
        %1902 = vrot.lane.b32.xlu0 %v938, 104
        %v1903 = vpop.permute.xlu0 %1902
        %v1907 = vsel %vm1033, %v1898, 0
        %v1910 = vsel %vm1033, %v1899, 0
        %1912 = vmatprep.subr.mxu0 0.0
        %1913 = vmatpush1.msra.mxu0 %v1901
        %1914 = vmatprep.subr.mxu0 0.0
        %1915 = vmatpush1.msra.mxu0 %v1903
        %1916 = vmatprep.subr.mxu0 0.0
        %1917 = vmatpush1.msra.mxu0 0.0
        %1918 = vmatprep.subr.mxu0 0.0
        %1919 = vmatpush1.msra.mxu0 0.0
        %1920 = vmatprep.subr.mxu0 0.0
        %1921 = vmatpush1.msra.mxu0 0.0
        %1922 = vmatprep.subr.mxu0 0.0
        %1923 = vmatpush1.msra.mxu0 0.0
        %1924 = vmatprep.subr.mxu0 0.0
        %1925 = vmatpush1.msra.mxu0 0.0
        %1926 = vmatprep.subr.mxu0 0.0
        %1927 = vmatpush1.msra.mxu0 0.0
        %1928 = vmatprep.subr.mxu0 0.0
        %1929 = vmatpush1.msra.mxu0 0.0
        %1930 = vmatprep.subr.mxu0 0.0
        %1931 = vmatpush1.msra.mxu0 0.0
        %1932 = vmatprep.subr.mxu0 0.0
        %1933 = vmatpush1.msra.mxu0 0.0
        %1934 = vmatprep.subr.mxu0 0.0
        %1935 = vmatpush1.msra.mxu0 0.0
        %1936 = vmatprep.subr.mxu0 0.0
        %1937 = vmatpush1.msra.mxu0 0.0
        %1938 = vmatprep.subr.mxu0 0.0
        %1939 = vmatpush1.msra.mxu0 0.0
        %1940 = vmatprep.subr.mxu0 0.0
        %1941 = vmatpush1.msra.mxu0 0.0
        %1942 = vmatprep.subr.mxu0 0.0
        %1943 = vmatpush1.msra.mxu0 0.0
        %1944 = vmatprep.subr.mxu0 0.0
        %1945 = vmatpush1.msra.mxu0 0.0
        %1946 = vmatprep.subr.mxu0 0.0
        %1947 = vmatpush1.msra.mxu0 0.0
        %1948 = vmatprep.subr.mxu0 0.0
        %1949 = vmatpush1.msra.mxu0 0.0
        %1950 = vmatprep.subr.mxu0 0.0
        %1951 = vmatpush1.msra.mxu0 0.0
        %1952 = vmatprep.subr.mxu0 0.0
        %1953 = vmatpush1.msra.mxu0 0.0
        %1954 = vmatprep.subr.mxu0 0.0
        %1955 = vmatpush1.msra.mxu0 0.0
        %1956 = vmatprep.subr.mxu0 0.0
        %1957 = vmatpush1.msra.mxu0 0.0
        %1958 = vmatprep.subr.mxu0 0.0
        %1959 = vmatpush1.msra.mxu0 0.0
        %1960 = vmatprep.subr.mxu0 0.0
        %1961 = vmatpush1.msra.mxu0 0.0
        %1962 = vmatprep.subr.mxu0 0.0
        %1963 = vmatpush1.msra.mxu0 0.0
        %1964 = vmatprep.subr.mxu0 0.0
        %1965 = vmatpush1.msra.mxu0 0.0
        %1966 = vmatprep.subr.mxu0 0.0
        %1967 = vmatpush1.msra.mxu0 0.0
        %1968 = vmatprep.subr.mxu0 0.0
        %1969 = vmatpush1.msra.mxu0 0.0
        %1970 = vmatprep.subr.mxu0 0.0
        %1971 = vmatpush1.msra.mxu0 0.0
        %1972 = vmatprep.subr.mxu0 0.0
        %1973 = vmatpush1.msra.mxu0 0.0
        %1974 = vmatprep.subr.mxu0 0.0
        %1975 = vmatpush1.msra.mxu0 0.0
        %1976 = vmatprep.mubr.f32.mxu0 0.0
        %1977 = vmatmul.mubr.f32.gmra.mrb[0].mxu0 %v1907
        %v1978 = vpop.f32.mrb[0].mxu0
        %v1979 = vadd.f32 0.0, %v1978
        %v1980 = vpop.f32.mrb[0].mxu0
        %1981 = vmatprep.mubr.f32.mxu0 0.0
        %1982 = vmatmul.mubr.f32.gmra.mrb[0].mxu0 %v1910
        %v1983 = vpop.f32.mrb[0].mxu0
        %v1984 = vadd.f32 0.0, %v1983
        %v1985 = vpop.f32.mrb[0].mxu0
        %1986 = vdwg.mxu0
        %v1987 = vld [vmem:[#allocation11 + $0x18] sm:$0xff]
        %v1989 = vsel %vm945, %v1979, 0
        %v1992 = vsel %vm945, %v1984, 0
        %1994 = vmatprep.subr.mxu0 0.0
        %1995 = vmatpush1.msra.mxu0 %v1987
        %1996 = vmatprep.subr.mxu0 0.0
        %1997 = vmatpush1.msra.mxu0 0.0
        %1998 = vmatprep.subr.mxu0 0.0
        %1999 = vmatpush1.msra.mxu0 0.0
        %2000 = vmatprep.subr.mxu0 0.0
        %2001 = vmatpush1.msra.mxu0 0.0
        %2002 = vmatprep.subr.mxu0 0.0
        %2003 = vmatpush1.msra.mxu0 0.0
        %2004 = vmatprep.subr.mxu0 0.0
        %2005 = vmatpush1.msra.mxu0 0.0
        %2006 = vmatprep.subr.mxu0 0.0
        %2007 = vmatpush1.msra.mxu0 0.0
        %2008 = vmatprep.subr.mxu0 0.0
        %2009 = vmatpush1.msra.mxu0 0.0
        %2010 = vmatprep.subr.mxu0 0.0
        %2011 = vmatpush1.msra.mxu0 0.0
        %2012 = vmatprep.subr.mxu0 0.0
        %2013 = vmatpush1.msra.mxu0 0.0
        %2014 = vmatprep.subr.mxu0 0.0
        %2015 = vmatpush1.msra.mxu0 0.0
        %2016 = vmatprep.subr.mxu0 0.0
        %2017 = vmatpush1.msra.mxu0 0.0
        %2018 = vmatprep.subr.mxu0 0.0
        %2019 = vmatpush1.msra.mxu0 0.0
        %2020 = vmatprep.subr.mxu0 0.0
        %2021 = vmatpush1.msra.mxu0 0.0
        %2022 = vmatprep.subr.mxu0 0.0
        %2023 = vmatpush1.msra.mxu0 0.0
        %2024 = vmatprep.subr.mxu0 0.0
        %2025 = vmatpush1.msra.mxu0 0.0
        %2026 = vmatprep.subr.mxu0 0.0
        %2027 = vmatpush1.msra.mxu0 0.0
        %2028 = vmatprep.subr.mxu0 0.0
        %2029 = vmatpush1.msra.mxu0 0.0
        %2030 = vmatprep.subr.mxu0 0.0
        %2031 = vmatpush1.msra.mxu0 0.0
        %2032 = vmatprep.subr.mxu0 0.0
        %2033 = vmatpush1.msra.mxu0 0.0
        %2034 = vmatprep.subr.mxu0 0.0
        %2035 = vmatpush1.msra.mxu0 0.0
        %2036 = vmatprep.subr.mxu0 0.0
        %2037 = vmatpush1.msra.mxu0 0.0
        %2038 = vmatprep.subr.mxu0 0.0
        %2039 = vmatpush1.msra.mxu0 0.0
        %2040 = vmatprep.subr.mxu0 0.0
        %2041 = vmatpush1.msra.mxu0 0.0
        %2042 = vmatprep.subr.mxu0 0.0
        %2043 = vmatpush1.msra.mxu0 0.0
        %2044 = vmatprep.subr.mxu0 0.0
        %2045 = vmatpush1.msra.mxu0 0.0
        %2046 = vmatprep.subr.mxu0 0.0
        %2047 = vmatpush1.msra.mxu0 0.0
        %2048 = vmatprep.subr.mxu0 0.0
        %2049 = vmatpush1.msra.mxu0 0.0
        %2050 = vmatprep.subr.mxu0 0.0
        %2051 = vmatpush1.msra.mxu0 0.0
        %2052 = vmatprep.subr.mxu0 0.0
        %2053 = vmatpush1.msra.mxu0 0.0
        %2054 = vmatprep.subr.mxu0 0.0
        %2055 = vmatpush1.msra.mxu0 0.0
        %2056 = vmatprep.subr.mxu0 0.0
        %2057 = vmatpush1.msra.mxu0 0.0
        %2058 = vmatprep.mubr.f32.mxu0 0.0
        %2059 = vmatmul.mubr.f32.gmra.mrb[0].mxu0 %v1989
        %v2060 = vpop.f32.mrb[0].mxu0
        %v2061 = vadd.f32 0.0, %v2060
        %v2062 = vpop.f32.mrb[0].mxu0
        %2063 = vmatprep.mubr.f32.mxu0 0.0
        %2064 = vmatmul.mubr.f32.gmra.mrb[0].mxu0 %v1992
        %v2065 = vpop.f32.mrb[0].mxu0
        %v2066 = vadd.f32 0.0, %v2065
        %v2067 = vpop.f32.mrb[0].mxu0
        %2068 = vdwg.mxu0
        %v2069 = vadd.f32 %v1785, %v2061
        %v2070 = vadd.f32 %v1786, %v2066
        %v2071 = vld [vmem:[#allocation13] sm:$0x1]
        %v2073 = vlaneseq
        %v2074 = vshrl.u32 %v2073, 7
        %v2075 = vsub.s32 0, %v2074
        %v2076 = vrot.slane %v2071, %v2075
        %v2078 = vadd.f32 %v2069, %v2076
        %v2079 = vadd.f32 %v2070, %v2076
        %v2080 = vadd.f32 %v617, %v2078
        %v2081 = vadd.f32 %v618, %v2079
        %v2082 = vld [vmem:[#allocation14] sm:$0x1]
        %v2083 = vld [vmem:[#allocation16] sm:$0x1]
        %v2084 = vsel %vm621, %v2080, 0.0
        %2085 = vadd.xlane.f32.xlu0 %v2084
        %v2086 = vpop.xlane.xlu0 %2085
        %v2087 = vsel %vm621, %v2081, 0.0
        %2088 = vadd.xlane.f32.xlu0 %v2087
        %v2089 = vpop.xlane.xlu0 %2088
        %v2090 = vmul.f32 %v2086, %v628
        %v2091 = vmul.f32 %v2089, %v628
        %v2092 = vsub.f32 %v2080, %v2090
        %v2093 = vsub.f32 %v2081, %v2091
        %v2094 = vmul.f32 %v2092, %v2092
        %v2095 = vmul.f32 %v2093, %v2093
        %v2096 = vsel %vm621, %v2094, 0.0
        %2097 = vadd.xlane.f32.xlu0 %v2096
        %v2098 = vpop.xlane.xlu0 %2097
        %v2099 = vsel %vm621, %v2095, 0.0
        %2100 = vadd.xlane.f32.xlu0 %v2099
        %v2101 = vpop.xlane.xlu0 %2100
        %v2102 = vmul.f32 %v2098, %v628
        %v2103 = vmul.f32 %v2101, %v628
        %v2104 = vadd.f32 %v2102, 1e-05
        %v2105 = vadd.f32 %v2103, 1e-05
        %v2106 = vrsqrt.pop %v2104
        %v2107 = vrsqrt.pop %v2105
        %v2108 = vmul.f32 %v2092, %v2106
        %v2109 = vmul.f32 %v2093, %v2107
        %v2111 = vlaneseq
        %v2112 = vshrl.u32 %v2111, 7
        %v2113 = vsub.s32 0, %v2112
        %v2114 = vrot.slane %v2082, %v2113
        %v2116 = vmul.f32 %v2108, %v2114
        %v2117 = vmul.f32 %v2109, %v2114
        %v2119 = vlaneseq
        %v2120 = vshrl.u32 %v2119, 7
        %v2121 = vsub.s32 0, %v2120
        %v2122 = vrot.slane %v2083, %v2121
        %v2124 = vadd.f32 %v2116, %v2122
        %v2125 = vadd.f32 %v2117, %v2122
        %v2126 = vld [vmem:[#allocation17] sm:$0xff]
        %v2127 = vld [vmem:[#allocation17 + $0x8] sm:$0xff]
        %v2128 = vld [vmem:[#allocation17 + $0x10] sm:$0xff]
        %v2129 = vld [vmem:[#allocation17 + $0x18] sm:$0xff]
        %v2130 = vld [vmem:[#allocation19] sm:$0x1]
        %v2132 = vlaneseq
        %v2133 = vshrl.u32 %v2132, 7
        %v2134 = vsub.s32 0, %v2133
        %v2135 = vrot.slane %v2130, %v2134
        %v2138 = vsel %vm621, %v2124, 0
        %v2141 = vsel %vm621, %v2125, 0
        %2143 = vmatprep.subr.mxu0 0.0
        %2144 = vmatpush1.msra.mxu0 %v2126
        %2145 = vmatprep.subr.mxu0 0.0
        %2146 = vmatpush1.msra.mxu0 %v2127
        %2147 = vmatprep.subr.mxu0 0.0
        %2148 = vmatpush1.msra.mxu0 %v2128
        %2149 = vmatprep.subr.mxu0 0.0
        %2150 = vmatpush1.msra.mxu0 %v2129
        %2151 = vmatprep.subr.mxu0 0.0
        %2152 = vmatpush1.msra.mxu0 0.0
        %2153 = vmatprep.subr.mxu0 0.0
        %2154 = vmatpush1.msra.mxu0 0.0
        %2155 = vmatprep.subr.mxu0 0.0
        %2156 = vmatpush1.msra.mxu0 0.0
        %2157 = vmatprep.subr.mxu0 0.0
        %2158 = vmatpush1.msra.mxu0 0.0
        %2159 = vmatprep.subr.mxu0 0.0
        %2160 = vmatpush1.msra.mxu0 0.0
        %2161 = vmatprep.subr.mxu0 0.0
        %2162 = vmatpush1.msra.mxu0 0.0
        %2163 = vmatprep.subr.mxu0 0.0
        %2164 = vmatpush1.msra.mxu0 0.0
        %2165 = vmatprep.subr.mxu0 0.0
        %2166 = vmatpush1.msra.mxu0 0.0
        %2167 = vmatprep.subr.mxu0 0.0
        %2168 = vmatpush1.msra.mxu0 0.0
        %2169 = vmatprep.subr.mxu0 0.0
        %2170 = vmatpush1.msra.mxu0 0.0
        %2171 = vmatprep.subr.mxu0 0.0
        %2172 = vmatpush1.msra.mxu0 0.0
        %2173 = vmatprep.subr.mxu0 0.0
        %2174 = vmatpush1.msra.mxu0 0.0
        %2175 = vmatprep.subr.mxu0 0.0
        %2176 = vmatpush1.msra.mxu0 0.0
        %2177 = vmatprep.subr.mxu0 0.0
        %2178 = vmatpush1.msra.mxu0 0.0
        %2179 = vmatprep.subr.mxu0 0.0
        %2180 = vmatpush1.msra.mxu0 0.0
        %2181 = vmatprep.subr.mxu0 0.0
        %2182 = vmatpush1.msra.mxu0 0.0
        %2183 = vmatprep.subr.mxu0 0.0
        %2184 = vmatpush1.msra.mxu0 0.0
        %2185 = vmatprep.subr.mxu0 0.0
        %2186 = vmatpush1.msra.mxu0 0.0
        %2187 = vmatprep.subr.mxu0 0.0
        %2188 = vmatpush1.msra.mxu0 0.0
        %2189 = vmatprep.subr.mxu0 0.0
        %2190 = vmatpush1.msra.mxu0 0.0
        %2191 = vmatprep.subr.mxu0 0.0
        %2192 = vmatpush1.msra.mxu0 0.0
        %2193 = vmatprep.subr.mxu0 0.0
        %2194 = vmatpush1.msra.mxu0 0.0
        %2195 = vmatprep.subr.mxu0 0.0
        %2196 = vmatpush1.msra.mxu0 0.0
        %2197 = vmatprep.subr.mxu0 0.0
        %2198 = vmatpush1.msra.mxu0 0.0
        %2199 = vmatprep.subr.mxu0 0.0
        %2200 = vmatpush1.msra.mxu0 0.0
        %2201 = vmatprep.subr.mxu0 0.0
        %2202 = vmatpush1.msra.mxu0 0.0
        %2203 = vmatprep.subr.mxu0 0.0
        %2204 = vmatpush1.msra.mxu0 0.0
        %2205 = vmatprep.subr.mxu0 0.0
        %2206 = vmatpush1.msra.mxu0 0.0
        %2207 = vmatprep.mubr.f32.mxu0 0.0
        %2208 = vmatmul.mubr.f32.gmra.mrb[0].mxu0 %v2138
        %v2209 = vpop.f32.mrb[0].mxu0
        %v2210 = vadd.f32 %v2135, %v2209
        %v2211 = vpop.f32.mrb[0].mxu0
        %2212 = vmatprep.mubr.f32.mxu0 0.0
        %2213 = vmatmul.mubr.f32.gmra.mrb[0].mxu0 %v2141
        %v2214 = vpop.f32.mrb[0].mxu0
        %v2215 = vadd.f32 %v2135, %v2214
        %v2216 = vpop.f32.mrb[0].mxu0
        %2217 = vdwg.mxu0
        %v2218 = vmul.f32 %v2210, 1.702
        %v2219 = vmul.f32 %v2215, 1.702
        %v2220 = vxor.u32 %v2218, 2147483648
        %v2221 = vxor.u32 %v2219, 2147483648
        %v2222 = vmul.f32 %v2220, 1.442695
        %v2223 = vpow.pop %v2222
        %v2224 = vmul.f32 %v2221, 1.442695
        %v2225 = vpow.pop %v2224
        %v2226 = vadd.f32 %v2223, 1.0
        %v2227 = vadd.f32 %v2225, 1.0
        %v2228 = vrcp.pop %v2226
        %v2229 = vmul.f32 1.0, %v2228
        %v2230 = vrcp.pop %v2227
        %v2231 = vmul.f32 1.0, %v2230
        %v2232 = vmul.f32 %v2210, %v2229
        %v2233 = vmul.f32 %v2215, %v2231
        %v2234 = vld [vmem:[#allocation20] sm:$0xff]
        %v2235 = vld [vmem:[#allocation20 + $0x8] sm:$0xff]
        %v2236 = vld [vmem:[#allocation20 + $0x10] sm:$0xff]
        %v2237 = vld [vmem:[#allocation20 + $0x18] sm:$0xff]
        %v2238 = vld [vmem:[#allocation20 + $0x20] sm:$0xff]
        %v2239 = vld [vmem:[#allocation20 + $0x28] sm:$0xff]
        %v2240 = vld [vmem:[#allocation20 + $0x30] sm:$0xff]
        %v2241 = vld [vmem:[#allocation20 + $0x38] sm:$0xff]
        %v2242 = vld [vmem:[#allocation20 + $0x40] sm:$0xff]
        %v2243 = vld [vmem:[#allocation20 + $0x48] sm:$0xff]
        %v2244 = vld [vmem:[#allocation20 + $0x50] sm:$0xff]
        %v2245 = vld [vmem:[#allocation20 + $0x58] sm:$0xff]
        %v2246 = vld [vmem:[#allocation20 + $0x60] sm:$0xff]
        %v2247 = vld [vmem:[#allocation20 + $0x68] sm:$0xff]
        %v2248 = vld [vmem:[#allocation20 + $0x70] sm:$0xff]
        %v2249 = vld [vmem:[#allocation20 + $0x78] sm:$0xff]
        %v2250 = vld [vmem:[#allocation22] sm:$0x1]
        %v2252 = vlaneseq
        %v2253 = vshrl.u32 %v2252, 7
        %v2254 = vsub.s32 0, %v2253
        %v2255 = vrot.slane %v2250, %v2254
        %2257 = vmatprep.subr.mxu0 0.0
        %2258 = vmatpush1.msra.mxu0 %v2234
        %2259 = vmatprep.subr.mxu0 0.0
        %2260 = vmatpush1.msra.mxu0 %v2235
        %2261 = vmatprep.subr.mxu0 0.0
        %2262 = vmatpush1.msra.mxu0 %v2236
        %2263 = vmatprep.subr.mxu0 0.0
        %2264 = vmatpush1.msra.mxu0 %v2237
        %2265 = vmatprep.subr.mxu0 0.0
        %2266 = vmatpush1.msra.mxu0 %v2238
        %2267 = vmatprep.subr.mxu0 0.0
        %2268 = vmatpush1.msra.mxu0 %v2239
        %2269 = vmatprep.subr.mxu0 0.0
        %2270 = vmatpush1.msra.mxu0 %v2240
        %2271 = vmatprep.subr.mxu0 0.0
        %2272 = vmatpush1.msra.mxu0 %v2241
        %2273 = vmatprep.subr.mxu0 0.0
        %2274 = vmatpush1.msra.mxu0 %v2242
        %2275 = vmatprep.subr.mxu0 0.0
        %2276 = vmatpush1.msra.mxu0 %v2243
        %2277 = vmatprep.subr.mxu0 0.0
        %2278 = vmatpush1.msra.mxu0 %v2244
        %2279 = vmatprep.subr.mxu0 0.0
        %2280 = vmatpush1.msra.mxu0 %v2245
        %2281 = vmatprep.subr.mxu0 0.0
        %2282 = vmatpush1.msra.mxu0 %v2246
        %2283 = vmatprep.subr.mxu0 0.0
        %2284 = vmatpush1.msra.mxu0 %v2247
        %2285 = vmatprep.subr.mxu0 0.0
        %2286 = vmatpush1.msra.mxu0 %v2248
        %2287 = vmatprep.subr.mxu0 0.0
        %2288 = vmatpush1.msra.mxu0 %v2249
        %2289 = vmatprep.subr.mxu0 0.0
        %2290 = vmatpush1.msra.mxu0 0.0
        %2291 = vmatprep.subr.mxu0 0.0
        %2292 = vmatpush1.msra.mxu0 0.0
        %2293 = vmatprep.subr.mxu0 0.0
        %2294 = vmatpush1.msra.mxu0 0.0
        %2295 = vmatprep.subr.mxu0 0.0
        %2296 = vmatpush1.msra.mxu0 0.0
        %2297 = vmatprep.subr.mxu0 0.0
        %2298 = vmatpush1.msra.mxu0 0.0
        %2299 = vmatprep.subr.mxu0 0.0
        %2300 = vmatpush1.msra.mxu0 0.0
        %2301 = vmatprep.subr.mxu0 0.0
        %2302 = vmatpush1.msra.mxu0 0.0
        %2303 = vmatprep.subr.mxu0 0.0
        %2304 = vmatpush1.msra.mxu0 0.0
        %2305 = vmatprep.subr.mxu0 0.0
        %2306 = vmatpush1.msra.mxu0 0.0
        %2307 = vmatprep.subr.mxu0 0.0
        %2308 = vmatpush1.msra.mxu0 0.0
        %2309 = vmatprep.subr.mxu0 0.0
        %2310 = vmatpush1.msra.mxu0 0.0
        %2311 = vmatprep.subr.mxu0 0.0
        %2312 = vmatpush1.msra.mxu0 0.0
        %2313 = vmatprep.subr.mxu0 0.0
        %2314 = vmatpush1.msra.mxu0 0.0
        %2315 = vmatprep.subr.mxu0 0.0
        %2316 = vmatpush1.msra.mxu0 0.0
        %2317 = vmatprep.subr.mxu0 0.0
        %2318 = vmatpush1.msra.mxu0 0.0
        %2319 = vmatprep.subr.mxu0 0.0
        %2320 = vmatpush1.msra.mxu0 0.0
        %2321 = vmatprep.mubr.f32.mxu0 0.0
        %2322 = vmatmul.mubr.f32.gmra.mrb[0].mxu0 %v2232
        %v2323 = vpop.f32.mrb[0].mxu0
        %v2324 = vadd.f32 %v2255, %v2323
        %v2325 = vpop.f32.mrb[0].mxu0
        %2326 = vmatprep.mubr.f32.mxu0 0.0
        %2327 = vmatmul.mubr.f32.gmra.mrb[0].mxu0 %v2233
        %v2328 = vpop.f32.mrb[0].mxu0
        %v2329 = vadd.f32 %v2255, %v2328
        %v2330 = vpop.f32.mrb[0].mxu0
        %2331 = vdwg.mxu0
        %v2332 = vadd.f32 %v2080, %v2324
        %v2333 = vadd.f32 %v2081, %v2329
        %2334 = vst.msk [vmem:[%s616] sm:$0xff] %vm621, %v2332
        %2335 = vst.msk [vmem:[%s616 + $0x8] sm:$0xff] %vm621, %v2333
        %s2336 = sand.u32 %s322, 1
        %s2337 = scalar_lea.sflag [#allocation4], %s2336
        %s2338 = sand.u32 %s322, 1
        %s2339 = smul.addr %s2338, 16
        %s2340 = scalar_lea.vmem [#allocation23], %s2339
        // Predicated region
        $region125: #{tpu_custom_call.1} parent=71 // pred_check
          %p2341 = pneg %p332
        $region126: #{tpu_custom_call.1} parent=71 // pred_check_branch
          %2343 = sbr.rel (%p2341) target = $region128
        $region127: #{tpu_custom_call.1} parent=71 // pred_region
          %s2345 = ssub.s32 256, 256
          %2346 = vsyncadd %s2337, %s2345
          %s2347 = smul.addr %s36, 2
          %s2348 = smul.addr %s2347, 128
          %s2349 = scalar_lea.hbm %s13, %s2348
          %s2350 = sshll.u32 %s2340, 4
          %s2351 = int_to_ptr.vmem [resolvable:$true] %s2350
          %2356 = dma.vmem_to_hbm [thread:$0]  %s2351, 256, %s2349, %s2337, 128, 128, 8
        $region128: #{tpu_custom_call.1} parent=71 // pred_fallthru
          _
      $region72: #{tpu_custom_call.1} parent=5 // pred_fallthru
        _
      %p2357 = scmp.le.s32.totalorder 2, %s31
      // Predicated region
      $region129: #{tpu_custom_call.1} parent=5 // pred_check
        %p2358 = pneg %p2357
      $region130: #{tpu_custom_call.1} parent=5 // pred_check_branch
        %2360 = sbr.rel (%p2358) target = $region132
      $region131: #{tpu_custom_call.1} parent=5 // pred_region
        %s2361 = ssub.s32 %s31, 2
        // Predicated region
        $region133: #{tpu_custom_call.1} parent=131 // pred_check
          %p2362 = pneg %p338
        $region134: #{tpu_custom_call.1} parent=131 // pred_check_branch
          %2364 = sbr.rel (%p2362) target = $region136
        $region135: #{tpu_custom_call.1} parent=131 // pred_region
          %s2365 = sand.u32 %s323, 1
          %s2366 = scalar_lea.sflag [#allocation4], %s2365
          %s2367 = sand.u32 %s323, 1
          %s2368 = smul.addr %s2367, 16
          %s2369 = scalar_lea.vmem [#allocation23], %s2368
          %2370 = dma.done %s2366, 256
        $region136: #{tpu_custom_call.1} parent=131 // pred_fallthru
          _
      $region132: #{tpu_custom_call.1} parent=5 // pred_fallthru
        _
    $region6: #{tpu_custom_call.1} parent=1 // loop_footer
      %s35 = sadd.s32 1, %s31
    $region7: #{tpu_custom_call.1} parent=1 // loop_footer_branch
      %30 = sbr.rel target = $region3
    $region8: #{tpu_custom_call.1} parent=1 // loop_exit
      _
    %2371 = vsyncpa [#allocation3], 1
    %s2372 = scalar_lea.sflag [#allocation3], 1
    %2373 = vsyncpa %s2372, 1
    %2374 = vsyncpa [#allocation6], 1
    %2375 = vsyncpa [#allocation9], 1
    %2376 = vsyncpa [#allocation12], 1
    %2377 = vsyncpa [#allocation15], 1
    %2378 = vsyncpa [#allocation18], 1
    %2379 = vsyncpa [#allocation21], 1
    %2380 = vsyncpa [#allocation4], 1
    %s2381 = scalar_lea.sflag [#allocation4], 1
    %2382 = vsyncpa %s2381, 1

// kernel: tpu_custom_call.1
$region0: #{tpu_custom_call.1}
  #allocation0 [shape = 'u32[]', space=smem, size = 0x4, offset = 0x4, fixed_abs, tag = 'smem constant byte address 0x4 - core index']
  #allocation1 [shape = 'u32[144,128]{1,0:T(1,128)}', space=vmem, size = 0x12000, scoped, tag = 'internal scratch']
  %s0 = inlined_call_operand.hbm [shape: f32[2,16,32], index: 0, kind: input, shape index: {}]
  %s1 = inlined_call_operand.hbm [shape: f32[1,32], index: 1, kind: input, shape index: {}]
  %s2 = inlined_call_operand.hbm [shape: f32[1,32], index: 2, kind: input, shape index: {}]
  %s3 = inlined_call_operand.hbm [shape: f32[32,96], index: 3, kind: input, shape index: {}]
  %s4 = inlined_call_operand.hbm [shape: f32[1,96], index: 4, kind: input, shape index: {}]
  %s5 = inlined_call_operand.hbm [shape: f32[32,32], index: 5, kind: input, shape index: {}]
  %s6 = inlined_call_operand.hbm [shape: f32[1,32], index: 6, kind: input, shape index: {}]
  %s7 = inlined_call_operand.hbm [shape: f32[1,32], index: 7, kind: input, shape index: {}]
  %s8 = inlined_call_operand.hbm [shape: f32[1,32], index: 8, kind: input, shape index: {}]
  %s9 = inlined_call_operand.hbm [shape: f32[32,128], index: 9, kind: input, shape index: {}]
  %s10 = inlined_call_operand.hbm [shape: f32[1,128], index: 10, kind: input, shape index: {}]
  %s11 = inlined_call_operand.hbm [shape: f32[128,32], index: 11, kind: input, shape index: {}]
  %s12 = inlined_call_operand.hbm [shape: f32[1,32], index: 12, kind: input, shape index: {}]
  %s13 = inlined_call_operand.hbm [shape: f32[2,16,32], index: 13, kind: output, shape index: {}]
  %s14 = sld [smem:[#allocation0]]
  $region137: #{tpu_custom_call.1} parent=0
    _
  %s16 = ssub.s32 1, %s14
  %s17 = scalar_select 0, %s16, %s14
  $region1: #{tpu_custom_call.1} parent=0
    #allocation2 [shape = 'u8[16384]{0}', space=vmem, size = 0x4000, scoped, tag = 'input window, operand 0']
    #allocation3 [shape = 's32[2]{0}', space=sflag, size = 0x8, scoped, tag = 'scoped memory for tpu_custom_call.1']
    #allocation4 [shape = 's32[2]{0}', space=sflag, size = 0x8, scoped, tag = 'scoped memory for tpu_custom_call.1']
    #allocation5 [shape = 'u8[512]{0}', space=vmem, size = 0x400, scoped, tag = 'input window, operand 1, single buffered']
    #allocation6 [shape = 's32[1]{0}', space=sflag, size = 0x4, scoped, tag = 'scoped memory for tpu_custom_call.1']
    #allocation7 [shape = 'u8[512]{0}', space=vmem, size = 0x400, scoped, tag = 'input window, operand 2, single buffered']
    #allocation8 [shape = 'u8[16384]{0}', space=vmem, size = 0x4000, scoped, tag = 'input window, operand 3, single buffered']
    #allocation9 [shape = 's32[1]{0}', space=sflag, size = 0x4, scoped, tag = 'scoped memory for tpu_custom_call.1']
    #allocation10 [shape = 'u8[512]{0}', space=vmem, size = 0x400, scoped, tag = 'input window, operand 4, single buffered']
    #allocation11 [shape = 'u8[16384]{0}', space=vmem, size = 0x4000, scoped, tag = 'input window, operand 5, single buffered']
    #allocation12 [shape = 's32[1]{0}', space=sflag, size = 0x4, scoped, tag = 'scoped memory for tpu_custom_call.1']
    #allocation13 [shape = 'u8[512]{0}', space=vmem, size = 0x400, scoped, tag = 'input window, operand 6, single buffered']
    #allocation14 [shape = 'u8[512]{0}', space=vmem, size = 0x400, scoped, tag = 'input window, operand 7, single buffered']
    #allocation15 [shape = 's32[1]{0}', space=sflag, size = 0x4, scoped, tag = 'scoped memory for tpu_custom_call.1']
    #allocation16 [shape = 'u8[512]{0}', space=vmem, size = 0x400, scoped, tag = 'input window, operand 8, single buffered']
    #allocation17 [shape = 'u8[16384]{0}', space=vmem, size = 0x4000, scoped, tag = 'input window, operand 9, single buffered']
    #allocation18 [shape = 's32[1]{0}', space=sflag, size = 0x4, scoped, tag = 'scoped memory for tpu_custom_call.1']
    #allocation19 [shape = 'u8[512]{0}', space=vmem, size = 0x400, scoped, tag = 'input window, operand 10, single buffered']
    #allocation20 [shape = 'u8[65536]{0}', space=vmem, size = 0x10000, scoped, tag = 'input window, operand 11, single buffered']
    #allocation21 [shape = 's32[1]{0}', space=sflag, size = 0x4, scoped, tag = 'scoped memory for tpu_custom_call.1']
    #allocation22 [shape = 'u8[512]{0}', space=vmem, size = 0x400, scoped, tag = 'input window, operand 12, single buffered']
    #allocation23 [shape = 'u8[16384]{0}', space=vmem, size = 0x4000, scoped, tag = 'output window, operand 0']
    %18 = vsyncpa [#allocation3], 0
    %s19 = scalar_lea.sflag [#allocation3], 1
    %20 = vsyncpa %s19, 0
    %21 = vsyncpa [#allocation6], 0
    %22 = vsyncpa [#allocation9], 0
    %23 = vsyncpa [#allocation12], 0
    %24 = vsyncpa [#allocation15], 0
    %25 = vsyncpa [#allocation18], 0
    %26 = vsyncpa [#allocation21], 0
    %27 = vsyncpa [#allocation4], 0
    %s28 = scalar_lea.sflag [#allocation4], 1
    %29 = vsyncpa %s28, 0
    loop: start=0, step=1, limit=4
    $region2: #{tpu_custom_call.1} parent=1 // loop_pre_header
      _
    $region3: #{tpu_custom_call.1} parent=1 // loop_header
      %s31 = sphi 0, %s35
      %p32 = scmp.ge.s32.totalorder %s31, 4
      %s41 = sphi 0, %s43
      %s44 = sphi 0, %s41
      %s45 = sphi 0, %s44
      %s61 = sphi 0, %s45
      %s65 = sphi 0, %s65
      %s67 = sphi 0, %s65
      %s68 = sphi 0, %s67
      %s82 = sphi 0, %s68
      %s86 = sphi 0, %s86
      %s88 = sphi 0, %s86
      %s89 = sphi 0, %s88
      %s103 = sphi 0, %s89
      %s107 = sphi 0, %s107
      %s109 = sphi 0, %s107
      %s110 = sphi 0, %s109
      %s124 = sphi 0, %s110
      %s128 = sphi 0, %s128
      %s130 = sphi 0, %s128
      %s131 = sphi 0, %s130
      %s145 = sphi 0, %s131
      %s149 = sphi 0, %s149
      %s151 = sphi 0, %s149
      %s152 = sphi 0, %s151
      %s166 = sphi 0, %s152
      %s170 = sphi 0, %s170
      %s172 = sphi 0, %s170
      %s173 = sphi 0, %s172
      %s187 = sphi 0, %s173
      %s191 = sphi 0, %s191
      %s193 = sphi 0, %s191
      %s194 = sphi 0, %s193
      %s208 = sphi 0, %s194
      %s212 = sphi 0, %s212
      %s214 = sphi 0, %s212
      %s215 = sphi 0, %s214
      %s229 = sphi 0, %s215
      %s233 = sphi 0, %s233
      %s235 = sphi 0, %s233
      %s236 = sphi 0, %s235
      %s250 = sphi 0, %s236
      %s254 = sphi 0, %s254
      %s256 = sphi 0, %s254
      %s257 = sphi 0, %s256
      %s271 = sphi 0, %s257
      %s275 = sphi 0, %s275
      %s277 = sphi 0, %s275
      %s278 = sphi 0, %s277
      %s292 = sphi 0, %s278
      %s296 = sphi 0, %s296
      %s298 = sphi 0, %s296
      %s299 = sphi 0, %s298
      %s313 = sphi 0, %s299
      %s319 = sphi 0, %s321
      %s322 = sphi 0, %s319
      %s323 = sphi 0, %s322
      %s339 = sphi 0, %s323
    $region4: #{tpu_custom_call.1} parent=1 // loop_header_branch
      %34 = sbr.rel (%p32) target = $region8
    $region5: #{tpu_custom_call.1} parent=1 // loop_body
      %s36 = ssub.s32 %s31, 1
      %s37 = ssub.s32 %s31, 2
      %s38 = sadd.s32 %s31, 1
      %s39 = ssub.s32 %s31, %s38
      %p40 = scmp.eq.s32.totalorder %s39, 0
      %s42 = sadd.s32 %s41, 1
      %s43 = scalar_select %p40, %s41, %s42
      %p46 = pneg %p40
      %p47 = scmp.eq.s32.totalorder %s31, 1
      %p48 = por %p46, %p47
      %p49 = scmp.ne.s32.totalorder %s41, %s44
      %p50 = scmp.eq.s32.totalorder %s31, 0
      %p51 = por %p49, %p50
      %p52 = scmp.ne.s32.totalorder %s41, %s44
      %p53 = scmp.eq.s32.totalorder %s36, 1
      %p54 = por %p52, %p53
      %p55 = scmp.ne.s32.totalorder %s44, %s45
      %p56 = scmp.eq.s32.totalorder %s36, 0
      %p57 = por %p55, %p56
      %p58 = scmp.ne.s32.totalorder %s44, %s45
      %p59 = scmp.eq.s32.totalorder %s37, 1
      %p60 = por %p58, %p59
      %p62 = scmp.ne.s32.totalorder %s45, %s61
      %p63 = scmp.eq.s32.totalorder %s37, 0
      %p64 = por %p62, %p63
      %s66 = sadd.s32 %s65, 1
      %p69 = scmp.eq.s32.totalorder %s31, 1
      %p70 = scmp.ne.s32.totalorder %s65, %s67
      %p71 = scmp.eq.s32.totalorder %s31, 0
      %p72 = por %p70, %p71
      %p73 = scmp.ne.s32.totalorder %s65, %s67
      %p74 = scmp.eq.s32.totalorder %s36, 1
      %p75 = por %p73, %p74
      %p76 = scmp.ne.s32.totalorder %s67, %s68
      %p77 = scmp.eq.s32.totalorder %s36, 0
      %p78 = por %p76, %p77
      %p79 = scmp.ne.s32.totalorder %s67, %s68
      %p80 = scmp.eq.s32.totalorder %s37, 1
      %p81 = por %p79, %p80
      %p83 = scmp.ne.s32.totalorder %s68, %s82
      %p84 = scmp.eq.s32.totalorder %s37, 0
      %p85 = por %p83, %p84
      %s87 = sadd.s32 %s86, 1
      %p90 = scmp.eq.s32.totalorder %s31, 1
      %p91 = scmp.ne.s32.totalorder %s86, %s88
      %p92 = scmp.eq.s32.totalorder %s31, 0
      %p93 = por %p91, %p92
      %p94 = scmp.ne.s32.totalorder %s86, %s88
      %p95 = scmp.eq.s32.totalorder %s36, 1
      %p96 = por %p94, %p95
      %p97 = scmp.ne.s32.totalorder %s88, %s89
      %p98 = scmp.eq.s32.totalorder %s36, 0
      %p99 = por %p97, %p98
      %p100 = scmp.ne.s32.totalorder %s88, %s89
      %p101 = scmp.eq.s32.totalorder %s37, 1
      %p102 = por %p100, %p101
      %p104 = scmp.ne.s32.totalorder %s89, %s103
      %p105 = scmp.eq.s32.totalorder %s37, 0
      %p106 = por %p104, %p105
      %s108 = sadd.s32 %s107, 1
      %p111 = scmp.eq.s32.totalorder %s31, 1
      %p112 = scmp.ne.s32.totalorder %s107, %s109
      %p113 = scmp.eq.s32.totalorder %s31, 0
      %p114 = por %p112, %p113
      %p115 = scmp.ne.s32.totalorder %s107, %s109
      %p116 = scmp.eq.s32.totalorder %s36, 1
      %p117 = por %p115, %p116
      %p118 = scmp.ne.s32.totalorder %s109, %s110
      %p119 = scmp.eq.s32.totalorder %s36, 0
      %p120 = por %p118, %p119
      %p121 = scmp.ne.s32.totalorder %s109, %s110
      %p122 = scmp.eq.s32.totalorder %s37, 1
      %p123 = por %p121, %p122
      %p125 = scmp.ne.s32.totalorder %s110, %s124
      %p126 = scmp.eq.s32.totalorder %s37, 0
      %p127 = por %p125, %p126
      %s129 = sadd.s32 %s128, 1
      %p132 = scmp.eq.s32.totalorder %s31, 1
      %p133 = scmp.ne.s32.totalorder %s128, %s130
      %p134 = scmp.eq.s32.totalorder %s31, 0
      %p135 = por %p133, %p134
      %p136 = scmp.ne.s32.totalorder %s128, %s130
      %p137 = scmp.eq.s32.totalorder %s36, 1
      %p138 = por %p136, %p137
      %p139 = scmp.ne.s32.totalorder %s130, %s131
      %p140 = scmp.eq.s32.totalorder %s36, 0
      %p141 = por %p139, %p140
      %p142 = scmp.ne.s32.totalorder %s130, %s131
      %p143 = scmp.eq.s32.totalorder %s37, 1
      %p144 = por %p142, %p143
      %p146 = scmp.ne.s32.totalorder %s131, %s145
      %p147 = scmp.eq.s32.totalorder %s37, 0
      %p148 = por %p146, %p147
      %s150 = sadd.s32 %s149, 1
      %p153 = scmp.eq.s32.totalorder %s31, 1
      %p154 = scmp.ne.s32.totalorder %s149, %s151
      %p155 = scmp.eq.s32.totalorder %s31, 0
      %p156 = por %p154, %p155
      %p157 = scmp.ne.s32.totalorder %s149, %s151
      %p158 = scmp.eq.s32.totalorder %s36, 1
      %p159 = por %p157, %p158
      %p160 = scmp.ne.s32.totalorder %s151, %s152
      %p161 = scmp.eq.s32.totalorder %s36, 0
      %p162 = por %p160, %p161
      %p163 = scmp.ne.s32.totalorder %s151, %s152
      %p164 = scmp.eq.s32.totalorder %s37, 1
      %p165 = por %p163, %p164
      %p167 = scmp.ne.s32.totalorder %s152, %s166
      %p168 = scmp.eq.s32.totalorder %s37, 0
      %p169 = por %p167, %p168
      %s171 = sadd.s32 %s170, 1
      %p174 = scmp.eq.s32.totalorder %s31, 1
      %p175 = scmp.ne.s32.totalorder %s170, %s172
      %p176 = scmp.eq.s32.totalorder %s31, 0
      %p177 = por %p175, %p176
      %p178 = scmp.ne.s32.totalorder %s170, %s172
      %p179 = scmp.eq.s32.totalorder %s36, 1
      %p180 = por %p178, %p179
      %p181 = scmp.ne.s32.totalorder %s172, %s173
      %p182 = scmp.eq.s32.totalorder %s36, 0
      %p183 = por %p181, %p182
      %p184 = scmp.ne.s32.totalorder %s172, %s173
      %p185 = scmp.eq.s32.totalorder %s37, 1
      %p186 = por %p184, %p185
      %p188 = scmp.ne.s32.totalorder %s173, %s187
      %p189 = scmp.eq.s32.totalorder %s37, 0
      %p190 = por %p188, %p189
      %s192 = sadd.s32 %s191, 1
      %p195 = scmp.eq.s32.totalorder %s31, 1
      %p196 = scmp.ne.s32.totalorder %s191, %s193
      %p197 = scmp.eq.s32.totalorder %s31, 0
      %p198 = por %p196, %p197
      %p199 = scmp.ne.s32.totalorder %s191, %s193
      %p200 = scmp.eq.s32.totalorder %s36, 1
      %p201 = por %p199, %p200
      %p202 = scmp.ne.s32.totalorder %s193, %s194
      %p203 = scmp.eq.s32.totalorder %s36, 0
      %p204 = por %p202, %p203
      %p205 = scmp.ne.s32.totalorder %s193, %s194
      %p206 = scmp.eq.s32.totalorder %s37, 1
      %p207 = por %p205, %p206
      %p209 = scmp.ne.s32.totalorder %s194, %s208
      %p210 = scmp.eq.s32.totalorder %s37, 0
      %p211 = por %p209, %p210
      %s213 = sadd.s32 %s212, 1
      %p216 = scmp.eq.s32.totalorder %s31, 1
      %p217 = scmp.ne.s32.totalorder %s212, %s214
      %p218 = scmp.eq.s32.totalorder %s31, 0
      %p219 = por %p217, %p218
      %p220 = scmp.ne.s32.totalorder %s212, %s214
      %p221 = scmp.eq.s32.totalorder %s36, 1
      %p222 = por %p220, %p221
      %p223 = scmp.ne.s32.totalorder %s214, %s215
      %p224 = scmp.eq.s32.totalorder %s36, 0
      %p225 = por %p223, %p224
      %p226 = scmp.ne.s32.totalorder %s214, %s215
      %p227 = scmp.eq.s32.totalorder %s37, 1
      %p228 = por %p226, %p227
      %p230 = scmp.ne.s32.totalorder %s215, %s229
      %p231 = scmp.eq.s32.totalorder %s37, 0
      %p232 = por %p230, %p231
      %s234 = sadd.s32 %s233, 1
      %p237 = scmp.eq.s32.totalorder %s31, 1
      %p238 = scmp.ne.s32.totalorder %s233, %s235
      %p239 = scmp.eq.s32.totalorder %s31, 0
      %p240 = por %p238, %p239
      %p241 = scmp.ne.s32.totalorder %s233, %s235
      %p242 = scmp.eq.s32.totalorder %s36, 1
      %p243 = por %p241, %p242
      %p244 = scmp.ne.s32.totalorder %s235, %s236
      %p245 = scmp.eq.s32.totalorder %s36, 0
      %p246 = por %p244, %p245
      %p247 = scmp.ne.s32.totalorder %s235, %s236
      %p248 = scmp.eq.s32.totalorder %s37, 1
      %p249 = por %p247, %p248
      %p251 = scmp.ne.s32.totalorder %s236, %s250
      %p252 = scmp.eq.s32.totalorder %s37, 0
      %p253 = por %p251, %p252
      %s255 = sadd.s32 %s254, 1
      %p258 = scmp.eq.s32.totalorder %s31, 1
      %p259 = scmp.ne.s32.totalorder %s254, %s256
      %p260 = scmp.eq.s32.totalorder %s31, 0
      %p261 = por %p259, %p260
      %p262 = scmp.ne.s32.totalorder %s254, %s256
      %p263 = scmp.eq.s32.totalorder %s36, 1
      %p264 = por %p262, %p263
      %p265 = scmp.ne.s32.totalorder %s256, %s257
      %p266 = scmp.eq.s32.totalorder %s36, 0
      %p267 = por %p265, %p266
      %p268 = scmp.ne.s32.totalorder %s256, %s257
      %p269 = scmp.eq.s32.totalorder %s37, 1
      %p270 = por %p268, %p269
      %p272 = scmp.ne.s32.totalorder %s257, %s271
      %p273 = scmp.eq.s32.totalorder %s37, 0
      %p274 = por %p272, %p273
      %s276 = sadd.s32 %s275, 1
      %p279 = scmp.eq.s32.totalorder %s31, 1
      %p280 = scmp.ne.s32.totalorder %s275, %s277
      %p281 = scmp.eq.s32.totalorder %s31, 0
      %p282 = por %p280, %p281
      %p283 = scmp.ne.s32.totalorder %s275, %s277
      %p284 = scmp.eq.s32.totalorder %s36, 1
      %p285 = por %p283, %p284
      %p286 = scmp.ne.s32.totalorder %s277, %s278
      %p287 = scmp.eq.s32.totalorder %s36, 0
      %p288 = por %p286, %p287
      %p289 = scmp.ne.s32.totalorder %s277, %s278
      %p290 = scmp.eq.s32.totalorder %s37, 1
      %p291 = por %p289, %p290
      %p293 = scmp.ne.s32.totalorder %s278, %s292
      %p294 = scmp.eq.s32.totalorder %s37, 0
      %p295 = por %p293, %p294
      %s297 = sadd.s32 %s296, 1
      %p300 = scmp.eq.s32.totalorder %s31, 1
      %p301 = scmp.ne.s32.totalorder %s296, %s298
      %p302 = scmp.eq.s32.totalorder %s31, 0
      %p303 = por %p301, %p302
      %p304 = scmp.ne.s32.totalorder %s296, %s298
      %p305 = scmp.eq.s32.totalorder %s36, 1
      %p306 = por %p304, %p305
      %p307 = scmp.ne.s32.totalorder %s298, %s299
      %p308 = scmp.eq.s32.totalorder %s36, 0
      %p309 = por %p307, %p308
      %p310 = scmp.ne.s32.totalorder %s298, %s299
      %p311 = scmp.eq.s32.totalorder %s37, 1
      %p312 = por %p310, %p311
      %p314 = scmp.ne.s32.totalorder %s299, %s313
      %p315 = scmp.eq.s32.totalorder %s37, 0
      %p316 = por %p314, %p315
      %s317 = ssub.s32 %s31, %s38
      %p318 = scmp.eq.s32.totalorder %s317, 0
      %s320 = sadd.s32 %s319, 1
      %s321 = scalar_select %p318, %s319, %s320
      %p324 = pneg %p318
      %p325 = scmp.eq.s32.totalorder %s31, 1
      %p326 = por %p324, %p325
      %p327 = scmp.ne.s32.totalorder %s319, %s322
      %p328 = scmp.eq.s32.totalorder %s31, 0
      %p329 = por %p327, %p328
      %p330 = scmp.ne.s32.totalorder %s319, %s322
      %p331 = scmp.eq.s32.totalorder %s36, 1
      %p332 = por %p330, %p331
      %p333 = scmp.ne.s32.totalorder %s322, %s323
      %p334 = scmp.eq.s32.totalorder %s36, 0
      %p335 = por %p333, %p334
      %p336 = scmp.ne.s32.totalorder %s322, %s323
      %p337 = scmp.eq.s32.totalorder %s37, 1
      %p338 = por %p336, %p337
      %p340 = scmp.ne.s32.totalorder %s323, %s339
      %p341 = scmp.eq.s32.totalorder %s37, 0
      %p342 = por %p340, %p341
      %p343 = scmp.le.s32.totalorder 1, %s31
      %p344 = scmp.lt.s32.totalorder %s31, 3
      %p345 = pnand %p343, %p344
      %p346 = pneg %p345
      // Predicated region
      $region9: #{tpu_custom_call.1} parent=5 // pred_check
        _
      $region10: #{tpu_custom_call.1} parent=5 // pred_check_branch
        %348 = sbr.rel (%p345) target = $region12
      $region11: #{tpu_custom_call.1} parent=5 // pred_region
        %s349 = ssub.s32 %s31, 1
        // Predicated region
        $region13: #{tpu_custom_call.1} parent=11 // pred_check
          %p350 = pneg %p78
        $region14: #{tpu_custom_call.1} parent=11 // pred_check_branch
          %352 = sbr.rel (%p350) target = $region16
        $region15: #{tpu_custom_call.1} parent=11 // pred_region
          %s354 = ssub.s32 16, 16
          %355 = vsyncadd [#allocation6], %s354
          %s357 = sshll.u32 [#allocation5], 4
          %s358 = int_to_ptr.vmem [resolvable:$true] %s357
          %360 = dma.hbm_to_vmem [thread:$0]  %s1, 16, %s358, [#allocation6]
        $region16: #{tpu_custom_call.1} parent=11 // pred_fallthru
          _
        // Predicated region
        $region17: #{tpu_custom_call.1} parent=11 // pred_check
          %p361 = pneg %p99
        $region18: #{tpu_custom_call.1} parent=11 // pred_check_branch
          %363 = sbr.rel (%p361) target = $region20
        $region19: #{tpu_custom_call.1} parent=11 // pred_region
          %s365 = ssub.s32 16, 16
          %366 = vsyncadd [#allocation6], %s365
          %s368 = sshll.u32 [#allocation7], 4
          %s369 = int_to_ptr.vmem [resolvable:$true] %s368
          %371 = dma.hbm_to_vmem [thread:$0]  %s2, 16, %s369, [#allocation6]
        $region20: #{tpu_custom_call.1} parent=11 // pred_fallthru
          _
        // Predicated region
        $region21: #{tpu_custom_call.1} parent=11 // pred_check
          %p372 = pneg %p120
        $region22: #{tpu_custom_call.1} parent=11 // pred_check_branch
          %374 = sbr.rel (%p372) target = $region24
        $region23: #{tpu_custom_call.1} parent=11 // pred_region
          %s376 = ssub.s32 512, 512
          %377 = vsyncadd [#allocation9], %s376
          %s378 = sshll.u32 [#allocation8], 4
          %s379 = int_to_ptr.vmem [resolvable:$true] %s378
          %384 = dma.hbm_to_vmem [thread:$0]  %s3, 512, %s379, [#allocation9], 128, 128, 8
        $region24: #{tpu_custom_call.1} parent=11 // pred_fallthru
          _
        // Predicated region
        $region25: #{tpu_custom_call.1} parent=11 // pred_check
          %p385 = pneg %p141
        $region26: #{tpu_custom_call.1} parent=11 // pred_check_branch
          %387 = sbr.rel (%p385) target = $region28
        $region27: #{tpu_custom_call.1} parent=11 // pred_region
          %s389 = ssub.s32 16, 16
          %390 = vsyncadd [#allocation9], %s389
          %s392 = sshll.u32 [#allocation10], 4
          %s393 = int_to_ptr.vmem [resolvable:$true] %s392
          %395 = dma.hbm_to_vmem [thread:$0]  %s4, 16, %s393, [#allocation9]
        $region28: #{tpu_custom_call.1} parent=11 // pred_fallthru
          _
        // Predicated region
        $region29: #{tpu_custom_call.1} parent=11 // pred_check
          %p396 = pneg %p162
        $region30: #{tpu_custom_call.1} parent=11 // pred_check_branch
          %398 = sbr.rel (%p396) target = $region32
        $region31: #{tpu_custom_call.1} parent=11 // pred_region
          %s400 = ssub.s32 512, 512
          %401 = vsyncadd [#allocation12], %s400
          %s402 = sshll.u32 [#allocation11], 4
          %s403 = int_to_ptr.vmem [resolvable:$true] %s402
          %408 = dma.hbm_to_vmem [thread:$0]  %s5, 512, %s403, [#allocation12], 128, 128, 8
        $region32: #{tpu_custom_call.1} parent=11 // pred_fallthru
          _
        // Predicated region
        $region33: #{tpu_custom_call.1} parent=11 // pred_check
          %p409 = pneg %p183
        $region34: #{tpu_custom_call.1} parent=11 // pred_check_branch
          %411 = sbr.rel (%p409) target = $region36
        $region35: #{tpu_custom_call.1} parent=11 // pred_region
          %s413 = ssub.s32 16, 16
          %414 = vsyncadd [#allocation12], %s413
          %s416 = sshll.u32 [#allocation13], 4
          %s417 = int_to_ptr.vmem [resolvable:$true] %s416
          %419 = dma.hbm_to_vmem [thread:$0]  %s6, 16, %s417, [#allocation12]
        $region36: #{tpu_custom_call.1} parent=11 // pred_fallthru
          _
        // Predicated region
        $region37: #{tpu_custom_call.1} parent=11 // pred_check
          %p420 = pneg %p204
        $region38: #{tpu_custom_call.1} parent=11 // pred_check_branch
          %422 = sbr.rel (%p420) target = $region40
        $region39: #{tpu_custom_call.1} parent=11 // pred_region
          %s424 = ssub.s32 16, 16
          %425 = vsyncadd [#allocation15], %s424
          %s427 = sshll.u32 [#allocation14], 4
          %s428 = int_to_ptr.vmem [resolvable:$true] %s427
          %430 = dma.hbm_to_vmem [thread:$0]  %s7, 16, %s428, [#allocation15]
        $region40: #{tpu_custom_call.1} parent=11 // pred_fallthru
          _
        // Predicated region
        $region41: #{tpu_custom_call.1} parent=11 // pred_check
          %p431 = pneg %p225
        $region42: #{tpu_custom_call.1} parent=11 // pred_check_branch
          %433 = sbr.rel (%p431) target = $region44
        $region43: #{tpu_custom_call.1} parent=11 // pred_region
          %s435 = ssub.s32 16, 16
          %436 = vsyncadd [#allocation15], %s435
          %s438 = sshll.u32 [#allocation16], 4
          %s439 = int_to_ptr.vmem [resolvable:$true] %s438
          %441 = dma.hbm_to_vmem [thread:$0]  %s8, 16, %s439, [#allocation15]
        $region44: #{tpu_custom_call.1} parent=11 // pred_fallthru
          _
        // Predicated region
        $region45: #{tpu_custom_call.1} parent=11 // pred_check
          %p442 = pneg %p246
        $region46: #{tpu_custom_call.1} parent=11 // pred_check_branch
          %444 = sbr.rel (%p442) target = $region48
        $region47: #{tpu_custom_call.1} parent=11 // pred_region
          %s446 = ssub.s32 512, 512
          %447 = vsyncadd [#allocation18], %s446
          %s448 = sshll.u32 [#allocation17], 4
          %s449 = int_to_ptr.vmem [resolvable:$true] %s448
          %454 = dma.hbm_to_vmem [thread:$0]  %s9, 512, %s449, [#allocation18], 128, 128, 8
        $region48: #{tpu_custom_call.1} parent=11 // pred_fallthru
          _
        // Predicated region
        $region49: #{tpu_custom_call.1} parent=11 // pred_check
          %p455 = pneg %p267
        $region50: #{tpu_custom_call.1} parent=11 // pred_check_branch
          %457 = sbr.rel (%p455) target = $region52
        $region51: #{tpu_custom_call.1} parent=11 // pred_region
          %s459 = ssub.s32 16, 16
          %460 = vsyncadd [#allocation18], %s459
          %s462 = sshll.u32 [#allocation19], 4
          %s463 = int_to_ptr.vmem [resolvable:$true] %s462
          %465 = dma.hbm_to_vmem [thread:$0]  %s10, 16, %s463, [#allocation18]
        $region52: #{tpu_custom_call.1} parent=11 // pred_fallthru
          _
        // Predicated region
        $region53: #{tpu_custom_call.1} parent=11 // pred_check
          %p466 = pneg %p288
        $region54: #{tpu_custom_call.1} parent=11 // pred_check_branch
          %468 = sbr.rel (%p466) target = $region56
        $region55: #{tpu_custom_call.1} parent=11 // pred_region
          %s470 = ssub.s32 2048, 2048
          %471 = vsyncadd [#allocation21], %s470
          %s472 = sshll.u32 [#allocation20], 4
          %s473 = int_to_ptr.vmem [resolvable:$true] %s472
          %478 = dma.hbm_to_vmem [thread:$0]  %s11, 2048, %s473, [#allocation21], 128, 128, 8
        $region56: #{tpu_custom_call.1} parent=11 // pred_fallthru
          _
        // Predicated region
        $region57: #{tpu_custom_call.1} parent=11 // pred_check
          %p479 = pneg %p309
        $region58: #{tpu_custom_call.1} parent=11 // pred_check_branch
          %481 = sbr.rel (%p479) target = $region60
        $region59: #{tpu_custom_call.1} parent=11 // pred_region
          %s483 = ssub.s32 16, 16
          %484 = vsyncadd [#allocation21], %s483
          %s486 = sshll.u32 [#allocation22], 4
          %s487 = int_to_ptr.vmem [resolvable:$true] %s486
          %489 = dma.hbm_to_vmem [thread:$0]  %s12, 16, %s487, [#allocation21]
        $region60: #{tpu_custom_call.1} parent=11 // pred_fallthru
          _
      $region12: #{tpu_custom_call.1} parent=5 // pred_fallthru
        _
      %p490 = scmp.lt.s32.totalorder %s31, 2
      // Predicated region
      $region61: #{tpu_custom_call.1} parent=5 // pred_check
        %p491 = pneg %p490
      $region62: #{tpu_custom_call.1} parent=5 // pred_check_branch
        %493 = sbr.rel (%p491) target = $region64
      $region63: #{tpu_custom_call.1} parent=5 // pred_region
        // Predicated region
        $region65: #{tpu_custom_call.1} parent=63 // pred_check
          %p494 = pneg %p51
        $region66: #{tpu_custom_call.1} parent=63 // pred_check_branch
          %496 = sbr.rel (%p494) target = $region68
        $region67: #{tpu_custom_call.1} parent=63 // pred_region
          %s497 = sand.u32 %s41, 1
          %s498 = scalar_lea.sflag [#allocation3], %s497
          %s499 = sand.u32 %s41, 1
          %s500 = smul.addr %s499, 16
          %s501 = scalar_lea.vmem [#allocation2], %s500
          %s503 = ssub.s32 256, 256
          %504 = vsyncadd %s498, %s503
          %s505 = smul.addr %s31, 2
          %s506 = smul.addr %s505, 128
          %s507 = scalar_lea.hbm %s0, %s506
          %s508 = sshll.u32 %s501, 4
          %s509 = int_to_ptr.vmem [resolvable:$true] %s508
          %514 = dma.hbm_to_vmem [thread:$0]  %s507, 256, %s509, %s498, 128, 128, 8
        $region68: #{tpu_custom_call.1} parent=63 // pred_fallthru
          _
      $region64: #{tpu_custom_call.1} parent=5 // pred_fallthru
        _
      %p515 = scmp.le.s32.totalorder 1, %s31
      %p516 = scmp.lt.s32.totalorder %s31, 3
      %p517 = pnand %p515, %p516
      %p518 = pneg %p517
      // Predicated region
      $region69: #{tpu_custom_call.1} parent=5 // pred_check
        _
      $region70: #{tpu_custom_call.1} parent=5 // pred_check_branch
        %520 = sbr.rel (%p517) target = $region72
      $region71: #{tpu_custom_call.1} parent=5 // pred_region
        %s521 = ssub.s32 %s31, 1
        %s522 = sand.u32 %s44, 1
        %s523 = scalar_lea.sflag [#allocation3], %s522
        %s524 = sand.u32 %s44, 1
        %s525 = smul.addr %s524, 16
        %s526 = scalar_lea.vmem [#allocation2], %s525
        // Predicated region
        $region73: #{tpu_custom_call.1} parent=71 // pred_check
          %p527 = pneg %p57
        $region74: #{tpu_custom_call.1} parent=71 // pred_check_branch
          %529 = sbr.rel (%p527) target = $region76
        $region75: #{tpu_custom_call.1} parent=71 // pred_region
          %530 = dma.done %s523, 256
        $region76: #{tpu_custom_call.1} parent=71 // pred_fallthru
          _
        // Predicated region
        $region77: #{tpu_custom_call.1} parent=71 // pred_check
          %p531 = pneg %p78
        $region78: #{tpu_custom_call.1} parent=71 // pred_check_branch
          %533 = sbr.rel (%p531) target = $region80
        $region79: #{tpu_custom_call.1} parent=71 // pred_region
          %534 = dma.done [#allocation6], 16
        $region80: #{tpu_custom_call.1} parent=71 // pred_fallthru
          _
        // Predicated region
        $region81: #{tpu_custom_call.1} parent=71 // pred_check
          %p535 = pneg %p99
        $region82: #{tpu_custom_call.1} parent=71 // pred_check_branch
          %537 = sbr.rel (%p535) target = $region84
        $region83: #{tpu_custom_call.1} parent=71 // pred_region
          %538 = dma.done [#allocation6], 16
        $region84: #{tpu_custom_call.1} parent=71 // pred_fallthru
          _
        // Predicated region
        $region85: #{tpu_custom_call.1} parent=71 // pred_check
          %p539 = pneg %p120
        $region86: #{tpu_custom_call.1} parent=71 // pred_check_branch
          %541 = sbr.rel (%p539) target = $region88
        $region87: #{tpu_custom_call.1} parent=71 // pred_region
          %542 = dma.done [#allocation9], 512
        $region88: #{tpu_custom_call.1} parent=71 // pred_fallthru
          _
        // Predicated region
        $region89: #{tpu_custom_call.1} parent=71 // pred_check
          %p543 = pneg %p141
        $region90: #{tpu_custom_call.1} parent=71 // pred_check_branch
          %545 = sbr.rel (%p543) target = $region92
        $region91: #{tpu_custom_call.1} parent=71 // pred_region
          %546 = dma.done [#allocation9], 16
        $region92: #{tpu_custom_call.1} parent=71 // pred_fallthru
          _
        // Predicated region
        $region93: #{tpu_custom_call.1} parent=71 // pred_check
          %p547 = pneg %p162
        $region94: #{tpu_custom_call.1} parent=71 // pred_check_branch
          %549 = sbr.rel (%p547) target = $region96
        $region95: #{tpu_custom_call.1} parent=71 // pred_region
          %550 = dma.done [#allocation12], 512
        $region96: #{tpu_custom_call.1} parent=71 // pred_fallthru
          _
        // Predicated region
        $region97: #{tpu_custom_call.1} parent=71 // pred_check
          %p551 = pneg %p183
        $region98: #{tpu_custom_call.1} parent=71 // pred_check_branch
          %553 = sbr.rel (%p551) target = $region100
        $region99: #{tpu_custom_call.1} parent=71 // pred_region
          %554 = dma.done [#allocation12], 16
        $region100: #{tpu_custom_call.1} parent=71 // pred_fallthru
          _
        // Predicated region
        $region101: #{tpu_custom_call.1} parent=71 // pred_check
          %p555 = pneg %p204
        $region102: #{tpu_custom_call.1} parent=71 // pred_check_branch
          %557 = sbr.rel (%p555) target = $region104
        $region103: #{tpu_custom_call.1} parent=71 // pred_region
          %558 = dma.done [#allocation15], 16
        $region104: #{tpu_custom_call.1} parent=71 // pred_fallthru
          _
        // Predicated region
        $region105: #{tpu_custom_call.1} parent=71 // pred_check
          %p559 = pneg %p225
        $region106: #{tpu_custom_call.1} parent=71 // pred_check_branch
          %561 = sbr.rel (%p559) target = $region108
        $region107: #{tpu_custom_call.1} parent=71 // pred_region
          %562 = dma.done [#allocation15], 16
        $region108: #{tpu_custom_call.1} parent=71 // pred_fallthru
          _
        // Predicated region
        $region109: #{tpu_custom_call.1} parent=71 // pred_check
          %p563 = pneg %p246
        $region110: #{tpu_custom_call.1} parent=71 // pred_check_branch
          %565 = sbr.rel (%p563) target = $region112
        $region111: #{tpu_custom_call.1} parent=71 // pred_region
          %566 = dma.done [#allocation18], 512
        $region112: #{tpu_custom_call.1} parent=71 // pred_fallthru
          _
        // Predicated region
        $region113: #{tpu_custom_call.1} parent=71 // pred_check
          %p567 = pneg %p267
        $region114: #{tpu_custom_call.1} parent=71 // pred_check_branch
          %569 = sbr.rel (%p567) target = $region116
        $region115: #{tpu_custom_call.1} parent=71 // pred_region
          %570 = dma.done [#allocation18], 16
        $region116: #{tpu_custom_call.1} parent=71 // pred_fallthru
          _
        // Predicated region
        $region117: #{tpu_custom_call.1} parent=71 // pred_check
          %p571 = pneg %p288
        $region118: #{tpu_custom_call.1} parent=71 // pred_check_branch
          %573 = sbr.rel (%p571) target = $region120
        $region119: #{tpu_custom_call.1} parent=71 // pred_region
          %574 = dma.done [#allocation21], 2048
        $region120: #{tpu_custom_call.1} parent=71 // pred_fallthru
          _
        // Predicated region
        $region121: #{tpu_custom_call.1} parent=71 // pred_check
          %p575 = pneg %p309
        $region122: #{tpu_custom_call.1} parent=71 // pred_check_branch
          %577 = sbr.rel (%p575) target = $region124
        $region123: #{tpu_custom_call.1} parent=71 // pred_region
          %578 = dma.done [#allocation21], 16
        $region124: #{tpu_custom_call.1} parent=71 // pred_fallthru
          _
        %s579 = sand.u32 %s44, 1
        %s580 = scalar_lea.sflag [#allocation3], %s579
        %s581 = sand.u32 %s44, 1
        %s582 = smul.addr %s581, 16
        %s583 = scalar_lea.vmem [#allocation2], %s582
        %p584 = pneg %p57
        %p585 = pneg %p54
        %p586 = pneg %p78
        %p587 = pneg %p75
        %p588 = pneg %p99
        %p589 = pneg %p96
        %p590 = pneg %p120
        %p591 = pneg %p117
        %p592 = pneg %p141
        %p593 = pneg %p138
        %p594 = pneg %p162
        %p595 = pneg %p159
        %p596 = pneg %p183
        %p597 = pneg %p180
        %p598 = pneg %p204
        %p599 = pneg %p201
        %p600 = pneg %p225
        %p601 = pneg %p222
        %p602 = pneg %p246
        %p603 = pneg %p243
        %p604 = pneg %p267
        %p605 = pneg %p264
        %p606 = pneg %p288
        %p607 = pneg %p285
        %p608 = pneg %p309
        %p609 = pneg %p306
        %p610 = pneg %p335
        %p611 = pneg %p332
        %s612 = sand.u32 %s322, 1
        %s613 = scalar_lea.sflag [#allocation4], %s612
        %s614 = sand.u32 %s322, 1
        %s615 = smul.addr %s614, 16
        %s616 = scalar_lea.vmem [#allocation23], %s615
        %v617 = vld [vmem:[%s526] sm:$0xff]
        %v618 = vld [vmem:[%s526 + $0x8] sm:$0xff]
        %v619 = vld [vmem:[#allocation5] sm:$0x1]
        %v620 = vld [vmem:[#allocation7] sm:$0x1]
        %vm621 = vcmask 261120
        %v622 = vsel %vm621, %v617, 0.0
        %623 = vadd.xlane.f32.xlu0 %v622
        %v624 = vpop.xlane.xlu0 %623
        %v625 = vsel %vm621, %v618, 0.0
        %626 = vadd.xlane.f32.xlu0 %v625
        %v627 = vpop.xlane.xlu0 %626
        %v628 = vrcp.pop 32.0
        %v629 = vmul.f32 %v624, %v628
        %v630 = vmul.f32 %v627, %v628
        %v631 = vsub.f32 %v617, %v629
        %v632 = vsub.f32 %v618, %v630
        %v633 = vmul.f32 %v631, %v631
        %v634 = vmul.f32 %v632, %v632
        %v635 = vsel %vm621, %v633, 0.0
        %636 = vadd.xlane.f32.xlu0 %v635
        %v637 = vpop.xlane.xlu0 %636
        %v638 = vsel %vm621, %v634, 0.0
        %639 = vadd.xlane.f32.xlu0 %v638
        %v640 = vpop.xlane.xlu0 %639
        %v641 = vmul.f32 %v637, %v628
        %v642 = vmul.f32 %v640, %v628
        %v643 = vadd.f32 %v641, 1e-05
        %v644 = vadd.f32 %v642, 1e-05
        %v645 = vrsqrt.pop %v643
        %v646 = vrsqrt.pop %v644
        %v647 = vmul.f32 %v631, %v645
        %v648 = vmul.f32 %v632, %v646
        %v650 = vlaneseq
        %v651 = vshrl.u32 %v650, 7
        %v652 = vsub.s32 0, %v651
        %v653 = vrot.slane %v619, %v652
        %v655 = vmul.f32 %v647, %v653
        %v656 = vmul.f32 %v648, %v653
        %v658 = vlaneseq
        %v659 = vshrl.u32 %v658, 7
        %v660 = vsub.s32 0, %v659
        %v661 = vrot.slane %v620, %v660
        %v663 = vadd.f32 %v655, %v661
        %v664 = vadd.f32 %v656, %v661
        %v665 = vld [vmem:[#allocation8] sm:$0xff]
        %v666 = vld [vmem:[#allocation8 + $0x8] sm:$0xff]
        %v667 = vld [vmem:[#allocation8 + $0x10] sm:$0xff]
        %v668 = vld [vmem:[#allocation8 + $0x18] sm:$0xff]
        %v669 = vld [vmem:[#allocation10] sm:$0x1]
        %v671 = vlaneseq
        %v672 = vshrl.u32 %v671, 7
        %v673 = vsub.s32 0, %v672
        %v674 = vrot.slane %v669, %v673
        %v677 = vsel %vm621, %v663, 0
        %v680 = vsel %vm621, %v664, 0
        %682 = vmatprep.subr.mxu0 0.0
        %683 = vmatpush1.msra.mxu0 %v665
        %684 = vmatprep.subr.mxu0 0.0
        %685 = vmatpush1.msra.mxu0 %v666
        %686 = vmatprep.subr.mxu0 0.0
        %687 = vmatpush1.msra.mxu0 %v667
        %688 = vmatprep.subr.mxu0 0.0
        %689 = vmatpush1.msra.mxu0 %v668
        %690 = vmatprep.subr.mxu0 0.0
        %691 = vmatpush1.msra.mxu0 0.0
        %692 = vmatprep.subr.mxu0 0.0
        %693 = vmatpush1.msra.mxu0 0.0
        %694 = vmatprep.subr.mxu0 0.0
        %695 = vmatpush1.msra.mxu0 0.0
        %696 = vmatprep.subr.mxu0 0.0
        %697 = vmatpush1.msra.mxu0 0.0
        %698 = vmatprep.subr.mxu0 0.0
        %699 = vmatpush1.msra.mxu0 0.0
        %700 = vmatprep.subr.mxu0 0.0
        %701 = vmatpush1.msra.mxu0 0.0
        %702 = vmatprep.subr.mxu0 0.0
        %703 = vmatpush1.msra.mxu0 0.0
        %704 = vmatprep.subr.mxu0 0.0
        %705 = vmatpush1.msra.mxu0 0.0
        %706 = vmatprep.subr.mxu0 0.0
        %707 = vmatpush1.msra.mxu0 0.0
        %708 = vmatprep.subr.mxu0 0.0
        %709 = vmatpush1.msra.mxu0 0.0
        %710 = vmatprep.subr.mxu0 0.0
        %711 = vmatpush1.msra.mxu0 0.0
        %712 = vmatprep.subr.mxu0 0.0
        %713 = vmatpush1.msra.mxu0 0.0
        %714 = vmatprep.subr.mxu0 0.0
        %715 = vmatpush1.msra.mxu0 0.0
        %716 = vmatprep.subr.mxu0 0.0
        %717 = vmatpush1.msra.mxu0 0.0
        %718 = vmatprep.subr.mxu0 0.0
        %719 = vmatpush1.msra.mxu0 0.0
        %720 = vmatprep.subr.mxu0 0.0
        %721 = vmatpush1.msra.mxu0 0.0
        %722 = vmatprep.subr.mxu0 0.0
        %723 = vmatpush1.msra.mxu0 0.0
        %724 = vmatprep.subr.mxu0 0.0
        %725 = vmatpush1.msra.mxu0 0.0
        %726 = vmatprep.subr.mxu0 0.0
        %727 = vmatpush1.msra.mxu0 0.0
        %728 = vmatprep.subr.mxu0 0.0
        %729 = vmatpush1.msra.mxu0 0.0
        %730 = vmatprep.subr.mxu0 0.0
        %731 = vmatpush1.msra.mxu0 0.0
        %732 = vmatprep.subr.mxu0 0.0
        %733 = vmatpush1.msra.mxu0 0.0
        %734 = vmatprep.subr.mxu0 0.0
        %735 = vmatpush1.msra.mxu0 0.0
        %736 = vmatprep.subr.mxu0 0.0
        %737 = vmatpush1.msra.mxu0 0.0
        %738 = vmatprep.subr.mxu0 0.0
        %739 = vmatpush1.msra.mxu0 0.0
        %740 = vmatprep.subr.mxu0 0.0
        %741 = vmatpush1.msra.mxu0 0.0
        %742 = vmatprep.subr.mxu0 0.0
        %743 = vmatpush1.msra.mxu0 0.0
        %744 = vmatprep.subr.mxu0 0.0
        %745 = vmatpush1.msra.mxu0 0.0
        %746 = vmatprep.mubr.f32.mxu0 0.0
        %747 = vmatmul.mubr.f32.gmra.mrb[0].mxu0 %v677
        %v748 = vpop.f32.mrb[0].mxu0
        %v749 = vadd.f32 %v674, %v748
        %v750 = vpop.f32.mrb[0].mxu0
        %751 = vmatprep.mubr.f32.mxu0 0.0
        %752 = vmatmul.mubr.f32.gmra.mrb[0].mxu0 %v680
        %v753 = vpop.f32.mrb[0].mxu0
        %v754 = vadd.f32 %v674, %v753
        %v755 = vpop.f32.mrb[0].mxu0
        %756 = vdwg.mxu0
        %761 = vrot.lane.b32.xlu0 %v665, 96
        %v762 = vpop.permute.xlu0 %761
        %763 = vrot.lane.b32.xlu0 %v666, 96
        %v764 = vpop.permute.xlu0 %763
        %765 = vrot.lane.b32.xlu0 %v667, 96
        %v766 = vpop.permute.xlu0 %765
        %767 = vrot.lane.b32.xlu0 %v668, 96
        %v768 = vpop.permute.xlu0 %767
        %773 = vrot.lane.b32.xlu0 %v674, 96
        %v774 = vpop.permute.xlu0 %773
        %776 = vmatprep.subr.mxu0 0.0
        %777 = vmatpush1.msra.mxu0 %v762
        %778 = vmatprep.subr.mxu0 0.0
        %779 = vmatpush1.msra.mxu0 %v764
        %780 = vmatprep.subr.mxu0 0.0
        %781 = vmatpush1.msra.mxu0 %v766
        %782 = vmatprep.subr.mxu0 0.0
        %783 = vmatpush1.msra.mxu0 %v768
        %784 = vmatprep.subr.mxu0 0.0
        %785 = vmatpush1.msra.mxu0 0.0
        %786 = vmatprep.subr.mxu0 0.0
        %787 = vmatpush1.msra.mxu0 0.0
        %788 = vmatprep.subr.mxu0 0.0
        %789 = vmatpush1.msra.mxu0 0.0
        %790 = vmatprep.subr.mxu0 0.0
        %791 = vmatpush1.msra.mxu0 0.0
        %792 = vmatprep.subr.mxu0 0.0
        %793 = vmatpush1.msra.mxu0 0.0
        %794 = vmatprep.subr.mxu0 0.0
        %795 = vmatpush1.msra.mxu0 0.0
        %796 = vmatprep.subr.mxu0 0.0
        %797 = vmatpush1.msra.mxu0 0.0
        %798 = vmatprep.subr.mxu0 0.0
        %799 = vmatpush1.msra.mxu0 0.0
        %800 = vmatprep.subr.mxu0 0.0
        %801 = vmatpush1.msra.mxu0 0.0
        %802 = vmatprep.subr.mxu0 0.0
        %803 = vmatpush1.msra.mxu0 0.0
        %804 = vmatprep.subr.mxu0 0.0
        %805 = vmatpush1.msra.mxu0 0.0
        %806 = vmatprep.subr.mxu0 0.0
        %807 = vmatpush1.msra.mxu0 0.0
        %808 = vmatprep.subr.mxu0 0.0
        %809 = vmatpush1.msra.mxu0 0.0
        %810 = vmatprep.subr.mxu0 0.0
        %811 = vmatpush1.msra.mxu0 0.0
        %812 = vmatprep.subr.mxu0 0.0
        %813 = vmatpush1.msra.mxu0 0.0
        %814 = vmatprep.subr.mxu0 0.0
        %815 = vmatpush1.msra.mxu0 0.0
        %816 = vmatprep.subr.mxu0 0.0
        %817 = vmatpush1.msra.mxu0 0.0
        %818 = vmatprep.subr.mxu0 0.0
        %819 = vmatpush1.msra.mxu0 0.0
        %820 = vmatprep.subr.mxu0 0.0
        %821 = vmatpush1.msra.mxu0 0.0
        %822 = vmatprep.subr.mxu0 0.0
        %823 = vmatpush1.msra.mxu0 0.0
        %824 = vmatprep.subr.mxu0 0.0
        %825 = vmatpush1.msra.mxu0 0.0
        %826 = vmatprep.subr.mxu0 0.0
        %827 = vmatpush1.msra.mxu0 0.0
        %828 = vmatprep.subr.mxu0 0.0
        %829 = vmatpush1.msra.mxu0 0.0
        %830 = vmatprep.subr.mxu0 0.0
        %831 = vmatpush1.msra.mxu0 0.0
        %832 = vmatprep.subr.mxu0 0.0
        %833 = vmatpush1.msra.mxu0 0.0
        %834 = vmatprep.subr.mxu0 0.0
        %835 = vmatpush1.msra.mxu0 0.0
        %836 = vmatprep.subr.mxu0 0.0
        %837 = vmatpush1.msra.mxu0 0.0
        %838 = vmatprep.subr.mxu0 0.0
        %839 = vmatpush1.msra.mxu0 0.0
        %840 = vmatprep.mubr.f32.mxu0 0.0
        %841 = vmatmul.mubr.f32.gmra.mrb[0].mxu0 %v677
        %v842 = vpop.f32.mrb[0].mxu0
        %v843 = vadd.f32 %v774, %v842
        %v844 = vpop.f32.mrb[0].mxu0
        %845 = vmatprep.mubr.f32.mxu0 0.0
        %846 = vmatmul.mubr.f32.gmra.mrb[0].mxu0 %v680
        %v847 = vpop.f32.mrb[0].mxu0
        %v848 = vadd.f32 %v774, %v847
        %v849 = vpop.f32.mrb[0].mxu0
        %850 = vdwg.mxu0
        %851 = vrot.lane.b32.xlu0 %v665, 64
        %v852 = vpop.permute.xlu0 %851
        %853 = vrot.lane.b32.xlu0 %v666, 64
        %v854 = vpop.permute.xlu0 %853
        %855 = vrot.lane.b32.xlu0 %v667, 64
        %v856 = vpop.permute.xlu0 %855
        %857 = vrot.lane.b32.xlu0 %v668, 64
        %v858 = vpop.permute.xlu0 %857
        %863 = vrot.lane.b32.xlu0 %v674, 64
        %v864 = vpop.permute.xlu0 %863
        %866 = vmatprep.subr.mxu0 0.0
        %867 = vmatpush1.msra.mxu0 %v852
        %868 = vmatprep.subr.mxu0 0.0
        %869 = vmatpush1.msra.mxu0 %v854
        %870 = vmatprep.subr.mxu0 0.0
        %871 = vmatpush1.msra.mxu0 %v856
        %872 = vmatprep.subr.mxu0 0.0
        %873 = vmatpush1.msra.mxu0 %v858
        %874 = vmatprep.subr.mxu0 0.0
        %875 = vmatpush1.msra.mxu0 0.0
        %876 = vmatprep.subr.mxu0 0.0
        %877 = vmatpush1.msra.mxu0 0.0
        %878 = vmatprep.subr.mxu0 0.0
        %879 = vmatpush1.msra.mxu0 0.0
        %880 = vmatprep.subr.mxu0 0.0
        %881 = vmatpush1.msra.mxu0 0.0
        %882 = vmatprep.subr.mxu0 0.0
        %883 = vmatpush1.msra.mxu0 0.0
        %884 = vmatprep.subr.mxu0 0.0
        %885 = vmatpush1.msra.mxu0 0.0
        %886 = vmatprep.subr.mxu0 0.0
        %887 = vmatpush1.msra.mxu0 0.0
        %888 = vmatprep.subr.mxu0 0.0
        %889 = vmatpush1.msra.mxu0 0.0
        %890 = vmatprep.subr.mxu0 0.0
        %891 = vmatpush1.msra.mxu0 0.0
        %892 = vmatprep.subr.mxu0 0.0
        %893 = vmatpush1.msra.mxu0 0.0
        %894 = vmatprep.subr.mxu0 0.0
        %895 = vmatpush1.msra.mxu0 0.0
        %896 = vmatprep.subr.mxu0 0.0
        %897 = vmatpush1.msra.mxu0 0.0
        %898 = vmatprep.subr.mxu0 0.0
        %899 = vmatpush1.msra.mxu0 0.0
        %900 = vmatprep.subr.mxu0 0.0
        %901 = vmatpush1.msra.mxu0 0.0
        %902 = vmatprep.subr.mxu0 0.0
        %903 = vmatpush1.msra.mxu0 0.0
        %904 = vmatprep.subr.mxu0 0.0
        %905 = vmatpush1.msra.mxu0 0.0
        %906 = vmatprep.subr.mxu0 0.0
        %907 = vmatpush1.msra.mxu0 0.0
        %908 = vmatprep.subr.mxu0 0.0
        %909 = vmatpush1.msra.mxu0 0.0
        %910 = vmatprep.subr.mxu0 0.0
        %911 = vmatpush1.msra.mxu0 0.0
        %912 = vmatprep.subr.mxu0 0.0
        %913 = vmatpush1.msra.mxu0 0.0
        %914 = vmatprep.subr.mxu0 0.0
        %915 = vmatpush1.msra.mxu0 0.0
        %916 = vmatprep.subr.mxu0 0.0
        %917 = vmatpush1.msra.mxu0 0.0
        %918 = vmatprep.subr.mxu0 0.0
        %919 = vmatpush1.msra.mxu0 0.0
        %920 = vmatprep.subr.mxu0 0.0
        %921 = vmatpush1.msra.mxu0 0.0
        %922 = vmatprep.subr.mxu0 0.0
        %923 = vmatpush1.msra.mxu0 0.0
        %924 = vmatprep.subr.mxu0 0.0
        %925 = vmatpush1.msra.mxu0 0.0
        %926 = vmatprep.subr.mxu0 0.0
        %927 = vmatpush1.msra.mxu0 0.0
        %928 = vmatprep.subr.mxu0 0.0
        %929 = vmatpush1.msra.mxu0 0.0
        %930 = vmatprep.mubr.f32.mxu0 0.0
        %931 = vmatmul.mubr.f32.gmra.mrb[0].mxu0 %v677
        %v932 = vpop.f32.mrb[0].mxu0
        %v933 = vadd.f32 %v864, %v932
        %v934 = vpop.f32.mrb[0].mxu0
        %935 = vmatprep.mubr.f32.mxu0 0.0
        %936 = vmatmul.mubr.f32.gmra.mrb[0].mxu0 %v680
        %v937 = vpop.f32.mrb[0].mxu0
        %v938 = vadd.f32 %v864, %v937
        %v939 = vpop.f32.mrb[0].mxu0
        %940 = vdwg.mxu0
        %v941 = vlaneseq
        %v942 = vand.u32 %v941, 127
        %vm943 = vcmp.lt.s32.totalorder %v942, 10
        %v944 = vsel %vm943, 0.0, -1e+30
        %vm945 = vcmask 64512
        %v947 = vsel %vm945, %v749, 0
        %v950 = vsel %vm945, %v754, 0
        %v953 = vsel %vm945, %v843, 0
        %v956 = vsel %vm945, %v848, 0
        %958 = vmatprep.subr.mxu0 0.0
        %959 = vmatpush1.xpose.msra.mxu0 %v953
        %960 = vmatprep.subr.mxu0 0.0
        %961 = vmatpush1.xpose.msra.mxu0 %v956
        %962 = vmatprep.subr.mxu0 0.0
        %963 = vmatpush1.xpose.msra.mxu0 0.0
        %964 = vmatprep.subr.mxu0 0.0
        %965 = vmatpush1.xpose.msra.mxu0 0.0
        %966 = vmatprep.subr.mxu0 0.0
        %967 = vmatpush1.xpose.msra.mxu0 0.0
        %968 = vmatprep.subr.mxu0 0.0
        %969 = vmatpush1.xpose.msra.mxu0 0.0
        %970 = vmatprep.subr.mxu0 0.0
        %971 = vmatpush1.xpose.msra.mxu0 0.0
        %972 = vmatprep.subr.mxu0 0.0
        %973 = vmatpush1.xpose.msra.mxu0 0.0
        %974 = vmatprep.subr.mxu0 0.0
        %975 = vmatpush1.xpose.msra.mxu0 0.0
        %976 = vmatprep.subr.mxu0 0.0
        %977 = vmatpush1.xpose.msra.mxu0 0.0
        %978 = vmatprep.subr.mxu0 0.0
        %979 = vmatpush1.xpose.msra.mxu0 0.0
        %980 = vmatprep.subr.mxu0 0.0
        %981 = vmatpush1.xpose.msra.mxu0 0.0
        %982 = vmatprep.subr.mxu0 0.0
        %983 = vmatpush1.xpose.msra.mxu0 0.0
        %984 = vmatprep.subr.mxu0 0.0
        %985 = vmatpush1.xpose.msra.mxu0 0.0
        %986 = vmatprep.subr.mxu0 0.0
        %987 = vmatpush1.xpose.msra.mxu0 0.0
        %988 = vmatprep.subr.mxu0 0.0
        %989 = vmatpush1.xpose.msra.mxu0 0.0
        %990 = vmatprep.subr.mxu0 0.0
        %991 = vmatpush1.xpose.msra.mxu0 0.0
        %992 = vmatprep.subr.mxu0 0.0
        %993 = vmatpush1.xpose.msra.mxu0 0.0
        %994 = vmatprep.subr.mxu0 0.0
        %995 = vmatpush1.xpose.msra.mxu0 0.0
        %996 = vmatprep.subr.mxu0 0.0
        %997 = vmatpush1.xpose.msra.mxu0 0.0
        %998 = vmatprep.subr.mxu0 0.0
        %999 = vmatpush1.xpose.msra.mxu0 0.0
        %1000 = vmatprep.subr.mxu0 0.0
        %1001 = vmatpush1.xpose.msra.mxu0 0.0
        %1002 = vmatprep.subr.mxu0 0.0
        %1003 = vmatpush1.xpose.msra.mxu0 0.0
        %1004 = vmatprep.subr.mxu0 0.0
        %1005 = vmatpush1.xpose.msra.mxu0 0.0
        %1006 = vmatprep.subr.mxu0 0.0
        %1007 = vmatpush1.xpose.msra.mxu0 0.0
        %1008 = vmatprep.subr.mxu0 0.0
        %1009 = vmatpush1.xpose.msra.mxu0 0.0
        %1010 = vmatprep.subr.mxu0 0.0
        %1011 = vmatpush1.xpose.msra.mxu0 0.0
        %1012 = vmatprep.subr.mxu0 0.0
        %1013 = vmatpush1.xpose.msra.mxu0 0.0
        %1014 = vmatprep.subr.mxu0 0.0
        %1015 = vmatpush1.xpose.msra.mxu0 0.0
        %1016 = vmatprep.subr.mxu0 0.0
        %1017 = vmatpush1.xpose.msra.mxu0 0.0
        %1018 = vmatprep.subr.mxu0 0.0
        %1019 = vmatpush1.xpose.msra.mxu0 0.0
        %1020 = vmatprep.subr.mxu0 0.0
        %1021 = vmatpush1.xpose.msra.mxu0 0.0
        %1022 = vmatprep.mubr.f32.mxu0 0.0
        %1023 = vmatmul.mubr.f32.gmra.mrb[0].mxu0 %v947
        %v1024 = vpop.f32.mrb[0].mxu0
        %v1025 = vadd.f32 %v944, %v1024
        %v1026 = vpop.f32.mrb[0].mxu0
        %1027 = vmatprep.mubr.f32.mxu0 0.0
        %1028 = vmatmul.mubr.f32.gmra.mrb[0].mxu0 %v950
        %v1029 = vpop.f32.mrb[0].mxu0
        %v1030 = vadd.f32 %v944, %v1029
        %v1031 = vpop.f32.mrb[0].mxu0
        %1032 = vdwg.mxu0
        %vm1033 = vcmask 130048
        %v1034 = vsel %vm1033, %v1025, -inf
        %1035 = vmax.xlane.f32.xlu0 %v1034
        %v1036 = vpop.xlane.xlu0 %1035
        %v1037 = vsel %vm1033, %v1030, -inf
        %1038 = vmax.xlane.f32.xlu0 %v1037
        %v1039 = vpop.xlane.xlu0 %1038
        %v1040 = vsub.f32 %v1025, %v1036
        %v1041 = vsub.f32 %v1030, %v1039
        %v1042 = vmul.f32 %v1040, 1.442695
        %v1043 = vpow.pop %v1042
        %v1044 = vmul.f32 %v1041, 1.442695
        %v1045 = vpow.pop %v1044
        %v1046 = vsel %vm1033, %v1043, 0.0
        %1047 = vadd.xlane.f32.xlu0 %v1046
        %v1048 = vpop.xlane.xlu0 %1047
        %v1049 = vsel %vm1033, %v1045, 0.0
        %1050 = vadd.xlane.f32.xlu0 %v1049
        %v1051 = vpop.xlane.xlu0 %1050
        %v1052 = vrcp.pop %v1048
        %v1053 = vrcp.pop %v1051
        %v1054 = vmul.f32 %v1043, %v1052
        %v1055 = vmul.f32 %v1045, %v1053
        %v1057 = vsel %vm1033, %v1054, 0
        %v1060 = vsel %vm1033, %v1055, 0
        %1062 = vmatprep.subr.mxu0 0.0
        %1063 = vmatpush1.msra.mxu0 %v933
        %1064 = vmatprep.subr.mxu0 0.0
        %1065 = vmatpush1.msra.mxu0 %v938
        %1066 = vmatprep.subr.mxu0 0.0
        %1067 = vmatpush1.msra.mxu0 0.0
        %1068 = vmatprep.subr.mxu0 0.0
        %1069 = vmatpush1.msra.mxu0 0.0
        %1070 = vmatprep.subr.mxu0 0.0
        %1071 = vmatpush1.msra.mxu0 0.0
        %1072 = vmatprep.subr.mxu0 0.0
        %1073 = vmatpush1.msra.mxu0 0.0
        %1074 = vmatprep.subr.mxu0 0.0
        %1075 = vmatpush1.msra.mxu0 0.0
        %1076 = vmatprep.subr.mxu0 0.0
        %1077 = vmatpush1.msra.mxu0 0.0
        %1078 = vmatprep.subr.mxu0 0.0
        %1079 = vmatpush1.msra.mxu0 0.0
        %1080 = vmatprep.subr.mxu0 0.0
        %1081 = vmatpush1.msra.mxu0 0.0
        %1082 = vmatprep.subr.mxu0 0.0
        %1083 = vmatpush1.msra.mxu0 0.0
        %1084 = vmatprep.subr.mxu0 0.0
        %1085 = vmatpush1.msra.mxu0 0.0
        %1086 = vmatprep.subr.mxu0 0.0
        %1087 = vmatpush1.msra.mxu0 0.0
        %1088 = vmatprep.subr.mxu0 0.0
        %1089 = vmatpush1.msra.mxu0 0.0
        %1090 = vmatprep.subr.mxu0 0.0
        %1091 = vmatpush1.msra.mxu0 0.0
        %1092 = vmatprep.subr.mxu0 0.0
        %1093 = vmatpush1.msra.mxu0 0.0
        %1094 = vmatprep.subr.mxu0 0.0
        %1095 = vmatpush1.msra.mxu0 0.0
        %1096 = vmatprep.subr.mxu0 0.0
        %1097 = vmatpush1.msra.mxu0 0.0
        %1098 = vmatprep.subr.mxu0 0.0
        %1099 = vmatpush1.msra.mxu0 0.0
        %1100 = vmatprep.subr.mxu0 0.0
        %1101 = vmatpush1.msra.mxu0 0.0
        %1102 = vmatprep.subr.mxu0 0.0
        %1103 = vmatpush1.msra.mxu0 0.0
        %1104 = vmatprep.subr.mxu0 0.0
        %1105 = vmatpush1.msra.mxu0 0.0
        %1106 = vmatprep.subr.mxu0 0.0
        %1107 = vmatpush1.msra.mxu0 0.0
        %1108 = vmatprep.subr.mxu0 0.0
        %1109 = vmatpush1.msra.mxu0 0.0
        %1110 = vmatprep.subr.mxu0 0.0
        %1111 = vmatpush1.msra.mxu0 0.0
        %1112 = vmatprep.subr.mxu0 0.0
        %1113 = vmatpush1.msra.mxu0 0.0
        %1114 = vmatprep.subr.mxu0 0.0
        %1115 = vmatpush1.msra.mxu0 0.0
        %1116 = vmatprep.subr.mxu0 0.0
        %1117 = vmatpush1.msra.mxu0 0.0
        %1118 = vmatprep.subr.mxu0 0.0
        %1119 = vmatpush1.msra.mxu0 0.0
        %1120 = vmatprep.subr.mxu0 0.0
        %1121 = vmatpush1.msra.mxu0 0.0
        %1122 = vmatprep.subr.mxu0 0.0
        %1123 = vmatpush1.msra.mxu0 0.0
        %1124 = vmatprep.subr.mxu0 0.0
        %1125 = vmatpush1.msra.mxu0 0.0
        %1126 = vmatprep.mubr.f32.mxu0 0.0
        %1127 = vmatmul.mubr.f32.gmra.mrb[0].mxu0 %v1057
        %v1128 = vpop.f32.mrb[0].mxu0
        %v1129 = vadd.f32 0.0, %v1128
        %v1130 = vpop.f32.mrb[0].mxu0
        %1131 = vmatprep.mubr.f32.mxu0 0.0
        %1132 = vmatmul.mubr.f32.gmra.mrb[0].mxu0 %v1060
        %v1133 = vpop.f32.mrb[0].mxu0
        %v1134 = vadd.f32 0.0, %v1133
        %v1135 = vpop.f32.mrb[0].mxu0
        %1136 = vdwg.mxu0
        %v1137 = vld [vmem:[#allocation11] sm:$0xff]
        %1138 = vrot.lane.b32.xlu0 %v749, 120
        %v1139 = vpop.permute.xlu0 %1138
        %1140 = vrot.lane.b32.xlu0 %v754, 120
        %v1141 = vpop.permute.xlu0 %1140
        %1142 = vrot.lane.b32.xlu0 %v843, 120
        %v1143 = vpop.permute.xlu0 %1142
        %1144 = vrot.lane.b32.xlu0 %v848, 120
        %v1145 = vpop.permute.xlu0 %1144
        %v1146 = vsel %vm945, %v1139, 0
        %v1148 = vsel %vm945, %v1141, 0
        %v1150 = vsel %vm945, %v1143, 0
        %v1152 = vsel %vm945, %v1145, 0
        %1154 = vmatprep.subr.mxu0 0.0
        %1155 = vmatpush1.xpose.msra.mxu0 %v1150
        %1156 = vmatprep.subr.mxu0 0.0
        %1157 = vmatpush1.xpose.msra.mxu0 %v1152
        %1158 = vmatprep.subr.mxu0 0.0
        %1159 = vmatpush1.xpose.msra.mxu0 0.0
        %1160 = vmatprep.subr.mxu0 0.0
        %1161 = vmatpush1.xpose.msra.mxu0 0.0
        %1162 = vmatprep.subr.mxu0 0.0
        %1163 = vmatpush1.xpose.msra.mxu0 0.0
        %1164 = vmatprep.subr.mxu0 0.0
        %1165 = vmatpush1.xpose.msra.mxu0 0.0
        %1166 = vmatprep.subr.mxu0 0.0
        %1167 = vmatpush1.xpose.msra.mxu0 0.0
        %1168 = vmatprep.subr.mxu0 0.0
        %1169 = vmatpush1.xpose.msra.mxu0 0.0
        %1170 = vmatprep.subr.mxu0 0.0
        %1171 = vmatpush1.xpose.msra.mxu0 0.0
        %1172 = vmatprep.subr.mxu0 0.0
        %1173 = vmatpush1.xpose.msra.mxu0 0.0
        %1174 = vmatprep.subr.mxu0 0.0
        %1175 = vmatpush1.xpose.msra.mxu0 0.0
        %1176 = vmatprep.subr.mxu0 0.0
        %1177 = vmatpush1.xpose.msra.mxu0 0.0
        %1178 = vmatprep.subr.mxu0 0.0
        %1179 = vmatpush1.xpose.msra.mxu0 0.0
        %1180 = vmatprep.subr.mxu0 0.0
        %1181 = vmatpush1.xpose.msra.mxu0 0.0
        %1182 = vmatprep.subr.mxu0 0.0
        %1183 = vmatpush1.xpose.msra.mxu0 0.0
        %1184 = vmatprep.subr.mxu0 0.0
        %1185 = vmatpush1.xpose.msra.mxu0 0.0
        %1186 = vmatprep.subr.mxu0 0.0
        %1187 = vmatpush1.xpose.msra.mxu0 0.0
        %1188 = vmatprep.subr.mxu0 0.0
        %1189 = vmatpush1.xpose.msra.mxu0 0.0
        %1190 = vmatprep.subr.mxu0 0.0
        %1191 = vmatpush1.xpose.msra.mxu0 0.0
        %1192 = vmatprep.subr.mxu0 0.0
        %1193 = vmatpush1.xpose.msra.mxu0 0.0
        %1194 = vmatprep.subr.mxu0 0.0
        %1195 = vmatpush1.xpose.msra.mxu0 0.0
        %1196 = vmatprep.subr.mxu0 0.0
        %1197 = vmatpush1.xpose.msra.mxu0 0.0
        %1198 = vmatprep.subr.mxu0 0.0
        %1199 = vmatpush1.xpose.msra.mxu0 0.0
        %1200 = vmatprep.subr.mxu0 0.0
        %1201 = vmatpush1.xpose.msra.mxu0 0.0
        %1202 = vmatprep.subr.mxu0 0.0
        %1203 = vmatpush1.xpose.msra.mxu0 0.0
        %1204 = vmatprep.subr.mxu0 0.0
        %1205 = vmatpush1.xpose.msra.mxu0 0.0
        %1206 = vmatprep.subr.mxu0 0.0
        %1207 = vmatpush1.xpose.msra.mxu0 0.0
        %1208 = vmatprep.subr.mxu0 0.0
        %1209 = vmatpush1.xpose.msra.mxu0 0.0
        %1210 = vmatprep.subr.mxu0 0.0
        %1211 = vmatpush1.xpose.msra.mxu0 0.0
        %1212 = vmatprep.subr.mxu0 0.0
        %1213 = vmatpush1.xpose.msra.mxu0 0.0
        %1214 = vmatprep.subr.mxu0 0.0
        %1215 = vmatpush1.xpose.msra.mxu0 0.0
        %1216 = vmatprep.subr.mxu0 0.0
        %1217 = vmatpush1.xpose.msra.mxu0 0.0
        %1218 = vmatprep.mubr.f32.mxu0 0.0
        %1219 = vmatmul.mubr.f32.gmra.mrb[0].mxu0 %v1146
        %v1220 = vpop.f32.mrb[0].mxu0
        %v1221 = vadd.f32 %v944, %v1220
        %v1222 = vpop.f32.mrb[0].mxu0
        %1223 = vmatprep.mubr.f32.mxu0 0.0
        %1224 = vmatmul.mubr.f32.gmra.mrb[0].mxu0 %v1148
        %v1225 = vpop.f32.mrb[0].mxu0
        %v1226 = vadd.f32 %v944, %v1225
        %v1227 = vpop.f32.mrb[0].mxu0
        %1228 = vdwg.mxu0
        %v1229 = vsel %vm1033, %v1221, -inf
        %1230 = vmax.xlane.f32.xlu0 %v1229
        %v1231 = vpop.xlane.xlu0 %1230
        %v1232 = vsel %vm1033, %v1226, -inf
        %1233 = vmax.xlane.f32.xlu0 %v1232
        %v1234 = vpop.xlane.xlu0 %1233
        %v1235 = vsub.f32 %v1221, %v1231
        %v1236 = vsub.f32 %v1226, %v1234
        %v1237 = vmul.f32 %v1235, 1.442695
        %v1238 = vpow.pop %v1237
        %v1239 = vmul.f32 %v1236, 1.442695
        %v1240 = vpow.pop %v1239
        %v1241 = vsel %vm1033, %v1238, 0.0
        %1242 = vadd.xlane.f32.xlu0 %v1241
        %v1243 = vpop.xlane.xlu0 %1242
        %v1244 = vsel %vm1033, %v1240, 0.0
        %1245 = vadd.xlane.f32.xlu0 %v1244
        %v1246 = vpop.xlane.xlu0 %1245
        %v1247 = vrcp.pop %v1243
        %v1248 = vrcp.pop %v1246
        %v1249 = vmul.f32 %v1238, %v1247
        %v1250 = vmul.f32 %v1240, %v1248
        %1253 = vrot.lane.b32.xlu0 %v933, 120
        %v1254 = vpop.permute.xlu0 %1253
        %1255 = vrot.lane.b32.xlu0 %v938, 120
        %v1256 = vpop.permute.xlu0 %1255
        %v1260 = vsel %vm1033, %v1249, 0
        %v1263 = vsel %vm1033, %v1250, 0
        %1265 = vmatprep.subr.mxu0 0.0
        %1266 = vmatpush1.msra.mxu0 %v1254
        %1267 = vmatprep.subr.mxu0 0.0
        %1268 = vmatpush1.msra.mxu0 %v1256
        %1269 = vmatprep.subr.mxu0 0.0
        %1270 = vmatpush1.msra.mxu0 0.0
        %1271 = vmatprep.subr.mxu0 0.0
        %1272 = vmatpush1.msra.mxu0 0.0
        %1273 = vmatprep.subr.mxu0 0.0
        %1274 = vmatpush1.msra.mxu0 0.0
        %1275 = vmatprep.subr.mxu0 0.0
        %1276 = vmatpush1.msra.mxu0 0.0
        %1277 = vmatprep.subr.mxu0 0.0
        %1278 = vmatpush1.msra.mxu0 0.0
        %1279 = vmatprep.subr.mxu0 0.0
        %1280 = vmatpush1.msra.mxu0 0.0
        %1281 = vmatprep.subr.mxu0 0.0
        %1282 = vmatpush1.msra.mxu0 0.0
        %1283 = vmatprep.subr.mxu0 0.0
        %1284 = vmatpush1.msra.mxu0 0.0
        %1285 = vmatprep.subr.mxu0 0.0
        %1286 = vmatpush1.msra.mxu0 0.0
        %1287 = vmatprep.subr.mxu0 0.0
        %1288 = vmatpush1.msra.mxu0 0.0
        %1289 = vmatprep.subr.mxu0 0.0
        %1290 = vmatpush1.msra.mxu0 0.0
        %1291 = vmatprep.subr.mxu0 0.0
        %1292 = vmatpush1.msra.mxu0 0.0
        %1293 = vmatprep.subr.mxu0 0.0
        %1294 = vmatpush1.msra.mxu0 0.0
        %1295 = vmatprep.subr.mxu0 0.0
        %1296 = vmatpush1.msra.mxu0 0.0
        %1297 = vmatprep.subr.mxu0 0.0
        %1298 = vmatpush1.msra.mxu0 0.0
        %1299 = vmatprep.subr.mxu0 0.0
        %1300 = vmatpush1.msra.mxu0 0.0
        %1301 = vmatprep.subr.mxu0 0.0
        %1302 = vmatpush1.msra.mxu0 0.0
        %1303 = vmatprep.subr.mxu0 0.0
        %1304 = vmatpush1.msra.mxu0 0.0
        %1305 = vmatprep.subr.mxu0 0.0
        %1306 = vmatpush1.msra.mxu0 0.0
        %1307 = vmatprep.subr.mxu0 0.0
        %1308 = vmatpush1.msra.mxu0 0.0
        %1309 = vmatprep.subr.mxu0 0.0
        %1310 = vmatpush1.msra.mxu0 0.0
        %1311 = vmatprep.subr.mxu0 0.0
        %1312 = vmatpush1.msra.mxu0 0.0
        %1313 = vmatprep.subr.mxu0 0.0
        %1314 = vmatpush1.msra.mxu0 0.0
        %1315 = vmatprep.subr.mxu0 0.0
        %1316 = vmatpush1.msra.mxu0 0.0
        %1317 = vmatprep.subr.mxu0 0.0
        %1318 = vmatpush1.msra.mxu0 0.0
        %1319 = vmatprep.subr.mxu0 0.0
        %1320 = vmatpush1.msra.mxu0 0.0
        %1321 = vmatprep.subr.mxu0 0.0
        %1322 = vmatpush1.msra.mxu0 0.0
        %1323 = vmatprep.subr.mxu0 0.0
        %1324 = vmatpush1.msra.mxu0 0.0
        %1325 = vmatprep.subr.mxu0 0.0
        %1326 = vmatpush1.msra.mxu0 0.0
        %1327 = vmatprep.subr.mxu0 0.0
        %1328 = vmatpush1.msra.mxu0 0.0
        %1329 = vmatprep.mubr.f32.mxu0 0.0
        %1330 = vmatmul.mubr.f32.gmra.mrb[0].mxu0 %v1260
        %v1331 = vpop.f32.mrb[0].mxu0
        %v1332 = vadd.f32 0.0, %v1331
        %v1333 = vpop.f32.mrb[0].mxu0
        %1334 = vmatprep.mubr.f32.mxu0 0.0
        %1335 = vmatmul.mubr.f32.gmra.mrb[0].mxu0 %v1263
        %v1336 = vpop.f32.mrb[0].mxu0
        %v1337 = vadd.f32 0.0, %v1336
        %v1338 = vpop.f32.mrb[0].mxu0
        %1339 = vdwg.mxu0
        %v1340 = vld [vmem:[#allocation11 + $0x8] sm:$0xff]
        %v1342 = vsel %vm945, %v1332, 0
        %v1345 = vsel %vm945, %v1337, 0
        %1347 = vmatprep.subr.mxu0 0.0
        %1348 = vmatpush1.msra.mxu0 %v1340
        %1349 = vmatprep.subr.mxu0 0.0
        %1350 = vmatpush1.msra.mxu0 0.0
        %1351 = vmatprep.subr.mxu0 0.0
        %1352 = vmatpush1.msra.mxu0 0.0
        %1353 = vmatprep.subr.mxu0 0.0
        %1354 = vmatpush1.msra.mxu0 0.0
        %1355 = vmatprep.subr.mxu0 0.0
        %1356 = vmatpush1.msra.mxu0 0.0
        %1357 = vmatprep.subr.mxu0 0.0
        %1358 = vmatpush1.msra.mxu0 0.0
        %1359 = vmatprep.subr.mxu0 0.0
        %1360 = vmatpush1.msra.mxu0 0.0
        %1361 = vmatprep.subr.mxu0 0.0
        %1362 = vmatpush1.msra.mxu0 0.0
        %1363 = vmatprep.subr.mxu0 0.0
        %1364 = vmatpush1.msra.mxu0 0.0
        %1365 = vmatprep.subr.mxu0 0.0
        %1366 = vmatpush1.msra.mxu0 0.0
        %1367 = vmatprep.subr.mxu0 0.0
        %1368 = vmatpush1.msra.mxu0 0.0
        %1369 = vmatprep.subr.mxu0 0.0
        %1370 = vmatpush1.msra.mxu0 0.0
        %1371 = vmatprep.subr.mxu0 0.0
        %1372 = vmatpush1.msra.mxu0 0.0
        %1373 = vmatprep.subr.mxu0 0.0
        %1374 = vmatpush1.msra.mxu0 0.0
        %1375 = vmatprep.subr.mxu0 0.0
        %1376 = vmatpush1.msra.mxu0 0.0
        %1377 = vmatprep.subr.mxu0 0.0
        %1378 = vmatpush1.msra.mxu0 0.0
        %1379 = vmatprep.subr.mxu0 0.0
        %1380 = vmatpush1.msra.mxu0 0.0
        %1381 = vmatprep.subr.mxu0 0.0
        %1382 = vmatpush1.msra.mxu0 0.0
        %1383 = vmatprep.subr.mxu0 0.0
        %1384 = vmatpush1.msra.mxu0 0.0
        %1385 = vmatprep.subr.mxu0 0.0
        %1386 = vmatpush1.msra.mxu0 0.0
        %1387 = vmatprep.subr.mxu0 0.0
        %1388 = vmatpush1.msra.mxu0 0.0
        %1389 = vmatprep.subr.mxu0 0.0
        %1390 = vmatpush1.msra.mxu0 0.0
        %1391 = vmatprep.subr.mxu0 0.0
        %1392 = vmatpush1.msra.mxu0 0.0
        %1393 = vmatprep.subr.mxu0 0.0
        %1394 = vmatpush1.msra.mxu0 0.0
        %1395 = vmatprep.subr.mxu0 0.0
        %1396 = vmatpush1.msra.mxu0 0.0
        %1397 = vmatprep.subr.mxu0 0.0
        %1398 = vmatpush1.msra.mxu0 0.0
        %1399 = vmatprep.subr.mxu0 0.0
        %1400 = vmatpush1.msra.mxu0 0.0
        %1401 = vmatprep.subr.mxu0 0.0
        %1402 = vmatpush1.msra.mxu0 0.0
        %1403 = vmatprep.subr.mxu0 0.0
        %1404 = vmatpush1.msra.mxu0 0.0
        %1405 = vmatprep.subr.mxu0 0.0
        %1406 = vmatpush1.msra.mxu0 0.0
        %1407 = vmatprep.subr.mxu0 0.0
        %1408 = vmatpush1.msra.mxu0 0.0
        %1409 = vmatprep.subr.mxu0 0.0
        %1410 = vmatpush1.msra.mxu0 0.0
        %1411 = vmatprep.mubr.f32.mxu0 0.0
        %1412 = vmatmul.mubr.f32.gmra.mrb[0].mxu0 %v1342
        %v1413 = vpop.f32.mrb[0].mxu0
        %v1414 = vadd.f32 0.0, %v1413
        %v1415 = vpop.f32.mrb[0].mxu0
        %1416 = vmatprep.mubr.f32.mxu0 0.0
        %1417 = vmatmul.mubr.f32.gmra.mrb[0].mxu0 %v1345
        %v1418 = vpop.f32.mrb[0].mxu0
        %v1419 = vadd.f32 0.0, %v1418
        %v1420 = vpop.f32.mrb[0].mxu0
        %1421 = vdwg.mxu0
        %v1423 = vsel %vm945, %v1129, 0
        %v1426 = vsel %vm945, %v1134, 0
        %1428 = vmatprep.subr.mxu0 0.0
        %1429 = vmatpush1.msra.mxu0 %v1137
        %1430 = vmatprep.subr.mxu0 0.0
        %1431 = vmatpush1.msra.mxu0 0.0
        %1432 = vmatprep.subr.mxu0 0.0
        %1433 = vmatpush1.msra.mxu0 0.0
        %1434 = vmatprep.subr.mxu0 0.0
        %1435 = vmatpush1.msra.mxu0 0.0
        %1436 = vmatprep.subr.mxu0 0.0
        %1437 = vmatpush1.msra.mxu0 0.0
        %1438 = vmatprep.subr.mxu0 0.0
        %1439 = vmatpush1.msra.mxu0 0.0
        %1440 = vmatprep.subr.mxu0 0.0
        %1441 = vmatpush1.msra.mxu0 0.0
        %1442 = vmatprep.subr.mxu0 0.0
        %1443 = vmatpush1.msra.mxu0 0.0
        %1444 = vmatprep.subr.mxu0 0.0
        %1445 = vmatpush1.msra.mxu0 0.0
        %1446 = vmatprep.subr.mxu0 0.0
        %1447 = vmatpush1.msra.mxu0 0.0
        %1448 = vmatprep.subr.mxu0 0.0
        %1449 = vmatpush1.msra.mxu0 0.0
        %1450 = vmatprep.subr.mxu0 0.0
        %1451 = vmatpush1.msra.mxu0 0.0
        %1452 = vmatprep.subr.mxu0 0.0
        %1453 = vmatpush1.msra.mxu0 0.0
        %1454 = vmatprep.subr.mxu0 0.0
        %1455 = vmatpush1.msra.mxu0 0.0
        %1456 = vmatprep.subr.mxu0 0.0
        %1457 = vmatpush1.msra.mxu0 0.0
        %1458 = vmatprep.subr.mxu0 0.0
        %1459 = vmatpush1.msra.mxu0 0.0
        %1460 = vmatprep.subr.mxu0 0.0
        %1461 = vmatpush1.msra.mxu0 0.0
        %1462 = vmatprep.subr.mxu0 0.0
        %1463 = vmatpush1.msra.mxu0 0.0
        %1464 = vmatprep.subr.mxu0 0.0
        %1465 = vmatpush1.msra.mxu0 0.0
        %1466 = vmatprep.subr.mxu0 0.0
        %1467 = vmatpush1.msra.mxu0 0.0
        %1468 = vmatprep.subr.mxu0 0.0
        %1469 = vmatpush1.msra.mxu0 0.0
        %1470 = vmatprep.subr.mxu0 0.0
        %1471 = vmatpush1.msra.mxu0 0.0
        %1472 = vmatprep.subr.mxu0 0.0
        %1473 = vmatpush1.msra.mxu0 0.0
        %1474 = vmatprep.subr.mxu0 0.0
        %1475 = vmatpush1.msra.mxu0 0.0
        %1476 = vmatprep.subr.mxu0 0.0
        %1477 = vmatpush1.msra.mxu0 0.0
        %1478 = vmatprep.subr.mxu0 0.0
        %1479 = vmatpush1.msra.mxu0 0.0
        %1480 = vmatprep.subr.mxu0 0.0
        %1481 = vmatpush1.msra.mxu0 0.0
        %1482 = vmatprep.subr.mxu0 0.0
        %1483 = vmatpush1.msra.mxu0 0.0
        %1484 = vmatprep.subr.mxu0 0.0
        %1485 = vmatpush1.msra.mxu0 0.0
        %1486 = vmatprep.subr.mxu0 0.0
        %1487 = vmatpush1.msra.mxu0 0.0
        %1488 = vmatprep.subr.mxu0 0.0
        %1489 = vmatpush1.msra.mxu0 0.0
        %1490 = vmatprep.subr.mxu0 0.0
        %1491 = vmatpush1.msra.mxu0 0.0
        %1492 = vmatprep.mubr.f32.mxu0 0.0
        %1493 = vmatmul.mubr.f32.gmra.mrb[0].mxu0 %v1423
        %v1494 = vpop.f32.mrb[0].mxu0
        %v1495 = vadd.f32 %v1414, %v1494
        %v1496 = vpop.f32.mrb[0].mxu0
        %1497 = vmatprep.mubr.f32.mxu0 0.0
        %1498 = vmatmul.mubr.f32.gmra.mrb[0].mxu0 %v1426
        %v1499 = vpop.f32.mrb[0].mxu0
        %v1500 = vadd.f32 %v1419, %v1499
        %v1501 = vpop.f32.mrb[0].mxu0
        %1502 = vdwg.mxu0
        %1503 = vrot.lane.b32.xlu0 %v749, 112
        %v1504 = vpop.permute.xlu0 %1503
        %1505 = vrot.lane.b32.xlu0 %v754, 112
        %v1506 = vpop.permute.xlu0 %1505
        %1507 = vrot.lane.b32.xlu0 %v843, 112
        %v1508 = vpop.permute.xlu0 %1507
        %1509 = vrot.lane.b32.xlu0 %v848, 112
        %v1510 = vpop.permute.xlu0 %1509
        %v1511 = vsel %vm945, %v1504, 0
        %v1513 = vsel %vm945, %v1506, 0
        %v1515 = vsel %vm945, %v1508, 0
        %v1517 = vsel %vm945, %v1510, 0
        %1519 = vmatprep.subr.mxu0 0.0
        %1520 = vmatpush1.xpose.msra.mxu0 %v1515
        %1521 = vmatprep.subr.mxu0 0.0
        %1522 = vmatpush1.xpose.msra.mxu0 %v1517
        %1523 = vmatprep.subr.mxu0 0.0
        %1524 = vmatpush1.xpose.msra.mxu0 0.0
        %1525 = vmatprep.subr.mxu0 0.0
        %1526 = vmatpush1.xpose.msra.mxu0 0.0
        %1527 = vmatprep.subr.mxu0 0.0
        %1528 = vmatpush1.xpose.msra.mxu0 0.0
        %1529 = vmatprep.subr.mxu0 0.0
        %1530 = vmatpush1.xpose.msra.mxu0 0.0
        %1531 = vmatprep.subr.mxu0 0.0
        %1532 = vmatpush1.xpose.msra.mxu0 0.0
        %1533 = vmatprep.subr.mxu0 0.0
        %1534 = vmatpush1.xpose.msra.mxu0 0.0
        %1535 = vmatprep.subr.mxu0 0.0
        %1536 = vmatpush1.xpose.msra.mxu0 0.0
        %1537 = vmatprep.subr.mxu0 0.0
        %1538 = vmatpush1.xpose.msra.mxu0 0.0
        %1539 = vmatprep.subr.mxu0 0.0
        %1540 = vmatpush1.xpose.msra.mxu0 0.0
        %1541 = vmatprep.subr.mxu0 0.0
        %1542 = vmatpush1.xpose.msra.mxu0 0.0
        %1543 = vmatprep.subr.mxu0 0.0
        %1544 = vmatpush1.xpose.msra.mxu0 0.0
        %1545 = vmatprep.subr.mxu0 0.0
        %1546 = vmatpush1.xpose.msra.mxu0 0.0
        %1547 = vmatprep.subr.mxu0 0.0
        %1548 = vmatpush1.xpose.msra.mxu0 0.0
        %1549 = vmatprep.subr.mxu0 0.0
        %1550 = vmatpush1.xpose.msra.mxu0 0.0
        %1551 = vmatprep.subr.mxu0 0.0
        %1552 = vmatpush1.xpose.msra.mxu0 0.0
        %1553 = vmatprep.subr.mxu0 0.0
        %1554 = vmatpush1.xpose.msra.mxu0 0.0
        %1555 = vmatprep.subr.mxu0 0.0
        %1556 = vmatpush1.xpose.msra.mxu0 0.0
        %1557 = vmatprep.subr.mxu0 0.0
        %1558 = vmatpush1.xpose.msra.mxu0 0.0
        %1559 = vmatprep.subr.mxu0 0.0
        %1560 = vmatpush1.xpose.msra.mxu0 0.0
        %1561 = vmatprep.subr.mxu0 0.0
        %1562 = vmatpush1.xpose.msra.mxu0 0.0
        %1563 = vmatprep.subr.mxu0 0.0
        %1564 = vmatpush1.xpose.msra.mxu0 0.0
        %1565 = vmatprep.subr.mxu0 0.0
        %1566 = vmatpush1.xpose.msra.mxu0 0.0
        %1567 = vmatprep.subr.mxu0 0.0
        %1568 = vmatpush1.xpose.msra.mxu0 0.0
        %1569 = vmatprep.subr.mxu0 0.0
        %1570 = vmatpush1.xpose.msra.mxu0 0.0
        %1571 = vmatprep.subr.mxu0 0.0
        %1572 = vmatpush1.xpose.msra.mxu0 0.0
        %1573 = vmatprep.subr.mxu0 0.0
        %1574 = vmatpush1.xpose.msra.mxu0 0.0
        %1575 = vmatprep.subr.mxu0 0.0
        %1576 = vmatpush1.xpose.msra.mxu0 0.0
        %1577 = vmatprep.subr.mxu0 0.0
        %1578 = vmatpush1.xpose.msra.mxu0 0.0
        %1579 = vmatprep.subr.mxu0 0.0
        %1580 = vmatpush1.xpose.msra.mxu0 0.0
        %1581 = vmatprep.subr.mxu0 0.0
        %1582 = vmatpush1.xpose.msra.mxu0 0.0
        %1583 = vmatprep.mubr.f32.mxu0 0.0
        %1584 = vmatmul.mubr.f32.gmra.mrb[0].mxu0 %v1511
        %v1585 = vpop.f32.mrb[0].mxu0
        %v1586 = vadd.f32 %v944, %v1585
        %v1587 = vpop.f32.mrb[0].mxu0
        %1588 = vmatprep.mubr.f32.mxu0 0.0
        %1589 = vmatmul.mubr.f32.gmra.mrb[0].mxu0 %v1513
        %v1590 = vpop.f32.mrb[0].mxu0
        %v1591 = vadd.f32 %v944, %v1590
        %v1592 = vpop.f32.mrb[0].mxu0
        %1593 = vdwg.mxu0
        %v1594 = vsel %vm1033, %v1586, -inf
        %1595 = vmax.xlane.f32.xlu0 %v1594
        %v1596 = vpop.xlane.xlu0 %1595
        %v1597 = vsel %vm1033, %v1591, -inf
        %1598 = vmax.xlane.f32.xlu0 %v1597
        %v1599 = vpop.xlane.xlu0 %1598
        %v1600 = vsub.f32 %v1586, %v1596
        %v1601 = vsub.f32 %v1591, %v1599
        %v1602 = vmul.f32 %v1600, 1.442695
        %v1603 = vpow.pop %v1602
        %v1604 = vmul.f32 %v1601, 1.442695
        %v1605 = vpow.pop %v1604
        %v1606 = vsel %vm1033, %v1603, 0.0
        %1607 = vadd.xlane.f32.xlu0 %v1606
        %v1608 = vpop.xlane.xlu0 %1607
        %v1609 = vsel %vm1033, %v1605, 0.0
        %1610 = vadd.xlane.f32.xlu0 %v1609
        %v1611 = vpop.xlane.xlu0 %1610
        %v1612 = vrcp.pop %v1608
        %v1613 = vrcp.pop %v1611
        %v1614 = vmul.f32 %v1603, %v1612
        %v1615 = vmul.f32 %v1605, %v1613
        %1616 = vrot.lane.b32.xlu0 %v933, 112
        %v1617 = vpop.permute.xlu0 %1616
        %1618 = vrot.lane.b32.xlu0 %v938, 112
        %v1619 = vpop.permute.xlu0 %1618
        %v1623 = vsel %vm1033, %v1614, 0
        %v1626 = vsel %vm1033, %v1615, 0
        %1628 = vmatprep.subr.mxu0 0.0
        %1629 = vmatpush1.msra.mxu0 %v1617
        %1630 = vmatprep.subr.mxu0 0.0
        %1631 = vmatpush1.msra.mxu0 %v1619
        %1632 = vmatprep.subr.mxu0 0.0
        %1633 = vmatpush1.msra.mxu0 0.0
        %1634 = vmatprep.subr.mxu0 0.0
        %1635 = vmatpush1.msra.mxu0 0.0
        %1636 = vmatprep.subr.mxu0 0.0
        %1637 = vmatpush1.msra.mxu0 0.0
        %1638 = vmatprep.subr.mxu0 0.0
        %1639 = vmatpush1.msra.mxu0 0.0
        %1640 = vmatprep.subr.mxu0 0.0
        %1641 = vmatpush1.msra.mxu0 0.0
        %1642 = vmatprep.subr.mxu0 0.0
        %1643 = vmatpush1.msra.mxu0 0.0
        %1644 = vmatprep.subr.mxu0 0.0
        %1645 = vmatpush1.msra.mxu0 0.0
        %1646 = vmatprep.subr.mxu0 0.0
        %1647 = vmatpush1.msra.mxu0 0.0
        %1648 = vmatprep.subr.mxu0 0.0
        %1649 = vmatpush1.msra.mxu0 0.0
        %1650 = vmatprep.subr.mxu0 0.0
        %1651 = vmatpush1.msra.mxu0 0.0
        %1652 = vmatprep.subr.mxu0 0.0
        %1653 = vmatpush1.msra.mxu0 0.0
        %1654 = vmatprep.subr.mxu0 0.0
        %1655 = vmatpush1.msra.mxu0 0.0
        %1656 = vmatprep.subr.mxu0 0.0
        %1657 = vmatpush1.msra.mxu0 0.0
        %1658 = vmatprep.subr.mxu0 0.0
        %1659 = vmatpush1.msra.mxu0 0.0
        %1660 = vmatprep.subr.mxu0 0.0
        %1661 = vmatpush1.msra.mxu0 0.0
        %1662 = vmatprep.subr.mxu0 0.0
        %1663 = vmatpush1.msra.mxu0 0.0
        %1664 = vmatprep.subr.mxu0 0.0
        %1665 = vmatpush1.msra.mxu0 0.0
        %1666 = vmatprep.subr.mxu0 0.0
        %1667 = vmatpush1.msra.mxu0 0.0
        %1668 = vmatprep.subr.mxu0 0.0
        %1669 = vmatpush1.msra.mxu0 0.0
        %1670 = vmatprep.subr.mxu0 0.0
        %1671 = vmatpush1.msra.mxu0 0.0
        %1672 = vmatprep.subr.mxu0 0.0
        %1673 = vmatpush1.msra.mxu0 0.0
        %1674 = vmatprep.subr.mxu0 0.0
        %1675 = vmatpush1.msra.mxu0 0.0
        %1676 = vmatprep.subr.mxu0 0.0
        %1677 = vmatpush1.msra.mxu0 0.0
        %1678 = vmatprep.subr.mxu0 0.0
        %1679 = vmatpush1.msra.mxu0 0.0
        %1680 = vmatprep.subr.mxu0 0.0
        %1681 = vmatpush1.msra.mxu0 0.0
        %1682 = vmatprep.subr.mxu0 0.0
        %1683 = vmatpush1.msra.mxu0 0.0
        %1684 = vmatprep.subr.mxu0 0.0
        %1685 = vmatpush1.msra.mxu0 0.0
        %1686 = vmatprep.subr.mxu0 0.0
        %1687 = vmatpush1.msra.mxu0 0.0
        %1688 = vmatprep.subr.mxu0 0.0
        %1689 = vmatpush1.msra.mxu0 0.0
        %1690 = vmatprep.subr.mxu0 0.0
        %1691 = vmatpush1.msra.mxu0 0.0
        %1692 = vmatprep.mubr.f32.mxu0 0.0
        %1693 = vmatmul.mubr.f32.gmra.mrb[0].mxu0 %v1623
        %v1694 = vpop.f32.mrb[0].mxu0
        %v1695 = vadd.f32 0.0, %v1694
        %v1696 = vpop.f32.mrb[0].mxu0
        %1697 = vmatprep.mubr.f32.mxu0 0.0
        %1698 = vmatmul.mubr.f32.gmra.mrb[0].mxu0 %v1626
        %v1699 = vpop.f32.mrb[0].mxu0
        %v1700 = vadd.f32 0.0, %v1699
        %v1701 = vpop.f32.mrb[0].mxu0
        %1702 = vdwg.mxu0
        %v1703 = vld [vmem:[#allocation11 + $0x10] sm:$0xff]
        %v1705 = vsel %vm945, %v1695, 0
        %v1708 = vsel %vm945, %v1700, 0
        %1710 = vmatprep.subr.mxu0 0.0
        %1711 = vmatpush1.msra.mxu0 %v1703
        %1712 = vmatprep.subr.mxu0 0.0
        %1713 = vmatpush1.msra.mxu0 0.0
        %1714 = vmatprep.subr.mxu0 0.0
        %1715 = vmatpush1.msra.mxu0 0.0
        %1716 = vmatprep.subr.mxu0 0.0
        %1717 = vmatpush1.msra.mxu0 0.0
        %1718 = vmatprep.subr.mxu0 0.0
        %1719 = vmatpush1.msra.mxu0 0.0
        %1720 = vmatprep.subr.mxu0 0.0
        %1721 = vmatpush1.msra.mxu0 0.0
        %1722 = vmatprep.subr.mxu0 0.0
        %1723 = vmatpush1.msra.mxu0 0.0
        %1724 = vmatprep.subr.mxu0 0.0
        %1725 = vmatpush1.msra.mxu0 0.0
        %1726 = vmatprep.subr.mxu0 0.0
        %1727 = vmatpush1.msra.mxu0 0.0
        %1728 = vmatprep.subr.mxu0 0.0
        %1729 = vmatpush1.msra.mxu0 0.0
        %1730 = vmatprep.subr.mxu0 0.0
        %1731 = vmatpush1.msra.mxu0 0.0
        %1732 = vmatprep.subr.mxu0 0.0
        %1733 = vmatpush1.msra.mxu0 0.0
        %1734 = vmatprep.subr.mxu0 0.0
        %1735 = vmatpush1.msra.mxu0 0.0
        %1736 = vmatprep.subr.mxu0 0.0
        %1737 = vmatpush1.msra.mxu0 0.0
        %1738 = vmatprep.subr.mxu0 0.0
        %1739 = vmatpush1.msra.mxu0 0.0
        %1740 = vmatprep.subr.mxu0 0.0
        %1741 = vmatpush1.msra.mxu0 0.0
        %1742 = vmatprep.subr.mxu0 0.0
        %1743 = vmatpush1.msra.mxu0 0.0
        %1744 = vmatprep.subr.mxu0 0.0
        %1745 = vmatpush1.msra.mxu0 0.0
        %1746 = vmatprep.subr.mxu0 0.0
        %1747 = vmatpush1.msra.mxu0 0.0
        %1748 = vmatprep.subr.mxu0 0.0
        %1749 = vmatpush1.msra.mxu0 0.0
        %1750 = vmatprep.subr.mxu0 0.0
        %1751 = vmatpush1.msra.mxu0 0.0
        %1752 = vmatprep.subr.mxu0 0.0
        %1753 = vmatpush1.msra.mxu0 0.0
        %1754 = vmatprep.subr.mxu0 0.0
        %1755 = vmatpush1.msra.mxu0 0.0
        %1756 = vmatprep.subr.mxu0 0.0
        %1757 = vmatpush1.msra.mxu0 0.0
        %1758 = vmatprep.subr.mxu0 0.0
        %1759 = vmatpush1.msra.mxu0 0.0
        %1760 = vmatprep.subr.mxu0 0.0
        %1761 = vmatpush1.msra.mxu0 0.0
        %1762 = vmatprep.subr.mxu0 0.0
        %1763 = vmatpush1.msra.mxu0 0.0
        %1764 = vmatprep.subr.mxu0 0.0
        %1765 = vmatpush1.msra.mxu0 0.0
        %1766 = vmatprep.subr.mxu0 0.0
        %1767 = vmatpush1.msra.mxu0 0.0
        %1768 = vmatprep.subr.mxu0 0.0
        %1769 = vmatpush1.msra.mxu0 0.0
        %1770 = vmatprep.subr.mxu0 0.0
        %1771 = vmatpush1.msra.mxu0 0.0
        %1772 = vmatprep.subr.mxu0 0.0
        %1773 = vmatpush1.msra.mxu0 0.0
        %1774 = vmatprep.mubr.f32.mxu0 0.0
        %1775 = vmatmul.mubr.f32.gmra.mrb[0].mxu0 %v1705
        %v1776 = vpop.f32.mrb[0].mxu0
        %v1777 = vadd.f32 0.0, %v1776
        %v1778 = vpop.f32.mrb[0].mxu0
        %1779 = vmatprep.mubr.f32.mxu0 0.0
        %1780 = vmatmul.mubr.f32.gmra.mrb[0].mxu0 %v1708
        %v1781 = vpop.f32.mrb[0].mxu0
        %v1782 = vadd.f32 0.0, %v1781
        %v1783 = vpop.f32.mrb[0].mxu0
        %1784 = vdwg.mxu0
        %v1785 = vadd.f32 %v1495, %v1777
        %v1786 = vadd.f32 %v1500, %v1782
        %1787 = vrot.lane.b32.xlu0 %v749, 104
        %v1788 = vpop.permute.xlu0 %1787
        %1789 = vrot.lane.b32.xlu0 %v754, 104
        %v1790 = vpop.permute.xlu0 %1789
        %1791 = vrot.lane.b32.xlu0 %v843, 104
        %v1792 = vpop.permute.xlu0 %1791
        %1793 = vrot.lane.b32.xlu0 %v848, 104
        %v1794 = vpop.permute.xlu0 %1793
        %v1795 = vsel %vm945, %v1788, 0
        %v1797 = vsel %vm945, %v1790, 0
        %v1799 = vsel %vm945, %v1792, 0
        %v1801 = vsel %vm945, %v1794, 0
        %1803 = vmatprep.subr.mxu0 0.0
        %1804 = vmatpush1.xpose.msra.mxu0 %v1799
        %1805 = vmatprep.subr.mxu0 0.0
        %1806 = vmatpush1.xpose.msra.mxu0 %v1801
        %1807 = vmatprep.subr.mxu0 0.0
        %1808 = vmatpush1.xpose.msra.mxu0 0.0
        %1809 = vmatprep.subr.mxu0 0.0
        %1810 = vmatpush1.xpose.msra.mxu0 0.0
        %1811 = vmatprep.subr.mxu0 0.0
        %1812 = vmatpush1.xpose.msra.mxu0 0.0
        %1813 = vmatprep.subr.mxu0 0.0
        %1814 = vmatpush1.xpose.msra.mxu0 0.0
        %1815 = vmatprep.subr.mxu0 0.0
        %1816 = vmatpush1.xpose.msra.mxu0 0.0
        %1817 = vmatprep.subr.mxu0 0.0
        %1818 = vmatpush1.xpose.msra.mxu0 0.0
        %1819 = vmatprep.subr.mxu0 0.0
        %1820 = vmatpush1.xpose.msra.mxu0 0.0
        %1821 = vmatprep.subr.mxu0 0.0
        %1822 = vmatpush1.xpose.msra.mxu0 0.0
        %1823 = vmatprep.subr.mxu0 0.0
        %1824 = vmatpush1.xpose.msra.mxu0 0.0
        %1825 = vmatprep.subr.mxu0 0.0
        %1826 = vmatpush1.xpose.msra.mxu0 0.0
        %1827 = vmatprep.subr.mxu0 0.0
        %1828 = vmatpush1.xpose.msra.mxu0 0.0
        %1829 = vmatprep.subr.mxu0 0.0
        %1830 = vmatpush1.xpose.msra.mxu0 0.0
        %1831 = vmatprep.subr.mxu0 0.0
        %1832 = vmatpush1.xpose.msra.mxu0 0.0
        %1833 = vmatprep.subr.mxu0 0.0
        %1834 = vmatpush1.xpose.msra.mxu0 0.0
        %1835 = vmatprep.subr.mxu0 0.0
        %1836 = vmatpush1.xpose.msra.mxu0 0.0
        %1837 = vmatprep.subr.mxu0 0.0
        %1838 = vmatpush1.xpose.msra.mxu0 0.0
        %1839 = vmatprep.subr.mxu0 0.0
        %1840 = vmatpush1.xpose.msra.mxu0 0.0
        %1841 = vmatprep.subr.mxu0 0.0
        %1842 = vmatpush1.xpose.msra.mxu0 0.0
        %1843 = vmatprep.subr.mxu0 0.0
        %1844 = vmatpush1.xpose.msra.mxu0 0.0
        %1845 = vmatprep.subr.mxu0 0.0
        %1846 = vmatpush1.xpose.msra.mxu0 0.0
        %1847 = vmatprep.subr.mxu0 0.0
        %1848 = vmatpush1.xpose.msra.mxu0 0.0
        %1849 = vmatprep.subr.mxu0 0.0
        %1850 = vmatpush1.xpose.msra.mxu0 0.0
        %1851 = vmatprep.subr.mxu0 0.0
        %1852 = vmatpush1.xpose.msra.mxu0 0.0
        %1853 = vmatprep.subr.mxu0 0.0
        %1854 = vmatpush1.xpose.msra.mxu0 0.0
        %1855 = vmatprep.subr.mxu0 0.0
        %1856 = vmatpush1.xpose.msra.mxu0 0.0
        %1857 = vmatprep.subr.mxu0 0.0
        %1858 = vmatpush1.xpose.msra.mxu0 0.0
        %1859 = vmatprep.subr.mxu0 0.0
        %1860 = vmatpush1.xpose.msra.mxu0 0.0
        %1861 = vmatprep.subr.mxu0 0.0
        %1862 = vmatpush1.xpose.msra.mxu0 0.0
        %1863 = vmatprep.subr.mxu0 0.0
        %1864 = vmatpush1.xpose.msra.mxu0 0.0
        %1865 = vmatprep.subr.mxu0 0.0
        %1866 = vmatpush1.xpose.msra.mxu0 0.0
        %1867 = vmatprep.mubr.f32.mxu0 0.0
        %1868 = vmatmul.mubr.f32.gmra.mrb[0].mxu0 %v1795
        %v1869 = vpop.f32.mrb[0].mxu0
        %v1870 = vadd.f32 %v944, %v1869
        %v1871 = vpop.f32.mrb[0].mxu0
        %1872 = vmatprep.mubr.f32.mxu0 0.0
        %1873 = vmatmul.mubr.f32.gmra.mrb[0].mxu0 %v1797
        %v1874 = vpop.f32.mrb[0].mxu0
        %v1875 = vadd.f32 %v944, %v1874
        %v1876 = vpop.f32.mrb[0].mxu0
        %1877 = vdwg.mxu0
        %v1878 = vsel %vm1033, %v1870, -inf
        %1879 = vmax.xlane.f32.xlu0 %v1878
        %v1880 = vpop.xlane.xlu0 %1879
        %v1881 = vsel %vm1033, %v1875, -inf
        %1882 = vmax.xlane.f32.xlu0 %v1881
        %v1883 = vpop.xlane.xlu0 %1882
        %v1884 = vsub.f32 %v1870, %v1880
        %v1885 = vsub.f32 %v1875, %v1883
        %v1886 = vmul.f32 %v1884, 1.442695
        %v1887 = vpow.pop %v1886
        %v1888 = vmul.f32 %v1885, 1.442695
        %v1889 = vpow.pop %v1888
        %v1890 = vsel %vm1033, %v1887, 0.0
        %1891 = vadd.xlane.f32.xlu0 %v1890
        %v1892 = vpop.xlane.xlu0 %1891
        %v1893 = vsel %vm1033, %v1889, 0.0
        %1894 = vadd.xlane.f32.xlu0 %v1893
        %v1895 = vpop.xlane.xlu0 %1894
        %v1896 = vrcp.pop %v1892
        %v1897 = vrcp.pop %v1895
        %v1898 = vmul.f32 %v1887, %v1896
        %v1899 = vmul.f32 %v1889, %v1897
        %1900 = vrot.lane.b32.xlu0 %v933, 104
        %v1901 = vpop.permute.xlu0 %1900
        %1902 = vrot.lane.b32.xlu0 %v938, 104
        %v1903 = vpop.permute.xlu0 %1902
        %v1907 = vsel %vm1033, %v1898, 0
        %v1910 = vsel %vm1033, %v1899, 0
        %1912 = vmatprep.subr.mxu0 0.0
        %1913 = vmatpush1.msra.mxu0 %v1901
        %1914 = vmatprep.subr.mxu0 0.0
        %1915 = vmatpush1.msra.mxu0 %v1903
        %1916 = vmatprep.subr.mxu0 0.0
        %1917 = vmatpush1.msra.mxu0 0.0
        %1918 = vmatprep.subr.mxu0 0.0
        %1919 = vmatpush1.msra.mxu0 0.0
        %1920 = vmatprep.subr.mxu0 0.0
        %1921 = vmatpush1.msra.mxu0 0.0
        %1922 = vmatprep.subr.mxu0 0.0
        %1923 = vmatpush1.msra.mxu0 0.0
        %1924 = vmatprep.subr.mxu0 0.0
        %1925 = vmatpush1.msra.mxu0 0.0
        %1926 = vmatprep.subr.mxu0 0.0
        %1927 = vmatpush1.msra.mxu0 0.0
        %1928 = vmatprep.subr.mxu0 0.0
        %1929 = vmatpush1.msra.mxu0 0.0
        %1930 = vmatprep.subr.mxu0 0.0
        %1931 = vmatpush1.msra.mxu0 0.0
        %1932 = vmatprep.subr.mxu0 0.0
        %1933 = vmatpush1.msra.mxu0 0.0
        %1934 = vmatprep.subr.mxu0 0.0
        %1935 = vmatpush1.msra.mxu0 0.0
        %1936 = vmatprep.subr.mxu0 0.0
        %1937 = vmatpush1.msra.mxu0 0.0
        %1938 = vmatprep.subr.mxu0 0.0
        %1939 = vmatpush1.msra.mxu0 0.0
        %1940 = vmatprep.subr.mxu0 0.0
        %1941 = vmatpush1.msra.mxu0 0.0
        %1942 = vmatprep.subr.mxu0 0.0
        %1943 = vmatpush1.msra.mxu0 0.0
        %1944 = vmatprep.subr.mxu0 0.0
        %1945 = vmatpush1.msra.mxu0 0.0
        %1946 = vmatprep.subr.mxu0 0.0
        %1947 = vmatpush1.msra.mxu0 0.0
        %1948 = vmatprep.subr.mxu0 0.0
        %1949 = vmatpush1.msra.mxu0 0.0
        %1950 = vmatprep.subr.mxu0 0.0
        %1951 = vmatpush1.msra.mxu0 0.0
        %1952 = vmatprep.subr.mxu0 0.0
        %1953 = vmatpush1.msra.mxu0 0.0
        %1954 = vmatprep.subr.mxu0 0.0
        %1955 = vmatpush1.msra.mxu0 0.0
        %1956 = vmatprep.subr.mxu0 0.0
        %1957 = vmatpush1.msra.mxu0 0.0
        %1958 = vmatprep.subr.mxu0 0.0
        %1959 = vmatpush1.msra.mxu0 0.0
        %1960 = vmatprep.subr.mxu0 0.0
        %1961 = vmatpush1.msra.mxu0 0.0
        %1962 = vmatprep.subr.mxu0 0.0
        %1963 = vmatpush1.msra.mxu0 0.0
        %1964 = vmatprep.subr.mxu0 0.0
        %1965 = vmatpush1.msra.mxu0 0.0
        %1966 = vmatprep.subr.mxu0 0.0
        %1967 = vmatpush1.msra.mxu0 0.0
        %1968 = vmatprep.subr.mxu0 0.0
        %1969 = vmatpush1.msra.mxu0 0.0
        %1970 = vmatprep.subr.mxu0 0.0
        %1971 = vmatpush1.msra.mxu0 0.0
        %1972 = vmatprep.subr.mxu0 0.0
        %1973 = vmatpush1.msra.mxu0 0.0
        %1974 = vmatprep.subr.mxu0 0.0
        %1975 = vmatpush1.msra.mxu0 0.0
        %1976 = vmatprep.mubr.f32.mxu0 0.0
        %1977 = vmatmul.mubr.f32.gmra.mrb[0].mxu0 %v1907
        %v1978 = vpop.f32.mrb[0].mxu0
        %v1979 = vadd.f32 0.0, %v1978
        %v1980 = vpop.f32.mrb[0].mxu0
        %1981 = vmatprep.mubr.f32.mxu0 0.0
        %1982 = vmatmul.mubr.f32.gmra.mrb[0].mxu0 %v1910
        %v1983 = vpop.f32.mrb[0].mxu0
        %v1984 = vadd.f32 0.0, %v1983
        %v1985 = vpop.f32.mrb[0].mxu0
        %1986 = vdwg.mxu0
        %v1987 = vld [vmem:[#allocation11 + $0x18] sm:$0xff]
        %v1989 = vsel %vm945, %v1979, 0
        %v1992 = vsel %vm945, %v1984, 0
        %1994 = vmatprep.subr.mxu0 0.0
        %1995 = vmatpush1.msra.mxu0 %v1987
        %1996 = vmatprep.subr.mxu0 0.0
        %1997 = vmatpush1.msra.mxu0 0.0
        %1998 = vmatprep.subr.mxu0 0.0
        %1999 = vmatpush1.msra.mxu0 0.0
        %2000 = vmatprep.subr.mxu0 0.0
        %2001 = vmatpush1.msra.mxu0 0.0
        %2002 = vmatprep.subr.mxu0 0.0
        %2003 = vmatpush1.msra.mxu0 0.0
        %2004 = vmatprep.subr.mxu0 0.0
        %2005 = vmatpush1.msra.mxu0 0.0
        %2006 = vmatprep.subr.mxu0 0.0
        %2007 = vmatpush1.msra.mxu0 0.0
        %2008 = vmatprep.subr.mxu0 0.0
        %2009 = vmatpush1.msra.mxu0 0.0
        %2010 = vmatprep.subr.mxu0 0.0
        %2011 = vmatpush1.msra.mxu0 0.0
        %2012 = vmatprep.subr.mxu0 0.0
        %2013 = vmatpush1.msra.mxu0 0.0
        %2014 = vmatprep.subr.mxu0 0.0
        %2015 = vmatpush1.msra.mxu0 0.0
        %2016 = vmatprep.subr.mxu0 0.0
        %2017 = vmatpush1.msra.mxu0 0.0
        %2018 = vmatprep.subr.mxu0 0.0
        %2019 = vmatpush1.msra.mxu0 0.0
        %2020 = vmatprep.subr.mxu0 0.0
        %2021 = vmatpush1.msra.mxu0 0.0
        %2022 = vmatprep.subr.mxu0 0.0
        %2023 = vmatpush1.msra.mxu0 0.0
        %2024 = vmatprep.subr.mxu0 0.0
        %2025 = vmatpush1.msra.mxu0 0.0
        %2026 = vmatprep.subr.mxu0 0.0
        %2027 = vmatpush1.msra.mxu0 0.0
        %2028 = vmatprep.subr.mxu0 0.0
        %2029 = vmatpush1.msra.mxu0 0.0
        %2030 = vmatprep.subr.mxu0 0.0
        %2031 = vmatpush1.msra.mxu0 0.0
        %2032 = vmatprep.subr.mxu0 0.0
        %2033 = vmatpush1.msra.mxu0 0.0
        %2034 = vmatprep.subr.mxu0 0.0
        %2035 = vmatpush1.msra.mxu0 0.0
        %2036 = vmatprep.subr.mxu0 0.0
        %2037 = vmatpush1.msra.mxu0 0.0
        %2038 = vmatprep.subr.mxu0 0.0
        %2039 = vmatpush1.msra.mxu0 0.0
        %2040 = vmatprep.subr.mxu0 0.0
        %2041 = vmatpush1.msra.mxu0 0.0
        %2042 = vmatprep.subr.mxu0 0.0
        %2043 = vmatpush1.msra.mxu0 0.0
        %2044 = vmatprep.subr.mxu0 0.0
        %2045 = vmatpush1.msra.mxu0 0.0
        %2046 = vmatprep.subr.mxu0 0.0
        %2047 = vmatpush1.msra.mxu0 0.0
        %2048 = vmatprep.subr.mxu0 0.0
        %2049 = vmatpush1.msra.mxu0 0.0
        %2050 = vmatprep.subr.mxu0 0.0
        %2051 = vmatpush1.msra.mxu0 0.0
        %2052 = vmatprep.subr.mxu0 0.0
        %2053 = vmatpush1.msra.mxu0 0.0
        %2054 = vmatprep.subr.mxu0 0.0
        %2055 = vmatpush1.msra.mxu0 0.0
        %2056 = vmatprep.subr.mxu0 0.0
        %2057 = vmatpush1.msra.mxu0 0.0
        %2058 = vmatprep.mubr.f32.mxu0 0.0
        %2059 = vmatmul.mubr.f32.gmra.mrb[0].mxu0 %v1989
        %v2060 = vpop.f32.mrb[0].mxu0
        %v2061 = vadd.f32 0.0, %v2060
        %v2062 = vpop.f32.mrb[0].mxu0
        %2063 = vmatprep.mubr.f32.mxu0 0.0
        %2064 = vmatmul.mubr.f32.gmra.mrb[0].mxu0 %v1992
        %v2065 = vpop.f32.mrb[0].mxu0
        %v2066 = vadd.f32 0.0, %v2065
        %v2067 = vpop.f32.mrb[0].mxu0
        %2068 = vdwg.mxu0
        %v2069 = vadd.f32 %v1785, %v2061
        %v2070 = vadd.f32 %v1786, %v2066
        %v2071 = vld [vmem:[#allocation13] sm:$0x1]
        %v2073 = vlaneseq
        %v2074 = vshrl.u32 %v2073, 7
        %v2075 = vsub.s32 0, %v2074
        %v2076 = vrot.slane %v2071, %v2075
        %v2078 = vadd.f32 %v2069, %v2076
        %v2079 = vadd.f32 %v2070, %v2076
        %v2080 = vadd.f32 %v617, %v2078
        %v2081 = vadd.f32 %v618, %v2079
        %v2082 = vld [vmem:[#allocation14] sm:$0x1]
        %v2083 = vld [vmem:[#allocation16] sm:$0x1]
        %v2084 = vsel %vm621, %v2080, 0.0
        %2085 = vadd.xlane.f32.xlu0 %v2084
        %v2086 = vpop.xlane.xlu0 %2085
        %v2087 = vsel %vm621, %v2081, 0.0
        %2088 = vadd.xlane.f32.xlu0 %v2087
        %v2089 = vpop.xlane.xlu0 %2088
        %v2090 = vmul.f32 %v2086, %v628
        %v2091 = vmul.f32 %v2089, %v628
        %v2092 = vsub.f32 %v2080, %v2090
        %v2093 = vsub.f32 %v2081, %v2091
        %v2094 = vmul.f32 %v2092, %v2092
        %v2095 = vmul.f32 %v2093, %v2093
        %v2096 = vsel %vm621, %v2094, 0.0
        %2097 = vadd.xlane.f32.xlu0 %v2096
        %v2098 = vpop.xlane.xlu0 %2097
        %v2099 = vsel %vm621, %v2095, 0.0
        %2100 = vadd.xlane.f32.xlu0 %v2099
        %v2101 = vpop.xlane.xlu0 %2100
        %v2102 = vmul.f32 %v2098, %v628
        %v2103 = vmul.f32 %v2101, %v628
        %v2104 = vadd.f32 %v2102, 1e-05
        %v2105 = vadd.f32 %v2103, 1e-05
        %v2106 = vrsqrt.pop %v2104
        %v2107 = vrsqrt.pop %v2105
        %v2108 = vmul.f32 %v2092, %v2106
        %v2109 = vmul.f32 %v2093, %v2107
        %v2111 = vlaneseq
        %v2112 = vshrl.u32 %v2111, 7
        %v2113 = vsub.s32 0, %v2112
        %v2114 = vrot.slane %v2082, %v2113
        %v2116 = vmul.f32 %v2108, %v2114
        %v2117 = vmul.f32 %v2109, %v2114
        %v2119 = vlaneseq
        %v2120 = vshrl.u32 %v2119, 7
        %v2121 = vsub.s32 0, %v2120
        %v2122 = vrot.slane %v2083, %v2121
        %v2124 = vadd.f32 %v2116, %v2122
        %v2125 = vadd.f32 %v2117, %v2122
        %v2126 = vld [vmem:[#allocation17] sm:$0xff]
        %v2127 = vld [vmem:[#allocation17 + $0x8] sm:$0xff]
        %v2128 = vld [vmem:[#allocation17 + $0x10] sm:$0xff]
        %v2129 = vld [vmem:[#allocation17 + $0x18] sm:$0xff]
        %v2130 = vld [vmem:[#allocation19] sm:$0x1]
        %v2132 = vlaneseq
        %v2133 = vshrl.u32 %v2132, 7
        %v2134 = vsub.s32 0, %v2133
        %v2135 = vrot.slane %v2130, %v2134
        %v2138 = vsel %vm621, %v2124, 0
        %v2141 = vsel %vm621, %v2125, 0
        %2143 = vmatprep.subr.mxu0 0.0
        %2144 = vmatpush1.msra.mxu0 %v2126
        %2145 = vmatprep.subr.mxu0 0.0
        %2146 = vmatpush1.msra.mxu0 %v2127
        %2147 = vmatprep.subr.mxu0 0.0
        %2148 = vmatpush1.msra.mxu0 %v2128
        %2149 = vmatprep.subr.mxu0 0.0
        %2150 = vmatpush1.msra.mxu0 %v2129
        %2151 = vmatprep.subr.mxu0 0.0
        %2152 = vmatpush1.msra.mxu0 0.0
        %2153 = vmatprep.subr.mxu0 0.0
        %2154 = vmatpush1.msra.mxu0 0.0
        %2155 = vmatprep.subr.mxu0 0.0
        %2156 = vmatpush1.msra.mxu0 0.0
        %2157 = vmatprep.subr.mxu0 0.0
        %2158 = vmatpush1.msra.mxu0 0.0
        %2159 = vmatprep.subr.mxu0 0.0
        %2160 = vmatpush1.msra.mxu0 0.0
        %2161 = vmatprep.subr.mxu0 0.0
        %2162 = vmatpush1.msra.mxu0 0.0
        %2163 = vmatprep.subr.mxu0 0.0
        %2164 = vmatpush1.msra.mxu0 0.0
        %2165 = vmatprep.subr.mxu0 0.0
        %2166 = vmatpush1.msra.mxu0 0.0
        %2167 = vmatprep.subr.mxu0 0.0
        %2168 = vmatpush1.msra.mxu0 0.0
        %2169 = vmatprep.subr.mxu0 0.0
        %2170 = vmatpush1.msra.mxu0 0.0
        %2171 = vmatprep.subr.mxu0 0.0
        %2172 = vmatpush1.msra.mxu0 0.0
        %2173 = vmatprep.subr.mxu0 0.0
        %2174 = vmatpush1.msra.mxu0 0.0
        %2175 = vmatprep.subr.mxu0 0.0
        %2176 = vmatpush1.msra.mxu0 0.0
        %2177 = vmatprep.subr.mxu0 0.0
        %2178 = vmatpush1.msra.mxu0 0.0
        %2179 = vmatprep.subr.mxu0 0.0
        %2180 = vmatpush1.msra.mxu0 0.0
        %2181 = vmatprep.subr.mxu0 0.0
        %2182 = vmatpush1.msra.mxu0 0.0
        %2183 = vmatprep.subr.mxu0 0.0
        %2184 = vmatpush1.msra.mxu0 0.0
        %2185 = vmatprep.subr.mxu0 0.0
        %2186 = vmatpush1.msra.mxu0 0.0
        %2187 = vmatprep.subr.mxu0 0.0
        %2188 = vmatpush1.msra.mxu0 0.0
        %2189 = vmatprep.subr.mxu0 0.0
        %2190 = vmatpush1.msra.mxu0 0.0
        %2191 = vmatprep.subr.mxu0 0.0
        %2192 = vmatpush1.msra.mxu0 0.0
        %2193 = vmatprep.subr.mxu0 0.0
        %2194 = vmatpush1.msra.mxu0 0.0
        %2195 = vmatprep.subr.mxu0 0.0
        %2196 = vmatpush1.msra.mxu0 0.0
        %2197 = vmatprep.subr.mxu0 0.0
        %2198 = vmatpush1.msra.mxu0 0.0
        %2199 = vmatprep.subr.mxu0 0.0
        %2200 = vmatpush1.msra.mxu0 0.0
        %2201 = vmatprep.subr.mxu0 0.0
        %2202 = vmatpush1.msra.mxu0 0.0
        %2203 = vmatprep.subr.mxu0 0.0
        %2204 = vmatpush1.msra.mxu0 0.0
        %2205 = vmatprep.subr.mxu0 0.0
        %2206 = vmatpush1.msra.mxu0 0.0
        %2207 = vmatprep.mubr.f32.mxu0 0.0
        %2208 = vmatmul.mubr.f32.gmra.mrb[0].mxu0 %v2138
        %v2209 = vpop.f32.mrb[0].mxu0
        %v2210 = vadd.f32 %v2135, %v2209
        %v2211 = vpop.f32.mrb[0].mxu0
        %2212 = vmatprep.mubr.f32.mxu0 0.0
        %2213 = vmatmul.mubr.f32.gmra.mrb[0].mxu0 %v2141
        %v2214 = vpop.f32.mrb[0].mxu0
        %v2215 = vadd.f32 %v2135, %v2214
        %v2216 = vpop.f32.mrb[0].mxu0
        %2217 = vdwg.mxu0
        %v2218 = vmul.f32 %v2210, 1.702
        %v2219 = vmul.f32 %v2215, 1.702
        %v2220 = vxor.u32 %v2218, 2147483648
        %v2221 = vxor.u32 %v2219, 2147483648
        %v2222 = vmul.f32 %v2220, 1.442695
        %v2223 = vpow.pop %v2222
        %v2224 = vmul.f32 %v2221, 1.442695
        %v2225 = vpow.pop %v2224
        %v2226 = vadd.f32 %v2223, 1.0
        %v2227 = vadd.f32 %v2225, 1.0
        %v2228 = vrcp.pop %v2226
        %v2229 = vmul.f32 1.0, %v2228
        %v2230 = vrcp.pop %v2227
        %v2231 = vmul.f32 1.0, %v2230
        %v2232 = vmul.f32 %v2210, %v2229
        %v2233 = vmul.f32 %v2215, %v2231
        %v2234 = vld [vmem:[#allocation20] sm:$0xff]
        %v2235 = vld [vmem:[#allocation20 + $0x8] sm:$0xff]
        %v2236 = vld [vmem:[#allocation20 + $0x10] sm:$0xff]
        %v2237 = vld [vmem:[#allocation20 + $0x18] sm:$0xff]
        %v2238 = vld [vmem:[#allocation20 + $0x20] sm:$0xff]
        %v2239 = vld [vmem:[#allocation20 + $0x28] sm:$0xff]
        %v2240 = vld [vmem:[#allocation20 + $0x30] sm:$0xff]
        %v2241 = vld [vmem:[#allocation20 + $0x38] sm:$0xff]
        %v2242 = vld [vmem:[#allocation20 + $0x40] sm:$0xff]
        %v2243 = vld [vmem:[#allocation20 + $0x48] sm:$0xff]
        %v2244 = vld [vmem:[#allocation20 + $0x50] sm:$0xff]
        %v2245 = vld [vmem:[#allocation20 + $0x58] sm:$0xff]
        %v2246 = vld [vmem:[#allocation20 + $0x60] sm:$0xff]
        %v2247 = vld [vmem:[#allocation20 + $0x68] sm:$0xff]
        %v2248 = vld [vmem:[#allocation20 + $0x70] sm:$0xff]
        %v2249 = vld [vmem:[#allocation20 + $0x78] sm:$0xff]
        %v2250 = vld [vmem:[#allocation22] sm:$0x1]
        %v2252 = vlaneseq
        %v2253 = vshrl.u32 %v2252, 7
        %v2254 = vsub.s32 0, %v2253
        %v2255 = vrot.slane %v2250, %v2254
        %2257 = vmatprep.subr.mxu0 0.0
        %2258 = vmatpush1.msra.mxu0 %v2234
        %2259 = vmatprep.subr.mxu0 0.0
        %2260 = vmatpush1.msra.mxu0 %v2235
        %2261 = vmatprep.subr.mxu0 0.0
        %2262 = vmatpush1.msra.mxu0 %v2236
        %2263 = vmatprep.subr.mxu0 0.0
        %2264 = vmatpush1.msra.mxu0 %v2237
        %2265 = vmatprep.subr.mxu0 0.0
        %2266 = vmatpush1.msra.mxu0 %v2238
        %2267 = vmatprep.subr.mxu0 0.0
        %2268 = vmatpush1.msra.mxu0 %v2239
        %2269 = vmatprep.subr.mxu0 0.0
        %2270 = vmatpush1.msra.mxu0 %v2240
        %2271 = vmatprep.subr.mxu0 0.0
        %2272 = vmatpush1.msra.mxu0 %v2241
        %2273 = vmatprep.subr.mxu0 0.0
        %2274 = vmatpush1.msra.mxu0 %v2242
        %2275 = vmatprep.subr.mxu0 0.0
        %2276 = vmatpush1.msra.mxu0 %v2243
        %2277 = vmatprep.subr.mxu0 0.0
        %2278 = vmatpush1.msra.mxu0 %v2244
        %2279 = vmatprep.subr.mxu0 0.0
        %2280 = vmatpush1.msra.mxu0 %v2245
        %2281 = vmatprep.subr.mxu0 0.0
        %2282 = vmatpush1.msra.mxu0 %v2246
        %2283 = vmatprep.subr.mxu0 0.0
        %2284 = vmatpush1.msra.mxu0 %v2247
        %2285 = vmatprep.subr.mxu0 0.0
        %2286 = vmatpush1.msra.mxu0 %v2248
        %2287 = vmatprep.subr.mxu0 0.0
        %2288 = vmatpush1.msra.mxu0 %v2249
        %2289 = vmatprep.subr.mxu0 0.0
        %2290 = vmatpush1.msra.mxu0 0.0
        %2291 = vmatprep.subr.mxu0 0.0
        %2292 = vmatpush1.msra.mxu0 0.0
        %2293 = vmatprep.subr.mxu0 0.0
        %2294 = vmatpush1.msra.mxu0 0.0
        %2295 = vmatprep.subr.mxu0 0.0
        %2296 = vmatpush1.msra.mxu0 0.0
        %2297 = vmatprep.subr.mxu0 0.0
        %2298 = vmatpush1.msra.mxu0 0.0
        %2299 = vmatprep.subr.mxu0 0.0
        %2300 = vmatpush1.msra.mxu0 0.0
        %2301 = vmatprep.subr.mxu0 0.0
        %2302 = vmatpush1.msra.mxu0 0.0
        %2303 = vmatprep.subr.mxu0 0.0
        %2304 = vmatpush1.msra.mxu0 0.0
        %2305 = vmatprep.subr.mxu0 0.0
        %2306 = vmatpush1.msra.mxu0 0.0
        %2307 = vmatprep.subr.mxu0 0.0
        %2308 = vmatpush1.msra.mxu0 0.0
        %2309 = vmatprep.subr.mxu0 0.0
        %2310 = vmatpush1.msra.mxu0 0.0
        %2311 = vmatprep.subr.mxu0 0.0
        %2312 = vmatpush1.msra.mxu0 0.0
        %2313 = vmatprep.subr.mxu0 0.0
        %2314 = vmatpush1.msra.mxu0 0.0
        %2315 = vmatprep.subr.mxu0 0.0
        %2316 = vmatpush1.msra.mxu0 0.0
        %2317 = vmatprep.subr.mxu0 0.0
        %2318 = vmatpush1.msra.mxu0 0.0
        %2319 = vmatprep.subr.mxu0 0.0
        %2320 = vmatpush1.msra.mxu0 0.0
        %2321 = vmatprep.mubr.f32.mxu0 0.0
        %2322 = vmatmul.mubr.f32.gmra.mrb[0].mxu0 %v2232
        %v2323 = vpop.f32.mrb[0].mxu0
        %v2324 = vadd.f32 %v2255, %v2323
        %v2325 = vpop.f32.mrb[0].mxu0
        %2326 = vmatprep.mubr.f32.mxu0 0.0
        %2327 = vmatmul.mubr.f32.gmra.mrb[0].mxu0 %v2233
        %v2328 = vpop.f32.mrb[0].mxu0
        %v2329 = vadd.f32 %v2255, %v2328
        %v2330 = vpop.f32.mrb[0].mxu0
        %2331 = vdwg.mxu0
        %v2332 = vadd.f32 %v2080, %v2324
        %v2333 = vadd.f32 %v2081, %v2329
        %2334 = vst.msk [vmem:[%s616] sm:$0xff] %vm621, %v2332
        %2335 = vst.msk [vmem:[%s616 + $0x8] sm:$0xff] %vm621, %v2333
        %s2336 = sand.u32 %s322, 1
        %s2337 = scalar_lea.sflag [#allocation4], %s2336
        %s2338 = sand.u32 %s322, 1
        %s2339 = smul.addr %s2338, 16
        %s2340 = scalar_lea.vmem [#allocation23], %s2339
        // Predicated region
        $region125: #{tpu_custom_call.1} parent=71 // pred_check
          %p2341 = pneg %p332
        $region126: #{tpu_custom_call.1} parent=71 // pred_check_branch
          %2343 = sbr.rel (%p2341) target = $region128
        $region127: #{tpu_custom_call.1} parent=71 // pred_region
          %s2345 = ssub.s32 256, 256
          %2346 = vsyncadd %s2337, %s2345
          %s2347 = smul.addr %s36, 2
          %s2348 = smul.addr %s2347, 128
          %s2349 = scalar_lea.hbm %s13, %s2348
          %s2350 = sshll.u32 %s2340, 4
          %s2351 = int_to_ptr.vmem [resolvable:$true] %s2350
          %2356 = dma.vmem_to_hbm [thread:$0]  %s2351, 256, %s2349, %s2337, 128, 128, 8
        $region128: #{tpu_custom_call.1} parent=71 // pred_fallthru
          _
      $region72: #{tpu_custom_call.1} parent=5 // pred_fallthru
        _
      %p2357 = scmp.le.s32.totalorder 2, %s31
      // Predicated region
      $region129: #{tpu_custom_call.1} parent=5 // pred_check
        %p2358 = pneg %p2357
      $region130: #{tpu_custom_call.1} parent=5 // pred_check_branch
        %2360 = sbr.rel (%p2358) target = $region132
      $region131: #{tpu_custom_call.1} parent=5 // pred_region
        %s2361 = ssub.s32 %s31, 2
        // Predicated region
        $region133: #{tpu_custom_call.1} parent=131 // pred_check
          %p2362 = pneg %p338
        $region134: #{tpu_custom_call.1} parent=131 // pred_check_branch
          %2364 = sbr.rel (%p2362) target = $region136
        $region135: #{tpu_custom_call.1} parent=131 // pred_region
          %s2365 = sand.u32 %s323, 1
          %s2366 = scalar_lea.sflag [#allocation4], %s2365
          %s2367 = sand.u32 %s323, 1
          %s2368 = smul.addr %s2367, 16
          %s2369 = scalar_lea.vmem [#allocation23], %s2368
          %2370 = dma.done %s2366, 256
        $region136: #{tpu_custom_call.1} parent=131 // pred_fallthru
          _
      $region132: #{tpu_custom_call.1} parent=5 // pred_fallthru
        _
    $region6: #{tpu_custom_call.1} parent=1 // loop_footer
      %s35 = sadd.s32 1, %s31
    $region7: #{tpu_custom_call.1} parent=1 // loop_footer_branch
      %30 = sbr.rel target = $region3
    $region8: #{tpu_custom_call.1} parent=1 // loop_exit
      _
    %2371 = vsyncpa [#allocation3], 1
    %s2372 = scalar_lea.sflag [#allocation3], 1
    %2373 = vsyncpa %s2372, 1
    %2374 = vsyncpa [#allocation6], 1
    %2375 = vsyncpa [#allocation9], 1
    %2376 = vsyncpa [#allocation12], 1
    %2377 = vsyncpa [#allocation15], 1
    %2378 = vsyncpa [#allocation18], 1
    %2379 = vsyncpa [#allocation21], 1
    %2380 = vsyncpa [#allocation4], 1
    %s2381 = scalar_lea.sflag [#allocation4], 1
    %2382 = vsyncpa %s2381, 1

</llo_original>
